<compile_context>
chip_gen: v7x
topology: tpu7x:2x2x1
jax: 0.10.0
libtpu: 0.0.40
codegen_flags: <defaults>
</compile_context>

<pallas_src>
import functools

import jax
import jax.numpy as jnp
from jax.experimental import pallas as pl
from jax.experimental.pallas import tpu as pltpu


def make_rir_kernel(H, W, Cin, Cout, stride):
    """Builds the Pallas kernel body for given static shapes (stride == 1)."""
    assert stride == 1
    Ho = (H + 2 - 3) // stride + 1
    Wo = (W + 2 - 3) // stride + 1
    M = Ho * Wo
    Hp, Wp = H + 2, W + 2

    def kernel(xr_ref, xt_ref, w_ref, s_ref, b_ref, y_ref, pad_r, pad_t, feat):
        cdt = xr_ref.dtype

        # ---- in-kernel zero padding into VMEM scratch (no padded HBM copy) --
        pad_r[...] = jnp.zeros(pad_r.shape, cdt)
        pad_t[...] = jnp.zeros(pad_t.shape, cdt)
        pad_r[1:1 + H, 1:1 + W, :] = xr_ref[0]
        pad_t[1:1 + H, 1:1 + W, :] = xt_ref[0]

        # ---- im2col of BOTH streams into one feature scratch ---------------
        # feat[ho, wo, (s*9 + ky*3 + kx)*Cin + c] = pad_s[ho+ky, wo+kx, c]
        # Only ref-slice loads / stores at static offsets -> robust lowering.
        j = 0
        for src in (pad_r, pad_t):
            for ky in range(3):
                for kx in range(3):
                    feat[:, :, j * Cin:(j + 1) * Cin] = \
                        src[ky:ky + Ho, kx:kx + Wo, :]
                    j += 1

        # Single safe reshape: collapse leading (Ho, Wo) -> M, lane dim kept.
        f = feat[...].reshape(M, 18 * Cin)

        # ---- one fat MXU matmul: all four 3x3 convs + folded identity ------
        acc = jnp.dot(f, w_ref[...],
                      preferred_element_type=jnp.float32)       # (M, 2*Cout) f32

        # ---- folded inference BatchNorm + ReLU epilogue (f32) ---------------
        out = jnp.maximum(acc * s_ref[...] + b_ref[...], 0.0)

        y_ref[0] = out                                          # (M, 2*Cout)

    return kernel, Ho, Wo


@functools.partial(jax.jit, static_argnames=("stride", "compute_dtype"))
def rir_unit_pallas(x_res_nchw, x_trans_nchw, params, stride=1,
                    compute_dtype=jnp.bfloat16):
    if stride != 1:
        # TODO(synk): stride > 1 needs strided im2col windows (pl.ds stride);
        # only stride == 1 is implemented / exercised here.
        raise NotImplementedError("Pallas RiRUnit path supports stride == 1 only")

    N, Cin, H, W = x_res_nchw.shape
    Cout = params["w_res_pass"].shape[0]

    kernel, Ho, Wo = make_rir_kernel(H, W, Cin, Cout, stride)
    M = Ho * Wo
    Hp, Wp = H + 2, W + 2

    # NCHW -> NHWC, cast MXU operands to the compute dtype.
    def to_nhwc(x):
        return jnp.transpose(x, (0, 2, 3, 1)).astype(compute_dtype)

    xr = to_nhwc(x_res_nchw)
    xt = to_nhwc(x_trans_nchw)

    # Fold the 1x1 identity conv into the 3x3 res_pass centre tap (exact: the
    # centre tap of the pad=1 3x3 reads the same sample the 1x1 conv reads).
    w_rp = params["w_res_pass"]
    if params.get("w_identity") is not None:           # resize_identity == True
        w_id = params["w_identity"][:, :, 0, 0]        # (O, I)
    else:                                              # pass-through identity
        assert Cin == Cout, "pass-through identity requires Cin == Cout"
        w_id = jnp.eye(Cout, dtype=w_rp.dtype)
    w_rp = w_rp.at[:, :, 1, 1].add(w_id)

    def w3_flat(w):  # (O, I, 3, 3) -> (9*Cin, Cout), rows ordered (ky, kx, cin)
        return jnp.transpose(w, (2, 3, 1, 0)).reshape(9 * Cin, Cout)

    # Combined weight: rows = [x_res feats ; x_trans feats],
    # cols = [x_res output | x_trans output].
    w_top = jnp.concatenate([w3_flat(w_rp),
                             w3_flat(params["w_res_cross"])], axis=1)
    w_bot = jnp.concatenate([w3_flat(params["w_trans_cross"]),
                             w3_flat(params["w_trans_pass"])], axis=1)
    w_all = jnp.concatenate([w_top, w_bot], axis=0).astype(compute_dtype)

    eps = 1e-5

    def fold_bn(gamma, beta, mean, var):
        s = gamma / jnp.sqrt(var + eps)
        return s, beta - mean * s

    sr, br = fold_bn(*params["bn_res"])
    st, bt = fold_bn(*params["bn_trans"])
    bn_s = jnp.concatenate([sr, st]).reshape(1, 2 * Cout).astype(jnp.float32)
    bn_b = jnp.concatenate([br, bt]).reshape(1, 2 * Cout).astype(jnp.float32)

    y = pl.pallas_call(
        kernel,
        out_shape=jax.ShapeDtypeStruct((N, M, 2 * Cout), jnp.float32),
        grid=(N,),
        in_specs=[
            pl.BlockSpec((1, H, W, Cin), lambda n: (n, 0, 0, 0)),
            pl.BlockSpec((1, H, W, Cin), lambda n: (n, 0, 0, 0)),
            # weights / folded-BN vectors: constant index_map -> resident in VMEM
            pl.BlockSpec((18 * Cin, 2 * Cout), lambda n: (0, 0)),
            pl.BlockSpec((1, 2 * Cout), lambda n: (0, 0)),
            pl.BlockSpec((1, 2 * Cout), lambda n: (0, 0)),
        ],
        out_specs=pl.BlockSpec((1, M, 2 * Cout), lambda n: (n, 0, 0)),
        scratch_shapes=[
            pltpu.VMEM((Hp, Wp, Cin), compute_dtype),       # padded x_res
            pltpu.VMEM((Hp, Wp, Cin), compute_dtype),       # padded x_trans
            pltpu.VMEM((Ho, Wo, 18 * Cin), compute_dtype),  # im2col features
        ],
        compiler_params=pltpu.CompilerParams(
            dimension_semantics=("parallel",),
            vmem_limit_bytes=32 * 1024 * 1024),
    )(xr, xt, w_all, bn_s, bn_b)

    # (N, M, 2*Cout) -> two NCHW outputs (PyTorch convention).
    y = y.reshape(N, Ho, Wo, 2 * Cout)
    y_res = jnp.transpose(y[..., :Cout], (0, 3, 1, 2))
    y_trans = jnp.transpose(y[..., Cout:], (0, 3, 1, 2))
    return y_res, y_trans


def rir_unit_reference(x_res, x_trans, params, stride=1):
    """Pure-JAX (lax.conv) reference of the PyTorch forward, inference-mode BN."""
    def conv(x, w, k):
        pad = (k // 2, k // 2)
        return jax.lax.conv_general_dilated(
            x, w, window_strides=(stride, stride), padding=[pad, pad],
            dimension_numbers=("NCHW", "OIHW", "NCHW"),
            precision=jax.lax.Precision.HIGHEST)

    if params.get("w_identity") is not None:
        x_res_identity = conv(x_res, params["w_identity"], 1)
    else:
        x_res_identity = x_res
    y_res = conv(x_res, params["w_res_cross"], 3)
    y_trans = conv(x_trans, params["w_trans_cross"], 3)
    xr = conv(x_res, params["w_res_pass"], 3)
    xt = conv(x_trans, params["w_trans_pass"], 3)
    xr = xr + x_res_identity + y_trans
    xt = xt + y_res

    eps = 1e-5

    def bn_relu(x, bn):
        gamma, beta, mean, var = bn
        s = (gamma / jnp.sqrt(var + eps)).reshape(1, -1, 1, 1)
        b = (beta - mean * gamma / jnp.sqrt(var + eps)).reshape(1, -1, 1, 1)
        return jnp.maximum(x * s + b, 0.0)

    return bn_relu(xr, params["bn_res"]), bn_relu(xt, params["bn_trans"])


if __name__ == "__main__":
    N, Cin, Cout, H, W, stride = 2, 8, 16, 16, 16, 1

    key = jax.random.PRNGKey(0)
    ks = jax.random.split(key, 9)

    def conv_w(k, o, i, kh, kw):
        return jax.random.normal(k, (o, i, kh, kw), jnp.float32) * 0.1

    def bn_params(k, c):
        k1, k2, k3, k4 = jax.random.split(k, 4)
        gamma = 1.0 + 0.1 * jax.random.normal(k1, (c,), jnp.float32)
        beta = 0.1 * jax.random.normal(k2, (c,), jnp.float32)
        mean = 0.1 * jax.random.normal(k3, (c,), jnp.float32)
        var = 0.5 + jax.random.uniform(k4, (c,), jnp.float32)
        return (gamma, beta, mean, var)

    params = {
        "w_res_pass": conv_w(ks[0], Cout, Cin, 3, 3),
        "w_trans_pass": conv_w(ks[1], Cout, Cin, 3, 3),
        "w_res_cross": conv_w(ks[2], Cout, Cin, 3, 3),
        "w_trans_cross": conv_w(ks[3], Cout, Cin, 3, 3),
        # resize_identity == True here since Cin != Cout
        "w_identity": conv_w(ks[4], Cout, Cin, 1, 1),
        "bn_res": bn_params(ks[5], Cout),
        "bn_trans": bn_params(ks[6], Cout),
    }

    x_res = jax.random.normal(ks[7], (N, Cin, H, W), jnp.float32)
    x_trans = jax.random.normal(ks[8], (N, Cin, H, W), jnp.float32)

    yr_ref, yt_ref = rir_unit_reference(x_res, x_trans, params, stride=stride)

    # default path: bf16 MXU operands, f32 accumulation / epilogue
    yr, yt = rir_unit_pallas(x_res, x_trans, params, stride=stride)
    jax.block_until_ready((yr, yt))
    assert yr.shape == (N, Cout, H, W) and yt.shape == (N, Cout, H, W)
    assert jnp.allclose(yr, yr_ref, rtol=5e-2, atol=5e-2)
    assert jnp.allclose(yt, yt_ref, rtol=5e-2, atol=5e-2)

    # full-f32 operand path (tighter tolerance)
    yr32, yt32 = rir_unit_pallas(x_res, x_trans, params, stride=stride,
                                 compute_dtype=jnp.float32)
    jax.block_until_ready((yr32, yt32))
    assert jnp.allclose(yr32, yr_ref, rtol=2e-2, atol=2e-2)
    assert jnp.allclose(yt32, yt_ref, rtol=2e-2, atol=2e-2)

    print("KERNEL_OK")
</pallas_src>

<mosaic_0001>
module attributes {stable_mosaic.version = 11 : i64} {
  func.func @kernel(%arg0: i32, %arg1: memref<1x16x16x8xbf16, #tpu.memory_space<vmem>>, %arg2: memref<1x16x16x8xbf16, #tpu.memory_space<vmem>>, %arg3: memref<144x32xbf16, #tpu.memory_space<vmem>>, %arg4: memref<1x32xf32, #tpu.memory_space<vmem>>, %arg5: memref<1x32xf32, #tpu.memory_space<vmem>>, %arg6: memref<1x256x32xf32, #tpu.memory_space<vmem>>, %arg7: memref<18x18x8xbf16, #tpu.memory_space<vmem>>, %arg8: memref<18x18x8xbf16, #tpu.memory_space<vmem>>, %arg9: memref<16x16x144xbf16, #tpu.memory_space<vmem>>) attributes {dimension_semantics = [#tpu.dimension_semantics<parallel>], iteration_bounds = array<i64: 2>, scalar_prefetch = 0 : i64, scratch_operands = 3 : i64, tpu.core_type = #tpu.core_type<tc>, window_params = [{transform_indices = @transform_0, window_bounds = array<i64: 1, 16, 16, 8>}, {transform_indices = @transform_1, window_bounds = array<i64: 1, 16, 16, 8>}, {pipeline_mode = #tpu.pipeline_mode<synchronous>, transform_indices = @transform_2, window_bounds = array<i64: 144, 32>}, {pipeline_mode = #tpu.pipeline_mode<synchronous>, transform_indices = @transform_3, window_bounds = array<i64: 1, 32>}, {pipeline_mode = #tpu.pipeline_mode<synchronous>, transform_indices = @transform_4, window_bounds = array<i64: 1, 32>}, {transform_indices = @transform_5, window_bounds = array<i64: 1, 256, 32>}]} {
    %cst = arith.constant 0.000000e+00 : bf16
    %0 = vector.broadcast %cst : bf16 to vector<18x18x8xbf16>
    %c0 = arith.constant 0 : index
    %c0_0 = arith.constant 0 : index
    %c0_1 = arith.constant 0 : index
    %1 = vector.load %arg7[%c0, %c0_0, %c0_1] : memref<18x18x8xbf16, #tpu.memory_space<vmem>>, vector<18x18x8xbf16>
    tpu.vector_store %arg7[%c0, %c0_0, %c0_1], %0 {strides = array<i32>} : memref<18x18x8xbf16, #tpu.memory_space<vmem>>, vector<18x18x8xbf16>,
    %cst_2 = arith.constant 0.000000e+00 : bf16
    %2 = vector.broadcast %cst_2 : bf16 to vector<18x18x8xbf16>
    %c0_3 = arith.constant 0 : index
    %c0_4 = arith.constant 0 : index
    %c0_5 = arith.constant 0 : index
    %3 = vector.load %arg8[%c0_3, %c0_4, %c0_5] : memref<18x18x8xbf16, #tpu.memory_space<vmem>>, vector<18x18x8xbf16>
    tpu.vector_store %arg8[%c0_3, %c0_4, %c0_5], %2 {strides = array<i32>} : memref<18x18x8xbf16, #tpu.memory_space<vmem>>, vector<18x18x8xbf16>,
    %c0_6 = arith.constant 0 : index
    %c0_7 = arith.constant 0 : index
    %c0_8 = arith.constant 0 : index
    %c0_9 = arith.constant 0 : index
    %4 = vector.load %arg1[%c0_6, %c0_7, %c0_8, %c0_9] : memref<1x16x16x8xbf16, #tpu.memory_space<vmem>>, vector<1x16x16x8xbf16>
    %5 = vector.shape_cast %4 : vector<1x16x16x8xbf16> to vector<16x16x8xbf16>
    %c1 = arith.constant 1 : index
    %c1_10 = arith.constant 1 : index
    %c0_11 = arith.constant 0 : index
    %6 = vector.load %arg7[%c1, %c1_10, %c0_11] : memref<18x18x8xbf16, #tpu.memory_space<vmem>>, vector<16x16x8xbf16>
    tpu.vector_store %arg7[%c1, %c1_10, %c0_11], %5 {strides = array<i32>} : memref<18x18x8xbf16, #tpu.memory_space<vmem>>, vector<16x16x8xbf16>,
    %c0_12 = arith.constant 0 : index
    %c0_13 = arith.constant 0 : index
    %c0_14 = arith.constant 0 : index
    %c0_15 = arith.constant 0 : index
    %7 = vector.load %arg2[%c0_12, %c0_13, %c0_14, %c0_15] : memref<1x16x16x8xbf16, #tpu.memory_space<vmem>>, vector<1x16x16x8xbf16>
    %8 = vector.shape_cast %7 : vector<1x16x16x8xbf16> to vector<16x16x8xbf16>
    %c1_16 = arith.constant 1 : index
    %c1_17 = arith.constant 1 : index
    %c0_18 = arith.constant 0 : index
    %9 = vector.load %arg8[%c1_16, %c1_17, %c0_18] : memref<18x18x8xbf16, #tpu.memory_space<vmem>>, vector<16x16x8xbf16>
    tpu.vector_store %arg8[%c1_16, %c1_17, %c0_18], %8 {strides = array<i32>} : memref<18x18x8xbf16, #tpu.memory_space<vmem>>, vector<16x16x8xbf16>,
    %c0_19 = arith.constant 0 : index
    %c0_20 = arith.constant 0 : index
    %c0_21 = arith.constant 0 : index
    %10 = vector.load %arg7[%c0_19, %c0_20, %c0_21] : memref<18x18x8xbf16, #tpu.memory_space<vmem>>, vector<16x16x8xbf16>
    %c0_22 = arith.constant 0 : index
    %c0_23 = arith.constant 0 : index
    %c0_24 = arith.constant 0 : index
    %11 = vector.load %arg9[%c0_22, %c0_23, %c0_24] : memref<16x16x144xbf16, #tpu.memory_space<vmem>>, vector<16x16x8xbf16>
    tpu.vector_store %arg9[%c0_22, %c0_23, %c0_24], %10 {strides = array<i32>} : memref<16x16x144xbf16, #tpu.memory_space<vmem>>, vector<16x16x8xbf16>,
    %c0_25 = arith.constant 0 : index
    %c1_26 = arith.constant 1 : index
    %c0_27 = arith.constant 0 : index
    %12 = vector.load %arg7[%c0_25, %c1_26, %c0_27] : memref<18x18x8xbf16, #tpu.memory_space<vmem>>, vector<16x16x8xbf16>
    %c0_28 = arith.constant 0 : index
    %c0_29 = arith.constant 0 : index
    %c8 = arith.constant 8 : index
    %13 = vector.load %arg9[%c0_28, %c0_29, %c8] : memref<16x16x144xbf16, #tpu.memory_space<vmem>>, vector<16x16x8xbf16>
    tpu.vector_store %arg9[%c0_28, %c0_29, %c8], %12 {strides = array<i32>} : memref<16x16x144xbf16, #tpu.memory_space<vmem>>, vector<16x16x8xbf16>,
    %c0_30 = arith.constant 0 : index
    %c2 = arith.constant 2 : index
    %c0_31 = arith.constant 0 : index
    %14 = vector.load %arg7[%c0_30, %c2, %c0_31] : memref<18x18x8xbf16, #tpu.memory_space<vmem>>, vector<16x16x8xbf16>
    %c0_32 = arith.constant 0 : index
    %c0_33 = arith.constant 0 : index
    %c16 = arith.constant 16 : index
    %15 = vector.load %arg9[%c0_32, %c0_33, %c16] : memref<16x16x144xbf16, #tpu.memory_space<vmem>>, vector<16x16x8xbf16>
    tpu.vector_store %arg9[%c0_32, %c0_33, %c16], %14 {strides = array<i32>} : memref<16x16x144xbf16, #tpu.memory_space<vmem>>, vector<16x16x8xbf16>,
    %c1_34 = arith.constant 1 : index
    %c0_35 = arith.constant 0 : index
    %c0_36 = arith.constant 0 : index
    %16 = vector.load %arg7[%c1_34, %c0_35, %c0_36] : memref<18x18x8xbf16, #tpu.memory_space<vmem>>, vector<16x16x8xbf16>
    %c0_37 = arith.constant 0 : index
    %c0_38 = arith.constant 0 : index
    %c24 = arith.constant 24 : index
    %17 = vector.load %arg9[%c0_37, %c0_38, %c24] : memref<16x16x144xbf16, #tpu.memory_space<vmem>>, vector<16x16x8xbf16>
    tpu.vector_store %arg9[%c0_37, %c0_38, %c24], %16 {strides = array<i32>} : memref<16x16x144xbf16, #tpu.memory_space<vmem>>, vector<16x16x8xbf16>,
    %c1_39 = arith.constant 1 : index
    %c1_40 = arith.constant 1 : index
    %c0_41 = arith.constant 0 : index
    %18 = vector.load %arg7[%c1_39, %c1_40, %c0_41] : memref<18x18x8xbf16, #tpu.memory_space<vmem>>, vector<16x16x8xbf16>
    %c0_42 = arith.constant 0 : index
    %c0_43 = arith.constant 0 : index
    %c32 = arith.constant 32 : index
    %19 = vector.load %arg9[%c0_42, %c0_43, %c32] : memref<16x16x144xbf16, #tpu.memory_space<vmem>>, vector<16x16x8xbf16>
    tpu.vector_store %arg9[%c0_42, %c0_43, %c32], %18 {strides = array<i32>} : memref<16x16x144xbf16, #tpu.memory_space<vmem>>, vector<16x16x8xbf16>,
    %c1_44 = arith.constant 1 : index
    %c2_45 = arith.constant 2 : index
    %c0_46 = arith.constant 0 : index
    %20 = vector.load %arg7[%c1_44, %c2_45, %c0_46] : memref<18x18x8xbf16, #tpu.memory_space<vmem>>, vector<16x16x8xbf16>
    %c0_47 = arith.constant 0 : index
    %c0_48 = arith.constant 0 : index
    %c40 = arith.constant 40 : index
    %21 = vector.load %arg9[%c0_47, %c0_48, %c40] : memref<16x16x144xbf16, #tpu.memory_space<vmem>>, vector<16x16x8xbf16>
    tpu.vector_store %arg9[%c0_47, %c0_48, %c40], %20 {strides = array<i32>} : memref<16x16x144xbf16, #tpu.memory_space<vmem>>, vector<16x16x8xbf16>,
    %c2_49 = arith.constant 2 : index
    %c0_50 = arith.constant 0 : index
    %c0_51 = arith.constant 0 : index
    %22 = vector.load %arg7[%c2_49, %c0_50, %c0_51] : memref<18x18x8xbf16, #tpu.memory_space<vmem>>, vector<16x16x8xbf16>
    %c0_52 = arith.constant 0 : index
    %c0_53 = arith.constant 0 : index
    %c48 = arith.constant 48 : index
    %23 = vector.load %arg9[%c0_52, %c0_53, %c48] : memref<16x16x144xbf16, #tpu.memory_space<vmem>>, vector<16x16x8xbf16>
    tpu.vector_store %arg9[%c0_52, %c0_53, %c48], %22 {strides = array<i32>} : memref<16x16x144xbf16, #tpu.memory_space<vmem>>, vector<16x16x8xbf16>,
    %c2_54 = arith.constant 2 : index
    %c1_55 = arith.constant 1 : index
    %c0_56 = arith.constant 0 : index
    %24 = vector.load %arg7[%c2_54, %c1_55, %c0_56] : memref<18x18x8xbf16, #tpu.memory_space<vmem>>, vector<16x16x8xbf16>
    %c0_57 = arith.constant 0 : index
    %c0_58 = arith.constant 0 : index
    %c56 = arith.constant 56 : index
    %25 = vector.load %arg9[%c0_57, %c0_58, %c56] : memref<16x16x144xbf16, #tpu.memory_space<vmem>>, vector<16x16x8xbf16>
    tpu.vector_store %arg9[%c0_57, %c0_58, %c56], %24 {strides = array<i32>} : memref<16x16x144xbf16, #tpu.memory_space<vmem>>, vector<16x16x8xbf16>,
    %c2_59 = arith.constant 2 : index
    %c2_60 = arith.constant 2 : index
    %c0_61 = arith.constant 0 : index
    %26 = vector.load %arg7[%c2_59, %c2_60, %c0_61] : memref<18x18x8xbf16, #tpu.memory_space<vmem>>, vector<16x16x8xbf16>
    %c0_62 = arith.constant 0 : index
    %c0_63 = arith.constant 0 : index
    %c64 = arith.constant 64 : index
    %27 = vector.load %arg9[%c0_62, %c0_63, %c64] : memref<16x16x144xbf16, #tpu.memory_space<vmem>>, vector<16x16x8xbf16>
    tpu.vector_store %arg9[%c0_62, %c0_63, %c64], %26 {strides = array<i32>} : memref<16x16x144xbf16, #tpu.memory_space<vmem>>, vector<16x16x8xbf16>,
    %c0_64 = arith.constant 0 : index
    %c0_65 = arith.constant 0 : index
    %c0_66 = arith.constant 0 : index
    %28 = vector.load %arg8[%c0_64, %c0_65, %c0_66] : memref<18x18x8xbf16, #tpu.memory_space<vmem>>, vector<16x16x8xbf16>
    %c0_67 = arith.constant 0 : index
    %c0_68 = arith.constant 0 : index
    %c72 = arith.constant 72 : index
    %29 = vector.load %arg9[%c0_67, %c0_68, %c72] : memref<16x16x144xbf16, #tpu.memory_space<vmem>>, vector<16x16x8xbf16>
    tpu.vector_store %arg9[%c0_67, %c0_68, %c72], %28 {strides = array<i32>} : memref<16x16x144xbf16, #tpu.memory_space<vmem>>, vector<16x16x8xbf16>,
    %c0_69 = arith.constant 0 : index
    %c1_70 = arith.constant 1 : index
    %c0_71 = arith.constant 0 : index
    %30 = vector.load %arg8[%c0_69, %c1_70, %c0_71] : memref<18x18x8xbf16, #tpu.memory_space<vmem>>, vector<16x16x8xbf16>
    %c0_72 = arith.constant 0 : index
    %c0_73 = arith.constant 0 : index
    %c80 = arith.constant 80 : index
    %31 = vector.load %arg9[%c0_72, %c0_73, %c80] : memref<16x16x144xbf16, #tpu.memory_space<vmem>>, vector<16x16x8xbf16>
    tpu.vector_store %arg9[%c0_72, %c0_73, %c80], %30 {strides = array<i32>} : memref<16x16x144xbf16, #tpu.memory_space<vmem>>, vector<16x16x8xbf16>,
    %c0_74 = arith.constant 0 : index
    %c2_75 = arith.constant 2 : index
    %c0_76 = arith.constant 0 : index
    %32 = vector.load %arg8[%c0_74, %c2_75, %c0_76] : memref<18x18x8xbf16, #tpu.memory_space<vmem>>, vector<16x16x8xbf16>
    %c0_77 = arith.constant 0 : index
    %c0_78 = arith.constant 0 : index
    %c88 = arith.constant 88 : index
    %33 = vector.load %arg9[%c0_77, %c0_78, %c88] : memref<16x16x144xbf16, #tpu.memory_space<vmem>>, vector<16x16x8xbf16>
    tpu.vector_store %arg9[%c0_77, %c0_78, %c88], %32 {strides = array<i32>} : memref<16x16x144xbf16, #tpu.memory_space<vmem>>, vector<16x16x8xbf16>,
    %c1_79 = arith.constant 1 : index
    %c0_80 = arith.constant 0 : index
    %c0_81 = arith.constant 0 : index
    %34 = vector.load %arg8[%c1_79, %c0_80, %c0_81] : memref<18x18x8xbf16, #tpu.memory_space<vmem>>, vector<16x16x8xbf16>
    %c0_82 = arith.constant 0 : index
    %c0_83 = arith.constant 0 : index
    %c96 = arith.constant 96 : index
    %35 = vector.load %arg9[%c0_82, %c0_83, %c96] : memref<16x16x144xbf16, #tpu.memory_space<vmem>>, vector<16x16x8xbf16>
    tpu.vector_store %arg9[%c0_82, %c0_83, %c96], %34 {strides = array<i32>} : memref<16x16x144xbf16, #tpu.memory_space<vmem>>, vector<16x16x8xbf16>,
    %c1_84 = arith.constant 1 : index
    %c1_85 = arith.constant 1 : index
    %c0_86 = arith.constant 0 : index
    %36 = vector.load %arg8[%c1_84, %c1_85, %c0_86] : memref<18x18x8xbf16, #tpu.memory_space<vmem>>, vector<16x16x8xbf16>
    %c0_87 = arith.constant 0 : index
    %c0_88 = arith.constant 0 : index
    %c104 = arith.constant 104 : index
    %37 = vector.load %arg9[%c0_87, %c0_88, %c104] : memref<16x16x144xbf16, #tpu.memory_space<vmem>>, vector<16x16x8xbf16>
    tpu.vector_store %arg9[%c0_87, %c0_88, %c104], %36 {strides = array<i32>} : memref<16x16x144xbf16, #tpu.memory_space<vmem>>, vector<16x16x8xbf16>,
    %c1_89 = arith.constant 1 : index
    %c2_90 = arith.constant 2 : index
    %c0_91 = arith.constant 0 : index
    %38 = vector.load %arg8[%c1_89, %c2_90, %c0_91] : memref<18x18x8xbf16, #tpu.memory_space<vmem>>, vector<16x16x8xbf16>
    %c0_92 = arith.constant 0 : index
    %c0_93 = arith.constant 0 : index
    %c112 = arith.constant 112 : index
    %39 = vector.load %arg9[%c0_92, %c0_93, %c112] : memref<16x16x144xbf16, #tpu.memory_space<vmem>>, vector<16x16x8xbf16>
    tpu.vector_store %arg9[%c0_92, %c0_93, %c112], %38 {strides = array<i32>} : memref<16x16x144xbf16, #tpu.memory_space<vmem>>, vector<16x16x8xbf16>,
    %c2_94 = arith.constant 2 : index
    %c0_95 = arith.constant 0 : index
    %c0_96 = arith.constant 0 : index
    %40 = vector.load %arg8[%c2_94, %c0_95, %c0_96] : memref<18x18x8xbf16, #tpu.memory_space<vmem>>, vector<16x16x8xbf16>
    %c0_97 = arith.constant 0 : index
    %c0_98 = arith.constant 0 : index
    %c120 = arith.constant 120 : index
    %41 = vector.load %arg9[%c0_97, %c0_98, %c120] : memref<16x16x144xbf16, #tpu.memory_space<vmem>>, vector<16x16x8xbf16>
    tpu.vector_store %arg9[%c0_97, %c0_98, %c120], %40 {strides = array<i32>} : memref<16x16x144xbf16, #tpu.memory_space<vmem>>, vector<16x16x8xbf16>,
    %c2_99 = arith.constant 2 : index
    %c1_100 = arith.constant 1 : index
    %c0_101 = arith.constant 0 : index
    %42 = vector.load %arg8[%c2_99, %c1_100, %c0_101] : memref<18x18x8xbf16, #tpu.memory_space<vmem>>, vector<16x16x8xbf16>
    %c0_102 = arith.constant 0 : index
    %c0_103 = arith.constant 0 : index
    %c128 = arith.constant 128 : index
    %43 = vector.load %arg9[%c0_102, %c0_103, %c128] : memref<16x16x144xbf16, #tpu.memory_space<vmem>>, vector<16x16x8xbf16>
    tpu.vector_store %arg9[%c0_102, %c0_103, %c128], %42 {strides = array<i32>} : memref<16x16x144xbf16, #tpu.memory_space<vmem>>, vector<16x16x8xbf16>,
    %c2_104 = arith.constant 2 : index
    %c2_105 = arith.constant 2 : index
    %c0_106 = arith.constant 0 : index
    %44 = vector.load %arg8[%c2_104, %c2_105, %c0_106] : memref<18x18x8xbf16, #tpu.memory_space<vmem>>, vector<16x16x8xbf16>
    %c0_107 = arith.constant 0 : index
    %c0_108 = arith.constant 0 : index
    %c136 = arith.constant 136 : index
    %45 = vector.load %arg9[%c0_107, %c0_108, %c136] : memref<16x16x144xbf16, #tpu.memory_space<vmem>>, vector<16x16x8xbf16>
    tpu.vector_store %arg9[%c0_107, %c0_108, %c136], %44 {strides = array<i32>} : memref<16x16x144xbf16, #tpu.memory_space<vmem>>, vector<16x16x8xbf16>,
    %c0_109 = arith.constant 0 : index
    %c0_110 = arith.constant 0 : index
    %c0_111 = arith.constant 0 : index
    %46 = vector.load %arg9[%c0_109, %c0_110, %c0_111] : memref<16x16x144xbf16, #tpu.memory_space<vmem>>, vector<16x16x144xbf16>
    %47 = vector.shape_cast %46 : vector<16x16x144xbf16> to vector<256x144xbf16>
    %c0_112 = arith.constant 0 : index
    %c0_113 = arith.constant 0 : index
    %48 = vector.load %arg3[%c0_112, %c0_113] : memref<144x32xbf16, #tpu.memory_space<vmem>>, vector<144x32xbf16>
    %cst_114 = arith.constant dense<0.000000e+00> : vector<256x32xf32>
    %49 = tpu.matmul %47, %48, %cst_114 {dimension_numbers = #tpu.dot_dimension_numbers<[1], [0], [0], [1], [0, 0, 1, 1], [], []>} : vector<256x144xbf16>, vector<144x32xbf16>, vector<256x32xf32> -> vector<256x32xf32>
    %c0_115 = arith.constant 0 : index
    %c0_116 = arith.constant 0 : index
    %50 = vector.load %arg4[%c0_115, %c0_116] : memref<1x32xf32, #tpu.memory_space<vmem>>, vector<1x32xf32>
    %51 = vector.broadcast %50 : vector<1x32xf32> to vector<256x32xf32>
    %52 = arith.mulf %49, %51 : vector<256x32xf32>
    %c0_117 = arith.constant 0 : index
    %c0_118 = arith.constant 0 : index
    %53 = vector.load %arg5[%c0_117, %c0_118] : memref<1x32xf32, #tpu.memory_space<vmem>>, vector<1x32xf32>
    %54 = vector.broadcast %53 : vector<1x32xf32> to vector<256x32xf32>
    %55 = arith.addf %52, %54 : vector<256x32xf32>
    %cst_119 = arith.constant 0.000000e+00 : f32
    %56 = vector.broadcast %cst_119 : f32 to vector<256x32xf32>
    %57 = arith.maximumf %55, %56 : vector<256x32xf32>
    %c0_120 = arith.constant 0 : index
    %c0_121 = arith.constant 0 : index
    %c0_122 = arith.constant 0 : index
    %58 = vector.load %arg6[%c0_120, %c0_121, %c0_122] : memref<1x256x32xf32, #tpu.memory_space<vmem>>, vector<1x256x32xf32>
    %59 = vector.shape_cast %58 : vector<1x256x32xf32> to vector<256x32xf32>
    %60 = vector.shape_cast %57 : vector<256x32xf32> to vector<1x256x32xf32>
    tpu.vector_store %arg6[%c0_120, %c0_121, %c0_122], %60 {strides = array<i32>} : memref<1x256x32xf32, #tpu.memory_space<vmem>>, vector<1x256x32xf32>,
    return
  }
  func.func @transform_0(%arg0: i32) -> (i32, i32, i32, i32) {
    %c0_i32 = arith.constant 0 : i32
    %c0_i32_0 = arith.constant 0 : i32
    %c0_i32_1 = arith.constant 0 : i32
    %c0_i32_2 = arith.constant 0 : i32
    return %arg0, %c0_i32, %c0_i32_0, %c0_i32_1 : i32, i32, i32, i32
  }
  func.func @transform_1(%arg0: i32) -> (i32, i32, i32, i32) {
    %c0_i32 = arith.constant 0 : i32
    %c0_i32_0 = arith.constant 0 : i32
    %c0_i32_1 = arith.constant 0 : i32
    %c0_i32_2 = arith.constant 0 : i32
    return %arg0, %c0_i32, %c0_i32_0, %c0_i32_1 : i32, i32, i32, i32
  }
  func.func @transform_2(%arg0: i32) -> (i32, i32) {
    %c0_i32 = arith.constant 0 : i32
    %c0_i32_0 = arith.constant 0 : i32
    %c0_i32_1 = arith.constant 0 : i32
    return %c0_i32, %c0_i32_0 : i32, i32
  }
  func.func @transform_3(%arg0: i32) -> (i32, i32) {
    %c0_i32 = arith.constant 0 : i32
    %c0_i32_0 = arith.constant 0 : i32
    %c0_i32_1 = arith.constant 0 : i32
    return %c0_i32, %c0_i32_0 : i32, i32
  }
  func.func @transform_4(%arg0: i32) -> (i32, i32) {
    %c0_i32 = arith.constant 0 : i32
    %c0_i32_0 = arith.constant 0 : i32
    %c0_i32_1 = arith.constant 0 : i32
    return %c0_i32, %c0_i32_0 : i32, i32
  }
  func.func @transform_5(%arg0: i32) -> (i32, i32, i32) {
    %c0_i32 = arith.constant 0 : i32
    %c0_i32_0 = arith.constant 0 : i32
    %c0_i32_1 = arith.constant 0 : i32
    return %arg0, %c0_i32, %c0_i32_0 : i32, i32, i32
  }
}

</mosaic_0001>

<llo_original>
// kernel: rir_unit_pallas.1
$region0: #{rir_unit_pallas.1}
  #allocation0 [shape = 'u32[]', space=smem, size = 0x4, offset = 0x4, fixed_abs, tag = 'smem constant byte address 0x4 - core index']
  #allocation1 [shape = 'u32[144,128]{1,0:T(1,128)}', space=vmem, size = 0x12000, scoped, tag = 'internal scratch']
  #allocation2 [shape = 'bf16[18,18,8]{2,1,0:T(8,128)(2,1)}', space=vmem, size = 0x1b000, scoped, tag = 'scratch operand']
  #allocation3 [shape = 'bf16[18,18,8]{2,1,0:T(8,128)(2,1)}', space=vmem, size = 0x1b000, scoped, tag = 'scratch operand']
  #allocation4 [shape = 'bf16[16,16,144]{2,1,0:T(16,128)(2,1)}', space=vmem, size = 0x20000, scoped, tag = 'scratch operand']
  %s0 = inlined_call_operand.vmem [shape: bf16[2,16,16,8], index: 0, kind: input, shape index: {}]
  %s1 = inlined_call_operand.vmem [shape: bf16[2,16,16,8], index: 1, kind: input, shape index: {}]
  %s2 = inlined_call_operand.vmem [shape: bf16[144,32], index: 2, kind: input, shape index: {}]
  %s3 = inlined_call_operand.vmem [shape: f32[1,32], index: 3, kind: input, shape index: {}]
  %s4 = inlined_call_operand.vmem [shape: f32[1,32], index: 4, kind: input, shape index: {}]
  %s5 = inlined_call_operand.vmem [shape: f32[2,256,32], index: 5, kind: output, shape index: {}]
  %s6 = sld [smem:[#allocation0]]
  $region53: #{rir_unit_pallas.1} parent=0
    _
  %s8 = ssub.s32 1, %s6
  %s9 = scalar_select 0, %s8, %s6
  loop: start=0, step=1, limit=4
  $region2: #{rir_unit_pallas.1} parent=0 // loop_pre_header
    _
  $region3: #{rir_unit_pallas.1} parent=0 // loop_header
    %s11 = sphi 0, %s15
    %p12 = scmp.ge.s32.totalorder %s11, 4
    %s21 = sphi 0, %s23
    %s24 = sphi 0, %s21
    %s25 = sphi 0, %s24
    %s41 = sphi 0, %s25
    %s47 = sphi 0, %s49
    %s50 = sphi 0, %s47
    %s51 = sphi 0, %s50
    %s67 = sphi 0, %s51
    %s71 = sphi 0, %s71
    %s73 = sphi 0, %s71
    %s74 = sphi 0, %s73
    %s88 = sphi 0, %s74
    %s92 = sphi 0, %s92
    %s94 = sphi 0, %s92
    %s95 = sphi 0, %s94
    %s109 = sphi 0, %s95
    %s113 = sphi 0, %s113
    %s115 = sphi 0, %s113
    %s116 = sphi 0, %s115
    %s130 = sphi 0, %s116
    %s136 = sphi 0, %s138
    %s139 = sphi 0, %s136
    %s140 = sphi 0, %s139
    %s156 = sphi 0, %s140
  $region4: #{rir_unit_pallas.1} parent=0 // loop_header_branch
    %14 = sbr.rel (%p12) target = $region8
  $region5: #{rir_unit_pallas.1} parent=0 // loop_body
    %s16 = ssub.s32 %s11, 1
    %s17 = ssub.s32 %s11, 2
    %s18 = sadd.s32 %s11, 1
    %s19 = ssub.s32 %s11, %s18
    %p20 = scmp.eq.s32.totalorder %s19, 0
    %s22 = sadd.s32 %s21, 1
    %s23 = scalar_select %p20, %s21, %s22
    %p26 = pneg %p20
    %p27 = scmp.eq.s32.totalorder %s11, 1
    %p28 = por %p26, %p27
    %p29 = scmp.ne.s32.totalorder %s21, %s24
    %p30 = scmp.eq.s32.totalorder %s11, 0
    %p31 = por %p29, %p30
    %p32 = scmp.ne.s32.totalorder %s21, %s24
    %p33 = scmp.eq.s32.totalorder %s16, 1
    %p34 = por %p32, %p33
    %p35 = scmp.ne.s32.totalorder %s24, %s25
    %p36 = scmp.eq.s32.totalorder %s16, 0
    %p37 = por %p35, %p36
    %p38 = scmp.ne.s32.totalorder %s24, %s25
    %p39 = scmp.eq.s32.totalorder %s17, 1
    %p40 = por %p38, %p39
    %p42 = scmp.ne.s32.totalorder %s25, %s41
    %p43 = scmp.eq.s32.totalorder %s17, 0
    %p44 = por %p42, %p43
    %s45 = ssub.s32 %s11, %s18
    %p46 = scmp.eq.s32.totalorder %s45, 0
    %s48 = sadd.s32 %s47, 1
    %s49 = scalar_select %p46, %s47, %s48
    %p52 = pneg %p46
    %p53 = scmp.eq.s32.totalorder %s11, 1
    %p54 = por %p52, %p53
    %p55 = scmp.ne.s32.totalorder %s47, %s50
    %p56 = scmp.eq.s32.totalorder %s11, 0
    %p57 = por %p55, %p56
    %p58 = scmp.ne.s32.totalorder %s47, %s50
    %p59 = scmp.eq.s32.totalorder %s16, 1
    %p60 = por %p58, %p59
    %p61 = scmp.ne.s32.totalorder %s50, %s51
    %p62 = scmp.eq.s32.totalorder %s16, 0
    %p63 = por %p61, %p62
    %p64 = scmp.ne.s32.totalorder %s50, %s51
    %p65 = scmp.eq.s32.totalorder %s17, 1
    %p66 = por %p64, %p65
    %p68 = scmp.ne.s32.totalorder %s51, %s67
    %p69 = scmp.eq.s32.totalorder %s17, 0
    %p70 = por %p68, %p69
    %s72 = sadd.s32 %s71, 1
    %p75 = scmp.eq.s32.totalorder %s11, 1
    %p76 = scmp.ne.s32.totalorder %s71, %s73
    %p77 = scmp.eq.s32.totalorder %s11, 0
    %p78 = por %p76, %p77
    %p79 = scmp.ne.s32.totalorder %s71, %s73
    %p80 = scmp.eq.s32.totalorder %s16, 1
    %p81 = por %p79, %p80
    %p82 = scmp.ne.s32.totalorder %s73, %s74
    %p83 = scmp.eq.s32.totalorder %s16, 0
    %p84 = por %p82, %p83
    %p85 = scmp.ne.s32.totalorder %s73, %s74
    %p86 = scmp.eq.s32.totalorder %s17, 1
    %p87 = por %p85, %p86
    %p89 = scmp.ne.s32.totalorder %s74, %s88
    %p90 = scmp.eq.s32.totalorder %s17, 0
    %p91 = por %p89, %p90
    %s93 = sadd.s32 %s92, 1
    %p96 = scmp.eq.s32.totalorder %s11, 1
    %p97 = scmp.ne.s32.totalorder %s92, %s94
    %p98 = scmp.eq.s32.totalorder %s11, 0
    %p99 = por %p97, %p98
    %p100 = scmp.ne.s32.totalorder %s92, %s94
    %p101 = scmp.eq.s32.totalorder %s16, 1
    %p102 = por %p100, %p101
    %p103 = scmp.ne.s32.totalorder %s94, %s95
    %p104 = scmp.eq.s32.totalorder %s16, 0
    %p105 = por %p103, %p104
    %p106 = scmp.ne.s32.totalorder %s94, %s95
    %p107 = scmp.eq.s32.totalorder %s17, 1
    %p108 = por %p106, %p107
    %p110 = scmp.ne.s32.totalorder %s95, %s109
    %p111 = scmp.eq.s32.totalorder %s17, 0
    %p112 = por %p110, %p111
    %s114 = sadd.s32 %s113, 1
    %p117 = scmp.eq.s32.totalorder %s11, 1
    %p118 = scmp.ne.s32.totalorder %s113, %s115
    %p119 = scmp.eq.s32.totalorder %s11, 0
    %p120 = por %p118, %p119
    %p121 = scmp.ne.s32.totalorder %s113, %s115
    %p122 = scmp.eq.s32.totalorder %s16, 1
    %p123 = por %p121, %p122
    %p124 = scmp.ne.s32.totalorder %s115, %s116
    %p125 = scmp.eq.s32.totalorder %s16, 0
    %p126 = por %p124, %p125
    %p127 = scmp.ne.s32.totalorder %s115, %s116
    %p128 = scmp.eq.s32.totalorder %s17, 1
    %p129 = por %p127, %p128
    %p131 = scmp.ne.s32.totalorder %s116, %s130
    %p132 = scmp.eq.s32.totalorder %s17, 0
    %p133 = por %p131, %p132
    %s134 = ssub.s32 %s11, %s18
    %p135 = scmp.eq.s32.totalorder %s134, 0
    %s137 = sadd.s32 %s136, 1
    %s138 = scalar_select %p135, %s136, %s137
    %p141 = pneg %p135
    %p142 = scmp.eq.s32.totalorder %s11, 1
    %p143 = por %p141, %p142
    %p144 = scmp.ne.s32.totalorder %s136, %s139
    %p145 = scmp.eq.s32.totalorder %s11, 0
    %p146 = por %p144, %p145
    %p147 = scmp.ne.s32.totalorder %s136, %s139
    %p148 = scmp.eq.s32.totalorder %s16, 1
    %p149 = por %p147, %p148
    %p150 = scmp.ne.s32.totalorder %s139, %s140
    %p151 = scmp.eq.s32.totalorder %s16, 0
    %p152 = por %p150, %p151
    %p153 = scmp.ne.s32.totalorder %s139, %s140
    %p154 = scmp.eq.s32.totalorder %s17, 1
    %p155 = por %p153, %p154
    %p157 = scmp.ne.s32.totalorder %s140, %s156
    %p158 = scmp.eq.s32.totalorder %s17, 0
    %p159 = por %p157, %p158
    %p160 = scmp.le.s32.totalorder 1, %s11
    %p161 = scmp.lt.s32.totalorder %s11, 3
    %p162 = pnand %p160, %p161
    %p163 = pneg %p162
    // Predicated region
    $region9: #{rir_unit_pallas.1} parent=5 // pred_check
      _
    $region10: #{rir_unit_pallas.1} parent=5 // pred_check_branch
      %165 = sbr.rel (%p162) target = $region12
    $region11: #{rir_unit_pallas.1} parent=5 // pred_region
      %s166 = ssub.s32 %s11, 1
      // Predicated region
      $region13: #{rir_unit_pallas.1} parent=11 // pred_check
        %p167 = pneg %p84
      $region14: #{rir_unit_pallas.1} parent=11 // pred_check_branch
        %169 = sbr.rel (%p167) target = $region16
      $region15: #{rir_unit_pallas.1} parent=11 // pred_region
        _
      $region16: #{rir_unit_pallas.1} parent=11 // pred_fallthru
        _
      // Predicated region
      $region17: #{rir_unit_pallas.1} parent=11 // pred_check
        %p170 = pneg %p105
      $region18: #{rir_unit_pallas.1} parent=11 // pred_check_branch
        %172 = sbr.rel (%p170) target = $region20
      $region19: #{rir_unit_pallas.1} parent=11 // pred_region
        _
      $region20: #{rir_unit_pallas.1} parent=11 // pred_fallthru
        _
      // Predicated region
      $region21: #{rir_unit_pallas.1} parent=11 // pred_check
        %p173 = pneg %p126
      $region22: #{rir_unit_pallas.1} parent=11 // pred_check_branch
        %175 = sbr.rel (%p173) target = $region24
      $region23: #{rir_unit_pallas.1} parent=11 // pred_region
        _
      $region24: #{rir_unit_pallas.1} parent=11 // pred_fallthru
        _
    $region12: #{rir_unit_pallas.1} parent=5 // pred_fallthru
      _
    %p176 = scmp.lt.s32.totalorder %s11, 2
    // Predicated region
    $region25: #{rir_unit_pallas.1} parent=5 // pred_check
      %p177 = pneg %p176
    $region26: #{rir_unit_pallas.1} parent=5 // pred_check_branch
      %179 = sbr.rel (%p177) target = $region28
    $region27: #{rir_unit_pallas.1} parent=5 // pred_region
      // Predicated region
      $region29: #{rir_unit_pallas.1} parent=27 // pred_check
        %p180 = pneg %p31
      $region30: #{rir_unit_pallas.1} parent=27 // pred_check_branch
        %182 = sbr.rel (%p180) target = $region32
      $region31: #{rir_unit_pallas.1} parent=27 // pred_region
        %p183 = scmp.lt.s32.totalorder %s11, 1
        %s184 = scalar_select %p183, %s11, 1
        %s185 = smul.addr %s184, 32
        %s186 = smul.addr %s185, 4
        %s187 = scalar_lea.vmem %s0, %s186
      $region32: #{rir_unit_pallas.1} parent=27 // pred_fallthru
        _
      // Predicated region
      $region33: #{rir_unit_pallas.1} parent=27 // pred_check
        %p188 = pneg %p57
      $region34: #{rir_unit_pallas.1} parent=27 // pred_check_branch
        %190 = sbr.rel (%p188) target = $region36
      $region35: #{rir_unit_pallas.1} parent=27 // pred_region
        %p191 = scmp.lt.s32.totalorder %s11, 1
        %s192 = scalar_select %p191, %s11, 1
        %s193 = smul.addr %s192, 32
        %s194 = smul.addr %s193, 4
        %s195 = scalar_lea.vmem %s1, %s194
      $region36: #{rir_unit_pallas.1} parent=27 // pred_fallthru
        _
    $region28: #{rir_unit_pallas.1} parent=5 // pred_fallthru
      _
    %p196 = scmp.le.s32.totalorder 1, %s11
    %p197 = scmp.lt.s32.totalorder %s11, 3
    %p198 = pnand %p196, %p197
    %p199 = pneg %p198
    // Predicated region
    $region37: #{rir_unit_pallas.1} parent=5 // pred_check
      _
    $region38: #{rir_unit_pallas.1} parent=5 // pred_check_branch
      %201 = sbr.rel (%p198) target = $region40
    $region39: #{rir_unit_pallas.1} parent=5 // pred_region
      %s202 = ssub.s32 %s11, 1
      %p203 = scmp.lt.s32.totalorder %s16, 1
      %s204 = scalar_select %p203, %s16, 1
      %s205 = smul.addr %s204, 32
      %s206 = smul.addr %s205, 4
      %s207 = scalar_lea.vmem %s0, %s206
      %p208 = pneg %p37
      %p209 = pneg %p34
      %p210 = scmp.lt.s32.totalorder %s16, 1
      %s211 = scalar_select %p210, %s16, 1
      %s212 = smul.addr %s211, 32
      %s213 = smul.addr %s212, 4
      %s214 = scalar_lea.vmem %s1, %s213
      %p215 = pneg %p63
      %p216 = pneg %p60
      %p217 = pneg %p84
      %p218 = pneg %p81
      %p219 = pneg %p105
      %p220 = pneg %p102
      %p221 = pneg %p126
      %p222 = pneg %p123
      %p223 = pneg %p152
      %p224 = pneg %p149
      %p225 = scmp.lt.s32.totalorder %s16, 1
      %s226 = scalar_select %p225, %s16, 1
      %s227 = smul.addr %s226, 32
      %s228 = smul.addr %s227, 8
      %s229 = scalar_lea.vmem %s5, %s228
      %p230 = scmp.lt.s32.totalorder %s16, 1
      %s231 = scalar_select %p230, %s16, 1
      %s232 = smul.addr %s231, 32
      %s233 = smul.addr %s232, 4
      %s234 = scalar_lea.vmem %s0, %s233
      %p235 = scmp.lt.s32.totalorder %s16, 1
      %s236 = scalar_select %p235, %s16, 1
      %s237 = smul.addr %s236, 32
      %s238 = smul.addr %s237, 4
      %s239 = scalar_lea.vmem %s1, %s238
      %p240 = scmp.lt.s32.totalorder %s16, 1
      %s241 = scalar_select %p240, %s16, 1
      %s242 = smul.addr %s241, 32
      %s243 = smul.addr %s242, 8
      %s244 = scalar_lea.vmem %s5, %s243
      %vm246 = vcmask 60416
      %247 = vst.msk [vmem:[#allocation2] sm:$0xf] %vm246, 0
      %248 = vst.msk [vmem:[#allocation2 + $0x4] sm:$0xf] %vm246, 0
      %vm249 = vcmask 57344
      %250 = vst.msk [vmem:[#allocation2 + $0x8] sm:$0x1] %vm249, 0
      %251 = vst.msk [vmem:[#allocation2 + $0xc] sm:$0xf] %vm246, 0
      %252 = vst.msk [vmem:[#allocation2 + $0x10] sm:$0xf] %vm246, 0
      %253 = vst.msk [vmem:[#allocation2 + $0x14] sm:$0x1] %vm249, 0
      %254 = vst.msk [vmem:[#allocation2 + $0x18] sm:$0xf] %vm246, 0
      %255 = vst.msk [vmem:[#allocation2 + $0x1c] sm:$0xf] %vm246, 0
      %256 = vst.msk [vmem:[#allocation2 + $0x20] sm:$0x1] %vm249, 0
      %257 = vst.msk [vmem:[#allocation2 + $0x24] sm:$0xf] %vm246, 0
      %258 = vst.msk [vmem:[#allocation2 + $0x28] sm:$0xf] %vm246, 0
      %259 = vst.msk [vmem:[#allocation2 + $0x2c] sm:$0x1] %vm249, 0
      %260 = vst.msk [vmem:[#allocation2 + $0x30] sm:$0xf] %vm246, 0
      %261 = vst.msk [vmem:[#allocation2 + $0x34] sm:$0xf] %vm246, 0
      %262 = vst.msk [vmem:[#allocation2 + $0x38] sm:$0x1] %vm249, 0
      %263 = vst.msk [vmem:[#allocation2 + $0x3c] sm:$0xf] %vm246, 0
      %264 = vst.msk [vmem:[#allocation2 + $0x40] sm:$0xf] %vm246, 0
      %265 = vst.msk [vmem:[#allocation2 + $0x44] sm:$0x1] %vm249, 0
      %266 = vst.msk [vmem:[#allocation2 + $0x48] sm:$0xf] %vm246, 0
      %267 = vst.msk [vmem:[#allocation2 + $0x4c] sm:$0xf] %vm246, 0
      %268 = vst.msk [vmem:[#allocation2 + $0x50] sm:$0x1] %vm249, 0
      %269 = vst.msk [vmem:[#allocation2 + $0x54] sm:$0xf] %vm246, 0
      %270 = vst.msk [vmem:[#allocation2 + $0x58] sm:$0xf] %vm246, 0
      %271 = vst.msk [vmem:[#allocation2 + $0x5c] sm:$0x1] %vm249, 0
      %272 = vst.msk [vmem:[#allocation2 + $0x60] sm:$0xf] %vm246, 0
      %273 = vst.msk [vmem:[#allocation2 + $0x64] sm:$0xf] %vm246, 0
      %274 = vst.msk [vmem:[#allocation2 + $0x68] sm:$0x1] %vm249, 0
      %275 = vst.msk [vmem:[#allocation2 + $0x6c] sm:$0xf] %vm246, 0
      %276 = vst.msk [vmem:[#allocation2 + $0x70] sm:$0xf] %vm246, 0
      %277 = vst.msk [vmem:[#allocation2 + $0x74] sm:$0x1] %vm249, 0
      %278 = vst.msk [vmem:[#allocation2 + $0x78] sm:$0xf] %vm246, 0
      %279 = vst.msk [vmem:[#allocation2 + $0x7c] sm:$0xf] %vm246, 0
      %280 = vst.msk [vmem:[#allocation2 + $0x80] sm:$0x1] %vm249, 0
      %281 = vst.msk [vmem:[#allocation2 + $0x84] sm:$0xf] %vm246, 0
      %282 = vst.msk [vmem:[#allocation2 + $0x88] sm:$0xf] %vm246, 0
      %283 = vst.msk [vmem:[#allocation2 + $0x8c] sm:$0x1] %vm249, 0
      %284 = vst.msk [vmem:[#allocation2 + $0x90] sm:$0xf] %vm246, 0
      %285 = vst.msk [vmem:[#allocation2 + $0x94] sm:$0xf] %vm246, 0
      %286 = vst.msk [vmem:[#allocation2 + $0x98] sm:$0x1] %vm249, 0
      %287 = vst.msk [vmem:[#allocation2 + $0x9c] sm:$0xf] %vm246, 0
      %288 = vst.msk [vmem:[#allocation2 + $0xa0] sm:$0xf] %vm246, 0
      %289 = vst.msk [vmem:[#allocation2 + $0xa4] sm:$0x1] %vm249, 0
      %290 = vst.msk [vmem:[#allocation2 + $0xa8] sm:$0xf] %vm246, 0
      %291 = vst.msk [vmem:[#allocation2 + $0xac] sm:$0xf] %vm246, 0
      %292 = vst.msk [vmem:[#allocation2 + $0xb0] sm:$0x1] %vm249, 0
      %293 = vst.msk [vmem:[#allocation2 + $0xb4] sm:$0xf] %vm246, 0
      %294 = vst.msk [vmem:[#allocation2 + $0xb8] sm:$0xf] %vm246, 0
      %295 = vst.msk [vmem:[#allocation2 + $0xbc] sm:$0x1] %vm249, 0
      %296 = vst.msk [vmem:[#allocation2 + $0xc0] sm:$0xf] %vm246, 0
      %297 = vst.msk [vmem:[#allocation2 + $0xc4] sm:$0xf] %vm246, 0
      %298 = vst.msk [vmem:[#allocation2 + $0xc8] sm:$0x1] %vm249, 0
      %299 = vst.msk [vmem:[#allocation2 + $0xcc] sm:$0xf] %vm246, 0
      %300 = vst.msk [vmem:[#allocation2 + $0xd0] sm:$0xf] %vm246, 0
      %301 = vst.msk [vmem:[#allocation2 + $0xd4] sm:$0x1] %vm249, 0
      %302 = vst.msk [vmem:[#allocation3] sm:$0xf] %vm246, 0
      %303 = vst.msk [vmem:[#allocation3 + $0x4] sm:$0xf] %vm246, 0
      %304 = vst.msk [vmem:[#allocation3 + $0x8] sm:$0x1] %vm249, 0
      %305 = vst.msk [vmem:[#allocation3 + $0xc] sm:$0xf] %vm246, 0
      %306 = vst.msk [vmem:[#allocation3 + $0x10] sm:$0xf] %vm246, 0
      %307 = vst.msk [vmem:[#allocation3 + $0x14] sm:$0x1] %vm249, 0
      %308 = vst.msk [vmem:[#allocation3 + $0x18] sm:$0xf] %vm246, 0
      %309 = vst.msk [vmem:[#allocation3 + $0x1c] sm:$0xf] %vm246, 0
      %310 = vst.msk [vmem:[#allocation3 + $0x20] sm:$0x1] %vm249, 0
      %311 = vst.msk [vmem:[#allocation3 + $0x24] sm:$0xf] %vm246, 0
      %312 = vst.msk [vmem:[#allocation3 + $0x28] sm:$0xf] %vm246, 0
      %313 = vst.msk [vmem:[#allocation3 + $0x2c] sm:$0x1] %vm249, 0
      %314 = vst.msk [vmem:[#allocation3 + $0x30] sm:$0xf] %vm246, 0
      %315 = vst.msk [vmem:[#allocation3 + $0x34] sm:$0xf] %vm246, 0
      %316 = vst.msk [vmem:[#allocation3 + $0x38] sm:$0x1] %vm249, 0
      %317 = vst.msk [vmem:[#allocation3 + $0x3c] sm:$0xf] %vm246, 0
      %318 = vst.msk [vmem:[#allocation3 + $0x40] sm:$0xf] %vm246, 0
      %319 = vst.msk [vmem:[#allocation3 + $0x44] sm:$0x1] %vm249, 0
      %320 = vst.msk [vmem:[#allocation3 + $0x48] sm:$0xf] %vm246, 0
      %321 = vst.msk [vmem:[#allocation3 + $0x4c] sm:$0xf] %vm246, 0
      %322 = vst.msk [vmem:[#allocation3 + $0x50] sm:$0x1] %vm249, 0
      %323 = vst.msk [vmem:[#allocation3 + $0x54] sm:$0xf] %vm246, 0
      %324 = vst.msk [vmem:[#allocation3 + $0x58] sm:$0xf] %vm246, 0
      %325 = vst.msk [vmem:[#allocation3 + $0x5c] sm:$0x1] %vm249, 0
      %326 = vst.msk [vmem:[#allocation3 + $0x60] sm:$0xf] %vm246, 0
      %327 = vst.msk [vmem:[#allocation3 + $0x64] sm:$0xf] %vm246, 0
      %328 = vst.msk [vmem:[#allocation3 + $0x68] sm:$0x1] %vm249, 0
      %329 = vst.msk [vmem:[#allocation3 + $0x6c] sm:$0xf] %vm246, 0
      %330 = vst.msk [vmem:[#allocation3 + $0x70] sm:$0xf] %vm246, 0
      %331 = vst.msk [vmem:[#allocation3 + $0x74] sm:$0x1] %vm249, 0
      %332 = vst.msk [vmem:[#allocation3 + $0x78] sm:$0xf] %vm246, 0
      %333 = vst.msk [vmem:[#allocation3 + $0x7c] sm:$0xf] %vm246, 0
      %334 = vst.msk [vmem:[#allocation3 + $0x80] sm:$0x1] %vm249, 0
      %335 = vst.msk [vmem:[#allocation3 + $0x84] sm:$0xf] %vm246, 0
      %336 = vst.msk [vmem:[#allocation3 + $0x88] sm:$0xf] %vm246, 0
      %337 = vst.msk [vmem:[#allocation3 + $0x8c] sm:$0x1] %vm249, 0
      %338 = vst.msk [vmem:[#allocation3 + $0x90] sm:$0xf] %vm246, 0
      %339 = vst.msk [vmem:[#allocation3 + $0x94] sm:$0xf] %vm246, 0
      %340 = vst.msk [vmem:[#allocation3 + $0x98] sm:$0x1] %vm249, 0
      %341 = vst.msk [vmem:[#allocation3 + $0x9c] sm:$0xf] %vm246, 0
      %342 = vst.msk [vmem:[#allocation3 + $0xa0] sm:$0xf] %vm246, 0
      %343 = vst.msk [vmem:[#allocation3 + $0xa4] sm:$0x1] %vm249, 0
      %344 = vst.msk [vmem:[#allocation3 + $0xa8] sm:$0xf] %vm246, 0
      %345 = vst.msk [vmem:[#allocation3 + $0xac] sm:$0xf] %vm246, 0
      %346 = vst.msk [vmem:[#allocation3 + $0xb0] sm:$0x1] %vm249, 0
      %347 = vst.msk [vmem:[#allocation3 + $0xb4] sm:$0xf] %vm246, 0
      %348 = vst.msk [vmem:[#allocation3 + $0xb8] sm:$0xf] %vm246, 0
      %349 = vst.msk [vmem:[#allocation3 + $0xbc] sm:$0x1] %vm249, 0
      %350 = vst.msk [vmem:[#allocation3 + $0xc0] sm:$0xf] %vm246, 0
      %351 = vst.msk [vmem:[#allocation3 + $0xc4] sm:$0xf] %vm246, 0
      %352 = vst.msk [vmem:[#allocation3 + $0xc8] sm:$0x1] %vm249, 0
      %353 = vst.msk [vmem:[#allocation3 + $0xcc] sm:$0xf] %vm246, 0
      %354 = vst.msk [vmem:[#allocation3 + $0xd0] sm:$0xf] %vm246, 0
      %355 = vst.msk [vmem:[#allocation3 + $0xd4] sm:$0x1] %vm249, 0
      %v356 = vld [vmem:[%s234] sm:$0xf]
      %v357 = vld [vmem:[%s234 + $0x4] sm:$0xf]
      %v358 = vld [vmem:[%s234 + $0x8] sm:$0xf]
      %v359 = vld [vmem:[%s234 + $0xc] sm:$0xf]
      %v360 = vld [vmem:[%s234 + $0x10] sm:$0xf]
      %v361 = vld [vmem:[%s234 + $0x14] sm:$0xf]
      %v362 = vld [vmem:[%s234 + $0x18] sm:$0xf]
      %v363 = vld [vmem:[%s234 + $0x1c] sm:$0xf]
      %v364 = vld [vmem:[%s234 + $0x20] sm:$0xf]
      %v365 = vld [vmem:[%s234 + $0x24] sm:$0xf]
      %v366 = vld [vmem:[%s234 + $0x28] sm:$0xf]
      %v367 = vld [vmem:[%s234 + $0x2c] sm:$0xf]
      %v368 = vld [vmem:[%s234 + $0x30] sm:$0xf]
      %v369 = vld [vmem:[%s234 + $0x34] sm:$0xf]
      %v370 = vld [vmem:[%s234 + $0x38] sm:$0xf]
      %v371 = vld [vmem:[%s234 + $0x3c] sm:$0xf]
      %v372 = vld [vmem:[%s234 + $0x40] sm:$0xf]
      %v373 = vld [vmem:[%s234 + $0x44] sm:$0xf]
      %v374 = vld [vmem:[%s234 + $0x48] sm:$0xf]
      %v375 = vld [vmem:[%s234 + $0x4c] sm:$0xf]
      %v376 = vld [vmem:[%s234 + $0x50] sm:$0xf]
      %v377 = vld [vmem:[%s234 + $0x54] sm:$0xf]
      %v378 = vld [vmem:[%s234 + $0x58] sm:$0xf]
      %v379 = vld [vmem:[%s234 + $0x5c] sm:$0xf]
      %v380 = vld [vmem:[%s234 + $0x60] sm:$0xf]
      %v381 = vld [vmem:[%s234 + $0x64] sm:$0xf]
      %v382 = vld [vmem:[%s234 + $0x68] sm:$0xf]
      %v383 = vld [vmem:[%s234 + $0x6c] sm:$0xf]
      %v384 = vld [vmem:[%s234 + $0x70] sm:$0xf]
      %v385 = vld [vmem:[%s234 + $0x74] sm:$0xf]
      %v386 = vld [vmem:[%s234 + $0x78] sm:$0xf]
      %v387 = vld [vmem:[%s234 + $0x7c] sm:$0xf]
      %vm388 = vsmask.f32 256
      %vm389 = vsmask.f32 4368
      %vm390 = vmor %vm388, %vm389
      %v392 = vshrl.u32 %v356, 16
      %v394 = vrot.slane %v392, 7
      %v395 = vshll.u32 %v356, 16
      %v397 = vor.u32 %v394, %v395
      %v398 = vrot.slane %v394, 4
      %v400 = vshrl.u32 %v357, 16
      %v402 = vrot.slane %v400, 7
      %v403 = vshll.u32 %v357, 16
      %v405 = vor.u32 %v402, %v403
      %v406 = vsel %vm390, %v398, %v405
      %v407 = vrot.slane %v402, 4
      %v409 = vshrl.u32 %v358, 16
      %v411 = vrot.slane %v409, 7
      %v412 = vshll.u32 %v358, 16
      %v414 = vor.u32 %v411, %v412
      %v415 = vrot.slane %v411, 4
      %v417 = vshrl.u32 %v359, 16
      %v419 = vrot.slane %v417, 7
      %v420 = vshll.u32 %v359, 16
      %v422 = vor.u32 %v419, %v420
      %v423 = vsel %vm390, %v415, %v422
      %v424 = vrot.slane %v419, 4
      %v426 = vshrl.u32 %v360, 16
      %v428 = vrot.slane %v426, 7
      %v429 = vshll.u32 %v360, 16
      %v431 = vor.u32 %v428, %v429
      %v432 = vrot.slane %v428, 4
      %v434 = vshrl.u32 %v361, 16
      %v436 = vrot.slane %v434, 7
      %v437 = vshll.u32 %v361, 16
      %v439 = vor.u32 %v436, %v437
      %v440 = vsel %vm390, %v432, %v439
      %v441 = vrot.slane %v436, 4
      %v443 = vshrl.u32 %v362, 16
      %v445 = vrot.slane %v443, 7
      %v446 = vshll.u32 %v362, 16
      %v448 = vor.u32 %v445, %v446
      %v449 = vrot.slane %v445, 4
      %v451 = vshrl.u32 %v363, 16
      %v453 = vrot.slane %v451, 7
      %v454 = vshll.u32 %v363, 16
      %v456 = vor.u32 %v453, %v454
      %v457 = vsel %vm390, %v449, %v456
      %v458 = vrot.slane %v453, 4
      %v460 = vshrl.u32 %v364, 16
      %v462 = vrot.slane %v460, 7
      %v463 = vshll.u32 %v364, 16
      %v465 = vor.u32 %v462, %v463
      %v466 = vrot.slane %v462, 4
      %v468 = vshrl.u32 %v365, 16
      %v470 = vrot.slane %v468, 7
      %v471 = vshll.u32 %v365, 16
      %v473 = vor.u32 %v470, %v471
      %v474 = vsel %vm390, %v466, %v473
      %v475 = vrot.slane %v470, 4
      %v477 = vshrl.u32 %v366, 16
      %v479 = vrot.slane %v477, 7
      %v480 = vshll.u32 %v366, 16
      %v482 = vor.u32 %v479, %v480
      %v483 = vrot.slane %v479, 4
      %v485 = vshrl.u32 %v367, 16
      %v487 = vrot.slane %v485, 7
      %v488 = vshll.u32 %v367, 16
      %v490 = vor.u32 %v487, %v488
      %v491 = vsel %vm390, %v483, %v490
      %v492 = vrot.slane %v487, 4
      %v494 = vshrl.u32 %v368, 16
      %v496 = vrot.slane %v494, 7
      %v497 = vshll.u32 %v368, 16
      %v499 = vor.u32 %v496, %v497
      %v500 = vrot.slane %v496, 4
      %v502 = vshrl.u32 %v369, 16
      %v504 = vrot.slane %v502, 7
      %v505 = vshll.u32 %v369, 16
      %v507 = vor.u32 %v504, %v505
      %v508 = vsel %vm390, %v500, %v507
      %v509 = vrot.slane %v504, 4
      %v511 = vshrl.u32 %v370, 16
      %v513 = vrot.slane %v511, 7
      %v514 = vshll.u32 %v370, 16
      %v516 = vor.u32 %v513, %v514
      %v517 = vrot.slane %v513, 4
      %v519 = vshrl.u32 %v371, 16
      %v521 = vrot.slane %v519, 7
      %v522 = vshll.u32 %v371, 16
      %v524 = vor.u32 %v521, %v522
      %v525 = vsel %vm390, %v517, %v524
      %v526 = vrot.slane %v521, 4
      %v528 = vshrl.u32 %v372, 16
      %v530 = vrot.slane %v528, 7
      %v531 = vshll.u32 %v372, 16
      %v533 = vor.u32 %v530, %v531
      %v534 = vrot.slane %v530, 4
      %v536 = vshrl.u32 %v373, 16
      %v538 = vrot.slane %v536, 7
      %v539 = vshll.u32 %v373, 16
      %v541 = vor.u32 %v538, %v539
      %v542 = vsel %vm390, %v534, %v541
      %v543 = vrot.slane %v538, 4
      %v545 = vshrl.u32 %v374, 16
      %v547 = vrot.slane %v545, 7
      %v548 = vshll.u32 %v374, 16
      %v550 = vor.u32 %v547, %v548
      %v551 = vrot.slane %v547, 4
      %v553 = vshrl.u32 %v375, 16
      %v555 = vrot.slane %v553, 7
      %v556 = vshll.u32 %v375, 16
      %v558 = vor.u32 %v555, %v556
      %v559 = vsel %vm390, %v551, %v558
      %v560 = vrot.slane %v555, 4
      %v562 = vshrl.u32 %v376, 16
      %v564 = vrot.slane %v562, 7
      %v565 = vshll.u32 %v376, 16
      %v567 = vor.u32 %v564, %v565
      %v568 = vrot.slane %v564, 4
      %v570 = vshrl.u32 %v377, 16
      %v572 = vrot.slane %v570, 7
      %v573 = vshll.u32 %v377, 16
      %v575 = vor.u32 %v572, %v573
      %v576 = vsel %vm390, %v568, %v575
      %v577 = vrot.slane %v572, 4
      %v579 = vshrl.u32 %v378, 16
      %v581 = vrot.slane %v579, 7
      %v582 = vshll.u32 %v378, 16
      %v584 = vor.u32 %v581, %v582
      %v585 = vrot.slane %v581, 4
      %v587 = vshrl.u32 %v379, 16
      %v589 = vrot.slane %v587, 7
      %v590 = vshll.u32 %v379, 16
      %v592 = vor.u32 %v589, %v590
      %v593 = vsel %vm390, %v585, %v592
      %v594 = vrot.slane %v589, 4
      %v596 = vshrl.u32 %v380, 16
      %v598 = vrot.slane %v596, 7
      %v599 = vshll.u32 %v380, 16
      %v601 = vor.u32 %v598, %v599
      %v602 = vrot.slane %v598, 4
      %v604 = vshrl.u32 %v381, 16
      %v606 = vrot.slane %v604, 7
      %v607 = vshll.u32 %v381, 16
      %v609 = vor.u32 %v606, %v607
      %v610 = vsel %vm390, %v602, %v609
      %v611 = vrot.slane %v606, 4
      %v613 = vshrl.u32 %v382, 16
      %v615 = vrot.slane %v613, 7
      %v616 = vshll.u32 %v382, 16
      %v618 = vor.u32 %v615, %v616
      %v619 = vrot.slane %v615, 4
      %v621 = vshrl.u32 %v383, 16
      %v623 = vrot.slane %v621, 7
      %v624 = vshll.u32 %v383, 16
      %v626 = vor.u32 %v623, %v624
      %v627 = vsel %vm390, %v619, %v626
      %v628 = vrot.slane %v623, 4
      %v630 = vshrl.u32 %v384, 16
      %v632 = vrot.slane %v630, 7
      %v633 = vshll.u32 %v384, 16
      %v635 = vor.u32 %v632, %v633
      %v636 = vrot.slane %v632, 4
      %v638 = vshrl.u32 %v385, 16
      %v640 = vrot.slane %v638, 7
      %v641 = vshll.u32 %v385, 16
      %v643 = vor.u32 %v640, %v641
      %v644 = vsel %vm390, %v636, %v643
      %v645 = vrot.slane %v640, 4
      %v647 = vshrl.u32 %v386, 16
      %v649 = vrot.slane %v647, 7
      %v650 = vshll.u32 %v386, 16
      %v652 = vor.u32 %v649, %v650
      %v653 = vrot.slane %v649, 4
      %v655 = vshrl.u32 %v387, 16
      %v657 = vrot.slane %v655, 7
      %v658 = vshll.u32 %v387, 16
      %v660 = vor.u32 %v657, %v658
      %v661 = vsel %vm390, %v653, %v660
      %v662 = vrot.slane %v657, 4
      %s711 = scalar_lea.vmem [#allocation2], 12
      %vm712 = vcmask 60416
      %vm713 = vsmask.f32 7938
      %vm714 = vmand %vm712, %vm713
      %v715 = vld [vmem:[%s711] sm:$0xf]
      %v716 = vsel %vm714, %v397, %v715
      %717 = vst [vmem:[%s711] sm:$0xf] %v716
      %718 = vst.msk [vmem:[%s711 + $0x4] sm:$0xf] %vm246, %v406
      %vm719 = vcmask 57344
      %vm720 = vmand %vm719, %vm388
      %v721 = vld [vmem:[%s711 + $0x8] sm:$0x1]
      %v722 = vsel %vm720, %v407, %v721
      %723 = vst [vmem:[%s711 + $0x8] sm:$0x1] %v722
      %v724 = vld [vmem:[%s711 + $0xc] sm:$0xf]
      %v725 = vsel %vm714, %v414, %v724
      %726 = vst [vmem:[%s711 + $0xc] sm:$0xf] %v725
      %727 = vst.msk [vmem:[%s711 + $0x10] sm:$0xf] %vm246, %v423
      %v728 = vld [vmem:[%s711 + $0x14] sm:$0x1]
      %v729 = vsel %vm720, %v424, %v728
      %730 = vst [vmem:[%s711 + $0x14] sm:$0x1] %v729
      %v731 = vld [vmem:[%s711 + $0x18] sm:$0xf]
      %v732 = vsel %vm714, %v431, %v731
      %733 = vst [vmem:[%s711 + $0x18] sm:$0xf] %v732
      %734 = vst.msk [vmem:[%s711 + $0x1c] sm:$0xf] %vm246, %v440
      %v735 = vld [vmem:[%s711 + $0x20] sm:$0x1]
      %v736 = vsel %vm720, %v441, %v735
      %737 = vst [vmem:[%s711 + $0x20] sm:$0x1] %v736
      %v738 = vld [vmem:[%s711 + $0x24] sm:$0xf]
      %v739 = vsel %vm714, %v448, %v738
      %740 = vst [vmem:[%s711 + $0x24] sm:$0xf] %v739
      %741 = vst.msk [vmem:[%s711 + $0x28] sm:$0xf] %vm246, %v457
      %v742 = vld [vmem:[%s711 + $0x2c] sm:$0x1]
      %v743 = vsel %vm720, %v458, %v742
      %744 = vst [vmem:[%s711 + $0x2c] sm:$0x1] %v743
      %v745 = vld [vmem:[%s711 + $0x30] sm:$0xf]
      %v746 = vsel %vm714, %v465, %v745
      %747 = vst [vmem:[%s711 + $0x30] sm:$0xf] %v746
      %748 = vst.msk [vmem:[%s711 + $0x34] sm:$0xf] %vm246, %v474
      %v749 = vld [vmem:[%s711 + $0x38] sm:$0x1]
      %v750 = vsel %vm720, %v475, %v749
      %751 = vst [vmem:[%s711 + $0x38] sm:$0x1] %v750
      %v752 = vld [vmem:[%s711 + $0x3c] sm:$0xf]
      %v753 = vsel %vm714, %v482, %v752
      %754 = vst [vmem:[%s711 + $0x3c] sm:$0xf] %v753
      %755 = vst.msk [vmem:[%s711 + $0x40] sm:$0xf] %vm246, %v491
      %v756 = vld [vmem:[%s711 + $0x44] sm:$0x1]
      %v757 = vsel %vm720, %v492, %v756
      %758 = vst [vmem:[%s711 + $0x44] sm:$0x1] %v757
      %v759 = vld [vmem:[%s711 + $0x48] sm:$0xf]
      %v760 = vsel %vm714, %v499, %v759
      %761 = vst [vmem:[%s711 + $0x48] sm:$0xf] %v760
      %762 = vst.msk [vmem:[%s711 + $0x4c] sm:$0xf] %vm246, %v508
      %v763 = vld [vmem:[%s711 + $0x50] sm:$0x1]
      %v764 = vsel %vm720, %v509, %v763
      %765 = vst [vmem:[%s711 + $0x50] sm:$0x1] %v764
      %v766 = vld [vmem:[%s711 + $0x54] sm:$0xf]
      %v767 = vsel %vm714, %v516, %v766
      %768 = vst [vmem:[%s711 + $0x54] sm:$0xf] %v767
      %769 = vst.msk [vmem:[%s711 + $0x58] sm:$0xf] %vm246, %v525
      %v770 = vld [vmem:[%s711 + $0x5c] sm:$0x1]
      %v771 = vsel %vm720, %v526, %v770
      %772 = vst [vmem:[%s711 + $0x5c] sm:$0x1] %v771
      %v773 = vld [vmem:[%s711 + $0x60] sm:$0xf]
      %v774 = vsel %vm714, %v533, %v773
      %775 = vst [vmem:[%s711 + $0x60] sm:$0xf] %v774
      %776 = vst.msk [vmem:[%s711 + $0x64] sm:$0xf] %vm246, %v542
      %v777 = vld [vmem:[%s711 + $0x68] sm:$0x1]
      %v778 = vsel %vm720, %v543, %v777
      %779 = vst [vmem:[%s711 + $0x68] sm:$0x1] %v778
      %v780 = vld [vmem:[%s711 + $0x6c] sm:$0xf]
      %v781 = vsel %vm714, %v550, %v780
      %782 = vst [vmem:[%s711 + $0x6c] sm:$0xf] %v781
      %783 = vst.msk [vmem:[%s711 + $0x70] sm:$0xf] %vm246, %v559
      %v784 = vld [vmem:[%s711 + $0x74] sm:$0x1]
      %v785 = vsel %vm720, %v560, %v784
      %786 = vst [vmem:[%s711 + $0x74] sm:$0x1] %v785
      %v787 = vld [vmem:[%s711 + $0x78] sm:$0xf]
      %v788 = vsel %vm714, %v567, %v787
      %789 = vst [vmem:[%s711 + $0x78] sm:$0xf] %v788
      %790 = vst.msk [vmem:[%s711 + $0x7c] sm:$0xf] %vm246, %v576
      %v791 = vld [vmem:[%s711 + $0x80] sm:$0x1]
      %v792 = vsel %vm720, %v577, %v791
      %793 = vst [vmem:[%s711 + $0x80] sm:$0x1] %v792
      %v794 = vld [vmem:[%s711 + $0x84] sm:$0xf]
      %v795 = vsel %vm714, %v584, %v794
      %796 = vst [vmem:[%s711 + $0x84] sm:$0xf] %v795
      %797 = vst.msk [vmem:[%s711 + $0x88] sm:$0xf] %vm246, %v593
      %v798 = vld [vmem:[%s711 + $0x8c] sm:$0x1]
      %v799 = vsel %vm720, %v594, %v798
      %800 = vst [vmem:[%s711 + $0x8c] sm:$0x1] %v799
      %v801 = vld [vmem:[%s711 + $0x90] sm:$0xf]
      %v802 = vsel %vm714, %v601, %v801
      %803 = vst [vmem:[%s711 + $0x90] sm:$0xf] %v802
      %804 = vst.msk [vmem:[%s711 + $0x94] sm:$0xf] %vm246, %v610
      %v805 = vld [vmem:[%s711 + $0x98] sm:$0x1]
      %v806 = vsel %vm720, %v611, %v805
      %807 = vst [vmem:[%s711 + $0x98] sm:$0x1] %v806
      %v808 = vld [vmem:[%s711 + $0x9c] sm:$0xf]
      %v809 = vsel %vm714, %v618, %v808
      %810 = vst [vmem:[%s711 + $0x9c] sm:$0xf] %v809
      %811 = vst.msk [vmem:[%s711 + $0xa0] sm:$0xf] %vm246, %v627
      %v812 = vld [vmem:[%s711 + $0xa4] sm:$0x1]
      %v813 = vsel %vm720, %v628, %v812
      %814 = vst [vmem:[%s711 + $0xa4] sm:$0x1] %v813
      %v815 = vld [vmem:[%s711 + $0xa8] sm:$0xf]
      %v816 = vsel %vm714, %v635, %v815
      %817 = vst [vmem:[%s711 + $0xa8] sm:$0xf] %v816
      %818 = vst.msk [vmem:[%s711 + $0xac] sm:$0xf] %vm246, %v644
      %v819 = vld [vmem:[%s711 + $0xb0] sm:$0x1]
      %v820 = vsel %vm720, %v645, %v819
      %821 = vst [vmem:[%s711 + $0xb0] sm:$0x1] %v820
      %v822 = vld [vmem:[%s711 + $0xb4] sm:$0xf]
      %v823 = vsel %vm714, %v652, %v822
      %824 = vst [vmem:[%s711 + $0xb4] sm:$0xf] %v823
      %825 = vst.msk [vmem:[%s711 + $0xb8] sm:$0xf] %vm246, %v661
      %v826 = vld [vmem:[%s711 + $0xbc] sm:$0x1]
      %v827 = vsel %vm720, %v662, %v826
      %828 = vst [vmem:[%s711 + $0xbc] sm:$0x1] %v827
      %v829 = vld [vmem:[%s239] sm:$0xf]
      %v830 = vld [vmem:[%s239 + $0x4] sm:$0xf]
      %v831 = vld [vmem:[%s239 + $0x8] sm:$0xf]
      %v832 = vld [vmem:[%s239 + $0xc] sm:$0xf]
      %v833 = vld [vmem:[%s239 + $0x10] sm:$0xf]
      %v834 = vld [vmem:[%s239 + $0x14] sm:$0xf]
      %v835 = vld [vmem:[%s239 + $0x18] sm:$0xf]
      %v836 = vld [vmem:[%s239 + $0x1c] sm:$0xf]
      %v837 = vld [vmem:[%s239 + $0x20] sm:$0xf]
      %v838 = vld [vmem:[%s239 + $0x24] sm:$0xf]
      %v839 = vld [vmem:[%s239 + $0x28] sm:$0xf]
      %v840 = vld [vmem:[%s239 + $0x2c] sm:$0xf]
      %v841 = vld [vmem:[%s239 + $0x30] sm:$0xf]
      %v842 = vld [vmem:[%s239 + $0x34] sm:$0xf]
      %v843 = vld [vmem:[%s239 + $0x38] sm:$0xf]
      %v844 = vld [vmem:[%s239 + $0x3c] sm:$0xf]
      %v845 = vld [vmem:[%s239 + $0x40] sm:$0xf]
      %v846 = vld [vmem:[%s239 + $0x44] sm:$0xf]
      %v847 = vld [vmem:[%s239 + $0x48] sm:$0xf]
      %v848 = vld [vmem:[%s239 + $0x4c] sm:$0xf]
      %v849 = vld [vmem:[%s239 + $0x50] sm:$0xf]
      %v850 = vld [vmem:[%s239 + $0x54] sm:$0xf]
      %v851 = vld [vmem:[%s239 + $0x58] sm:$0xf]
      %v852 = vld [vmem:[%s239 + $0x5c] sm:$0xf]
      %v853 = vld [vmem:[%s239 + $0x60] sm:$0xf]
      %v854 = vld [vmem:[%s239 + $0x64] sm:$0xf]
      %v855 = vld [vmem:[%s239 + $0x68] sm:$0xf]
      %v856 = vld [vmem:[%s239 + $0x6c] sm:$0xf]
      %v857 = vld [vmem:[%s239 + $0x70] sm:$0xf]
      %v858 = vld [vmem:[%s239 + $0x74] sm:$0xf]
      %v859 = vld [vmem:[%s239 + $0x78] sm:$0xf]
      %v860 = vld [vmem:[%s239 + $0x7c] sm:$0xf]
      %v862 = vshrl.u32 %v829, 16
      %v864 = vrot.slane %v862, 7
      %v865 = vshll.u32 %v829, 16
      %v867 = vor.u32 %v864, %v865
      %v868 = vrot.slane %v864, 4
      %v870 = vshrl.u32 %v830, 16
      %v872 = vrot.slane %v870, 7
      %v873 = vshll.u32 %v830, 16
      %v875 = vor.u32 %v872, %v873
      %v876 = vsel %vm390, %v868, %v875
      %v877 = vrot.slane %v872, 4
      %v879 = vshrl.u32 %v831, 16
      %v881 = vrot.slane %v879, 7
      %v882 = vshll.u32 %v831, 16
      %v884 = vor.u32 %v881, %v882
      %v885 = vrot.slane %v881, 4
      %v887 = vshrl.u32 %v832, 16
      %v889 = vrot.slane %v887, 7
      %v890 = vshll.u32 %v832, 16
      %v892 = vor.u32 %v889, %v890
      %v893 = vsel %vm390, %v885, %v892
      %v894 = vrot.slane %v889, 4
      %v896 = vshrl.u32 %v833, 16
      %v898 = vrot.slane %v896, 7
      %v899 = vshll.u32 %v833, 16
      %v901 = vor.u32 %v898, %v899
      %v902 = vrot.slane %v898, 4
      %v904 = vshrl.u32 %v834, 16
      %v906 = vrot.slane %v904, 7
      %v907 = vshll.u32 %v834, 16
      %v909 = vor.u32 %v906, %v907
      %v910 = vsel %vm390, %v902, %v909
      %v911 = vrot.slane %v906, 4
      %v913 = vshrl.u32 %v835, 16
      %v915 = vrot.slane %v913, 7
      %v916 = vshll.u32 %v835, 16
      %v918 = vor.u32 %v915, %v916
      %v919 = vrot.slane %v915, 4
      %v921 = vshrl.u32 %v836, 16
      %v923 = vrot.slane %v921, 7
      %v924 = vshll.u32 %v836, 16
      %v926 = vor.u32 %v923, %v924
      %v927 = vsel %vm390, %v919, %v926
      %v928 = vrot.slane %v923, 4
      %v930 = vshrl.u32 %v837, 16
      %v932 = vrot.slane %v930, 7
      %v933 = vshll.u32 %v837, 16
      %v935 = vor.u32 %v932, %v933
      %v936 = vrot.slane %v932, 4
      %v938 = vshrl.u32 %v838, 16
      %v940 = vrot.slane %v938, 7
      %v941 = vshll.u32 %v838, 16
      %v943 = vor.u32 %v940, %v941
      %v944 = vsel %vm390, %v936, %v943
      %v945 = vrot.slane %v940, 4
      %v947 = vshrl.u32 %v839, 16
      %v949 = vrot.slane %v947, 7
      %v950 = vshll.u32 %v839, 16
      %v952 = vor.u32 %v949, %v950
      %v953 = vrot.slane %v949, 4
      %v955 = vshrl.u32 %v840, 16
      %v957 = vrot.slane %v955, 7
      %v958 = vshll.u32 %v840, 16
      %v960 = vor.u32 %v957, %v958
      %v961 = vsel %vm390, %v953, %v960
      %v962 = vrot.slane %v957, 4
      %v964 = vshrl.u32 %v841, 16
      %v966 = vrot.slane %v964, 7
      %v967 = vshll.u32 %v841, 16
      %v969 = vor.u32 %v966, %v967
      %v970 = vrot.slane %v966, 4
      %v972 = vshrl.u32 %v842, 16
      %v974 = vrot.slane %v972, 7
      %v975 = vshll.u32 %v842, 16
      %v977 = vor.u32 %v974, %v975
      %v978 = vsel %vm390, %v970, %v977
      %v979 = vrot.slane %v974, 4
      %v981 = vshrl.u32 %v843, 16
      %v983 = vrot.slane %v981, 7
      %v984 = vshll.u32 %v843, 16
      %v986 = vor.u32 %v983, %v984
      %v987 = vrot.slane %v983, 4
      %v989 = vshrl.u32 %v844, 16
      %v991 = vrot.slane %v989, 7
      %v992 = vshll.u32 %v844, 16
      %v994 = vor.u32 %v991, %v992
      %v995 = vsel %vm390, %v987, %v994
      %v996 = vrot.slane %v991, 4
      %v998 = vshrl.u32 %v845, 16
      %v1000 = vrot.slane %v998, 7
      %v1001 = vshll.u32 %v845, 16
      %v1003 = vor.u32 %v1000, %v1001
      %v1004 = vrot.slane %v1000, 4
      %v1006 = vshrl.u32 %v846, 16
      %v1008 = vrot.slane %v1006, 7
      %v1009 = vshll.u32 %v846, 16
      %v1011 = vor.u32 %v1008, %v1009
      %v1012 = vsel %vm390, %v1004, %v1011
      %v1013 = vrot.slane %v1008, 4
      %v1015 = vshrl.u32 %v847, 16
      %v1017 = vrot.slane %v1015, 7
      %v1018 = vshll.u32 %v847, 16
      %v1020 = vor.u32 %v1017, %v1018
      %v1021 = vrot.slane %v1017, 4
      %v1023 = vshrl.u32 %v848, 16
      %v1025 = vrot.slane %v1023, 7
      %v1026 = vshll.u32 %v848, 16
      %v1028 = vor.u32 %v1025, %v1026
      %v1029 = vsel %vm390, %v1021, %v1028
      %v1030 = vrot.slane %v1025, 4
      %v1032 = vshrl.u32 %v849, 16
      %v1034 = vrot.slane %v1032, 7
      %v1035 = vshll.u32 %v849, 16
      %v1037 = vor.u32 %v1034, %v1035
      %v1038 = vrot.slane %v1034, 4
      %v1040 = vshrl.u32 %v850, 16
      %v1042 = vrot.slane %v1040, 7
      %v1043 = vshll.u32 %v850, 16
      %v1045 = vor.u32 %v1042, %v1043
      %v1046 = vsel %vm390, %v1038, %v1045
      %v1047 = vrot.slane %v1042, 4
      %v1049 = vshrl.u32 %v851, 16
      %v1051 = vrot.slane %v1049, 7
      %v1052 = vshll.u32 %v851, 16
      %v1054 = vor.u32 %v1051, %v1052
      %v1055 = vrot.slane %v1051, 4
      %v1057 = vshrl.u32 %v852, 16
      %v1059 = vrot.slane %v1057, 7
      %v1060 = vshll.u32 %v852, 16
      %v1062 = vor.u32 %v1059, %v1060
      %v1063 = vsel %vm390, %v1055, %v1062
      %v1064 = vrot.slane %v1059, 4
      %v1066 = vshrl.u32 %v853, 16
      %v1068 = vrot.slane %v1066, 7
      %v1069 = vshll.u32 %v853, 16
      %v1071 = vor.u32 %v1068, %v1069
      %v1072 = vrot.slane %v1068, 4
      %v1074 = vshrl.u32 %v854, 16
      %v1076 = vrot.slane %v1074, 7
      %v1077 = vshll.u32 %v854, 16
      %v1079 = vor.u32 %v1076, %v1077
      %v1080 = vsel %vm390, %v1072, %v1079
      %v1081 = vrot.slane %v1076, 4
      %v1083 = vshrl.u32 %v855, 16
      %v1085 = vrot.slane %v1083, 7
      %v1086 = vshll.u32 %v855, 16
      %v1088 = vor.u32 %v1085, %v1086
      %v1089 = vrot.slane %v1085, 4
      %v1091 = vshrl.u32 %v856, 16
      %v1093 = vrot.slane %v1091, 7
      %v1094 = vshll.u32 %v856, 16
      %v1096 = vor.u32 %v1093, %v1094
      %v1097 = vsel %vm390, %v1089, %v1096
      %v1098 = vrot.slane %v1093, 4
      %v1100 = vshrl.u32 %v857, 16
      %v1102 = vrot.slane %v1100, 7
      %v1103 = vshll.u32 %v857, 16
      %v1105 = vor.u32 %v1102, %v1103
      %v1106 = vrot.slane %v1102, 4
      %v1108 = vshrl.u32 %v858, 16
      %v1110 = vrot.slane %v1108, 7
      %v1111 = vshll.u32 %v858, 16
      %v1113 = vor.u32 %v1110, %v1111
      %v1114 = vsel %vm390, %v1106, %v1113
      %v1115 = vrot.slane %v1110, 4
      %v1117 = vshrl.u32 %v859, 16
      %v1119 = vrot.slane %v1117, 7
      %v1120 = vshll.u32 %v859, 16
      %v1122 = vor.u32 %v1119, %v1120
      %v1123 = vrot.slane %v1119, 4
      %v1125 = vshrl.u32 %v860, 16
      %v1127 = vrot.slane %v1125, 7
      %v1128 = vshll.u32 %v860, 16
      %v1130 = vor.u32 %v1127, %v1128
      %v1131 = vsel %vm390, %v1123, %v1130
      %v1132 = vrot.slane %v1127, 4
      %s1181 = scalar_lea.vmem [#allocation3], 12
      %v1182 = vld [vmem:[%s1181] sm:$0xf]
      %v1183 = vsel %vm714, %v867, %v1182
      %1184 = vst [vmem:[%s1181] sm:$0xf] %v1183
      %1185 = vst.msk [vmem:[%s1181 + $0x4] sm:$0xf] %vm246, %v876
      %v1186 = vld [vmem:[%s1181 + $0x8] sm:$0x1]
      %v1187 = vsel %vm720, %v877, %v1186
      %1188 = vst [vmem:[%s1181 + $0x8] sm:$0x1] %v1187
      %v1189 = vld [vmem:[%s1181 + $0xc] sm:$0xf]
      %v1190 = vsel %vm714, %v884, %v1189
      %1191 = vst [vmem:[%s1181 + $0xc] sm:$0xf] %v1190
      %1192 = vst.msk [vmem:[%s1181 + $0x10] sm:$0xf] %vm246, %v893
      %v1193 = vld [vmem:[%s1181 + $0x14] sm:$0x1]
      %v1194 = vsel %vm720, %v894, %v1193
      %1195 = vst [vmem:[%s1181 + $0x14] sm:$0x1] %v1194
      %v1196 = vld [vmem:[%s1181 + $0x18] sm:$0xf]
      %v1197 = vsel %vm714, %v901, %v1196
      %1198 = vst [vmem:[%s1181 + $0x18] sm:$0xf] %v1197
      %1199 = vst.msk [vmem:[%s1181 + $0x1c] sm:$0xf] %vm246, %v910
      %v1200 = vld [vmem:[%s1181 + $0x20] sm:$0x1]
      %v1201 = vsel %vm720, %v911, %v1200
      %1202 = vst [vmem:[%s1181 + $0x20] sm:$0x1] %v1201
      %v1203 = vld [vmem:[%s1181 + $0x24] sm:$0xf]
      %v1204 = vsel %vm714, %v918, %v1203
      %1205 = vst [vmem:[%s1181 + $0x24] sm:$0xf] %v1204
      %1206 = vst.msk [vmem:[%s1181 + $0x28] sm:$0xf] %vm246, %v927
      %v1207 = vld [vmem:[%s1181 + $0x2c] sm:$0x1]
      %v1208 = vsel %vm720, %v928, %v1207
      %1209 = vst [vmem:[%s1181 + $0x2c] sm:$0x1] %v1208
      %v1210 = vld [vmem:[%s1181 + $0x30] sm:$0xf]
      %v1211 = vsel %vm714, %v935, %v1210
      %1212 = vst [vmem:[%s1181 + $0x30] sm:$0xf] %v1211
      %1213 = vst.msk [vmem:[%s1181 + $0x34] sm:$0xf] %vm246, %v944
      %v1214 = vld [vmem:[%s1181 + $0x38] sm:$0x1]
      %v1215 = vsel %vm720, %v945, %v1214
      %1216 = vst [vmem:[%s1181 + $0x38] sm:$0x1] %v1215
      %v1217 = vld [vmem:[%s1181 + $0x3c] sm:$0xf]
      %v1218 = vsel %vm714, %v952, %v1217
      %1219 = vst [vmem:[%s1181 + $0x3c] sm:$0xf] %v1218
      %1220 = vst.msk [vmem:[%s1181 + $0x40] sm:$0xf] %vm246, %v961
      %v1221 = vld [vmem:[%s1181 + $0x44] sm:$0x1]
      %v1222 = vsel %vm720, %v962, %v1221
      %1223 = vst [vmem:[%s1181 + $0x44] sm:$0x1] %v1222
      %v1224 = vld [vmem:[%s1181 + $0x48] sm:$0xf]
      %v1225 = vsel %vm714, %v969, %v1224
      %1226 = vst [vmem:[%s1181 + $0x48] sm:$0xf] %v1225
      %1227 = vst.msk [vmem:[%s1181 + $0x4c] sm:$0xf] %vm246, %v978
      %v1228 = vld [vmem:[%s1181 + $0x50] sm:$0x1]
      %v1229 = vsel %vm720, %v979, %v1228
      %1230 = vst [vmem:[%s1181 + $0x50] sm:$0x1] %v1229
      %v1231 = vld [vmem:[%s1181 + $0x54] sm:$0xf]
      %v1232 = vsel %vm714, %v986, %v1231
      %1233 = vst [vmem:[%s1181 + $0x54] sm:$0xf] %v1232
      %1234 = vst.msk [vmem:[%s1181 + $0x58] sm:$0xf] %vm246, %v995
      %v1235 = vld [vmem:[%s1181 + $0x5c] sm:$0x1]
      %v1236 = vsel %vm720, %v996, %v1235
      %1237 = vst [vmem:[%s1181 + $0x5c] sm:$0x1] %v1236
      %v1238 = vld [vmem:[%s1181 + $0x60] sm:$0xf]
      %v1239 = vsel %vm714, %v1003, %v1238
      %1240 = vst [vmem:[%s1181 + $0x60] sm:$0xf] %v1239
      %1241 = vst.msk [vmem:[%s1181 + $0x64] sm:$0xf] %vm246, %v1012
      %v1242 = vld [vmem:[%s1181 + $0x68] sm:$0x1]
      %v1243 = vsel %vm720, %v1013, %v1242
      %1244 = vst [vmem:[%s1181 + $0x68] sm:$0x1] %v1243
      %v1245 = vld [vmem:[%s1181 + $0x6c] sm:$0xf]
      %v1246 = vsel %vm714, %v1020, %v1245
      %1247 = vst [vmem:[%s1181 + $0x6c] sm:$0xf] %v1246
      %1248 = vst.msk [vmem:[%s1181 + $0x70] sm:$0xf] %vm246, %v1029
      %v1249 = vld [vmem:[%s1181 + $0x74] sm:$0x1]
      %v1250 = vsel %vm720, %v1030, %v1249
      %1251 = vst [vmem:[%s1181 + $0x74] sm:$0x1] %v1250
      %v1252 = vld [vmem:[%s1181 + $0x78] sm:$0xf]
      %v1253 = vsel %vm714, %v1037, %v1252
      %1254 = vst [vmem:[%s1181 + $0x78] sm:$0xf] %v1253
      %1255 = vst.msk [vmem:[%s1181 + $0x7c] sm:$0xf] %vm246, %v1046
      %v1256 = vld [vmem:[%s1181 + $0x80] sm:$0x1]
      %v1257 = vsel %vm720, %v1047, %v1256
      %1258 = vst [vmem:[%s1181 + $0x80] sm:$0x1] %v1257
      %v1259 = vld [vmem:[%s1181 + $0x84] sm:$0xf]
      %v1260 = vsel %vm714, %v1054, %v1259
      %1261 = vst [vmem:[%s1181 + $0x84] sm:$0xf] %v1260
      %1262 = vst.msk [vmem:[%s1181 + $0x88] sm:$0xf] %vm246, %v1063
      %v1263 = vld [vmem:[%s1181 + $0x8c] sm:$0x1]
      %v1264 = vsel %vm720, %v1064, %v1263
      %1265 = vst [vmem:[%s1181 + $0x8c] sm:$0x1] %v1264
      %v1266 = vld [vmem:[%s1181 + $0x90] sm:$0xf]
      %v1267 = vsel %vm714, %v1071, %v1266
      %1268 = vst [vmem:[%s1181 + $0x90] sm:$0xf] %v1267
      %1269 = vst.msk [vmem:[%s1181 + $0x94] sm:$0xf] %vm246, %v1080
      %v1270 = vld [vmem:[%s1181 + $0x98] sm:$0x1]
      %v1271 = vsel %vm720, %v1081, %v1270
      %1272 = vst [vmem:[%s1181 + $0x98] sm:$0x1] %v1271
      %v1273 = vld [vmem:[%s1181 + $0x9c] sm:$0xf]
      %v1274 = vsel %vm714, %v1088, %v1273
      %1275 = vst [vmem:[%s1181 + $0x9c] sm:$0xf] %v1274
      %1276 = vst.msk [vmem:[%s1181 + $0xa0] sm:$0xf] %vm246, %v1097
      %v1277 = vld [vmem:[%s1181 + $0xa4] sm:$0x1]
      %v1278 = vsel %vm720, %v1098, %v1277
      %1279 = vst [vmem:[%s1181 + $0xa4] sm:$0x1] %v1278
      %v1280 = vld [vmem:[%s1181 + $0xa8] sm:$0xf]
      %v1281 = vsel %vm714, %v1105, %v1280
      %1282 = vst [vmem:[%s1181 + $0xa8] sm:$0xf] %v1281
      %1283 = vst.msk [vmem:[%s1181 + $0xac] sm:$0xf] %vm246, %v1114
      %v1284 = vld [vmem:[%s1181 + $0xb0] sm:$0x1]
      %v1285 = vsel %vm720, %v1115, %v1284
      %1286 = vst [vmem:[%s1181 + $0xb0] sm:$0x1] %v1285
      %v1287 = vld [vmem:[%s1181 + $0xb4] sm:$0xf]
      %v1288 = vsel %vm714, %v1122, %v1287
      %1289 = vst [vmem:[%s1181 + $0xb4] sm:$0xf] %v1288
      %1290 = vst.msk [vmem:[%s1181 + $0xb8] sm:$0xf] %vm246, %v1131
      %v1291 = vld [vmem:[%s1181 + $0xbc] sm:$0x1]
      %v1292 = vsel %vm720, %v1132, %v1291
      %1293 = vst [vmem:[%s1181 + $0xbc] sm:$0x1] %v1292
      %v1294 = vld [vmem:[#allocation2] sm:$0xf]
      %v1295 = vld [vmem:[#allocation2 + $0x4] sm:$0xf]
      %v1296 = vld [vmem:[#allocation2 + $0xc] sm:$0xf]
      %v1297 = vld [vmem:[#allocation2 + $0x10] sm:$0xf]
      %v1298 = vld [vmem:[#allocation2 + $0x18] sm:$0xf]
      %v1299 = vld [vmem:[#allocation2 + $0x1c] sm:$0xf]
      %v1300 = vld [vmem:[#allocation2 + $0x24] sm:$0xf]
      %v1301 = vld [vmem:[#allocation2 + $0x28] sm:$0xf]
      %v1302 = vld [vmem:[#allocation2 + $0x30] sm:$0xf]
      %v1303 = vld [vmem:[#allocation2 + $0x34] sm:$0xf]
      %v1304 = vld [vmem:[#allocation2 + $0x3c] sm:$0xf]
      %v1305 = vld [vmem:[#allocation2 + $0x40] sm:$0xf]
      %v1306 = vld [vmem:[#allocation2 + $0x48] sm:$0xf]
      %v1307 = vld [vmem:[#allocation2 + $0x4c] sm:$0xf]
      %v1308 = vld [vmem:[#allocation2 + $0x54] sm:$0xf]
      %v1309 = vld [vmem:[#allocation2 + $0x58] sm:$0xf]
      %v1310 = vld [vmem:[#allocation2 + $0x60] sm:$0xf]
      %v1311 = vld [vmem:[#allocation2 + $0x64] sm:$0xf]
      %v1312 = vld [vmem:[#allocation2 + $0x6c] sm:$0xf]
      %v1313 = vld [vmem:[#allocation2 + $0x70] sm:$0xf]
      %v1314 = vld [vmem:[#allocation2 + $0x78] sm:$0xf]
      %v1315 = vld [vmem:[#allocation2 + $0x7c] sm:$0xf]
      %v1316 = vld [vmem:[#allocation2 + $0x84] sm:$0xf]
      %v1317 = vld [vmem:[#allocation2 + $0x88] sm:$0xf]
      %v1318 = vld [vmem:[#allocation2 + $0x90] sm:$0xf]
      %v1319 = vld [vmem:[#allocation2 + $0x94] sm:$0xf]
      %v1320 = vld [vmem:[#allocation2 + $0x9c] sm:$0xf]
      %v1321 = vld [vmem:[#allocation2 + $0xa0] sm:$0xf]
      %v1322 = vld [vmem:[#allocation2 + $0xa8] sm:$0xf]
      %v1323 = vld [vmem:[#allocation2 + $0xac] sm:$0xf]
      %v1324 = vld [vmem:[#allocation2 + $0xb4] sm:$0xf]
      %v1325 = vld [vmem:[#allocation2 + $0xb8] sm:$0xf]
      %v1358 = vunpack.c.l.b16 %v1294
      %v1359 = vunpack.c.l.b16 %v1295
      %v1360 = vunpack.c.l.b16 %v1296
      %v1361 = vunpack.c.l.b16 %v1297
      %v1362 = vunpack.c.l.b16 %v1298
      %v1363 = vunpack.c.l.b16 %v1299
      %v1364 = vunpack.c.l.b16 %v1300
      %v1365 = vunpack.c.l.b16 %v1301
      %v1366 = vunpack.c.l.b16 %v1302
      %v1367 = vunpack.c.l.b16 %v1303
      %v1368 = vunpack.c.l.b16 %v1304
      %v1369 = vunpack.c.l.b16 %v1305
      %v1370 = vunpack.c.l.b16 %v1306
      %v1371 = vunpack.c.l.b16 %v1307
      %v1372 = vunpack.c.l.b16 %v1308
      %v1373 = vunpack.c.l.b16 %v1309
      %v1374 = vunpack.c.l.b16 %v1310
      %v1375 = vunpack.c.l.b16 %v1311
      %v1376 = vunpack.c.l.b16 %v1312
      %v1377 = vunpack.c.l.b16 %v1313
      %v1378 = vunpack.c.l.b16 %v1314
      %v1379 = vunpack.c.l.b16 %v1315
      %v1380 = vunpack.c.l.b16 %v1316
      %v1381 = vunpack.c.l.b16 %v1317
      %v1382 = vunpack.c.l.b16 %v1318
      %v1383 = vunpack.c.l.b16 %v1319
      %v1384 = vunpack.c.l.b16 %v1320
      %v1385 = vunpack.c.l.b16 %v1321
      %v1386 = vunpack.c.l.b16 %v1322
      %v1387 = vunpack.c.l.b16 %v1323
      %v1388 = vunpack.c.l.b16 %v1324
      %v1389 = vunpack.c.l.b16 %v1325
      %v1390 = vpack.c.b16 %v1359, %v1358
      %v1391 = vpack.c.b16 %v1361, %v1360
      %v1392 = vpack.c.b16 %v1363, %v1362
      %v1393 = vpack.c.b16 %v1365, %v1364
      %v1394 = vpack.c.b16 %v1367, %v1366
      %v1395 = vpack.c.b16 %v1369, %v1368
      %v1396 = vpack.c.b16 %v1371, %v1370
      %v1397 = vpack.c.b16 %v1373, %v1372
      %v1398 = vpack.c.b16 %v1375, %v1374
      %v1399 = vpack.c.b16 %v1377, %v1376
      %v1400 = vpack.c.b16 %v1379, %v1378
      %v1401 = vpack.c.b16 %v1381, %v1380
      %v1402 = vpack.c.b16 %v1383, %v1382
      %v1403 = vpack.c.b16 %v1385, %v1384
      %v1404 = vpack.c.b16 %v1387, %v1386
      %v1405 = vpack.c.b16 %v1389, %v1388
      %vm1422 = vcmask 64512
      %1423 = vst.msk [vmem:[#allocation4] sm:$0xff] %vm1422, %v1390
      %1424 = vst.msk [vmem:[#allocation4 + $0x10] sm:$0xff] %vm1422, %v1391
      %1425 = vst.msk [vmem:[#allocation4 + $0x20] sm:$0xff] %vm1422, %v1392
      %1426 = vst.msk [vmem:[#allocation4 + $0x30] sm:$0xff] %vm1422, %v1393
      %1427 = vst.msk [vmem:[#allocation4 + $0x40] sm:$0xff] %vm1422, %v1394
      %1428 = vst.msk [vmem:[#allocation4 + $0x50] sm:$0xff] %vm1422, %v1395
      %1429 = vst.msk [vmem:[#allocation4 + $0x60] sm:$0xff] %vm1422, %v1396
      %1430 = vst.msk [vmem:[#allocation4 + $0x70] sm:$0xff] %vm1422, %v1397
      %1431 = vst.msk [vmem:[#allocation4 + $0x80] sm:$0xff] %vm1422, %v1398
      %1432 = vst.msk [vmem:[#allocation4 + $0x90] sm:$0xff] %vm1422, %v1399
      %1433 = vst.msk [vmem:[#allocation4 + $0xa0] sm:$0xff] %vm1422, %v1400
      %1434 = vst.msk [vmem:[#allocation4 + $0xb0] sm:$0xff] %vm1422, %v1401
      %1435 = vst.msk [vmem:[#allocation4 + $0xc0] sm:$0xff] %vm1422, %v1402
      %1436 = vst.msk [vmem:[#allocation4 + $0xd0] sm:$0xff] %vm1422, %v1403
      %1437 = vst.msk [vmem:[#allocation4 + $0xe0] sm:$0xff] %vm1422, %v1404
      %1438 = vst.msk [vmem:[#allocation4 + $0xf0] sm:$0xff] %vm1422, %v1405
      %v1439 = vld [vmem:[#allocation2] sm:$0xf]
      %v1440 = vld [vmem:[#allocation2 + $0x4] sm:$0xf]
      %v1441 = vld [vmem:[#allocation2 + $0x8] sm:$0x1]
      %v1442 = vld [vmem:[#allocation2 + $0xc] sm:$0xf]
      %v1443 = vld [vmem:[#allocation2 + $0x10] sm:$0xf]
      %v1444 = vld [vmem:[#allocation2 + $0x14] sm:$0x1]
      %v1445 = vld [vmem:[#allocation2 + $0x18] sm:$0xf]
      %v1446 = vld [vmem:[#allocation2 + $0x1c] sm:$0xf]
      %v1447 = vld [vmem:[#allocation2 + $0x20] sm:$0x1]
      %v1448 = vld [vmem:[#allocation2 + $0x24] sm:$0xf]
      %v1449 = vld [vmem:[#allocation2 + $0x28] sm:$0xf]
      %v1450 = vld [vmem:[#allocation2 + $0x2c] sm:$0x1]
      %v1451 = vld [vmem:[#allocation2 + $0x30] sm:$0xf]
      %v1452 = vld [vmem:[#allocation2 + $0x34] sm:$0xf]
      %v1453 = vld [vmem:[#allocation2 + $0x38] sm:$0x1]
      %v1454 = vld [vmem:[#allocation2 + $0x3c] sm:$0xf]
      %v1455 = vld [vmem:[#allocation2 + $0x40] sm:$0xf]
      %v1456 = vld [vmem:[#allocation2 + $0x44] sm:$0x1]
      %v1457 = vld [vmem:[#allocation2 + $0x48] sm:$0xf]
      %v1458 = vld [vmem:[#allocation2 + $0x4c] sm:$0xf]
      %v1459 = vld [vmem:[#allocation2 + $0x50] sm:$0x1]
      %v1460 = vld [vmem:[#allocation2 + $0x54] sm:$0xf]
      %v1461 = vld [vmem:[#allocation2 + $0x58] sm:$0xf]
      %v1462 = vld [vmem:[#allocation2 + $0x5c] sm:$0x1]
      %v1463 = vld [vmem:[#allocation2 + $0x60] sm:$0xf]
      %v1464 = vld [vmem:[#allocation2 + $0x64] sm:$0xf]
      %v1465 = vld [vmem:[#allocation2 + $0x68] sm:$0x1]
      %v1466 = vld [vmem:[#allocation2 + $0x6c] sm:$0xf]
      %v1467 = vld [vmem:[#allocation2 + $0x70] sm:$0xf]
      %v1468 = vld [vmem:[#allocation2 + $0x74] sm:$0x1]
      %v1469 = vld [vmem:[#allocation2 + $0x78] sm:$0xf]
      %v1470 = vld [vmem:[#allocation2 + $0x7c] sm:$0xf]
      %v1471 = vld [vmem:[#allocation2 + $0x80] sm:$0x1]
      %v1472 = vld [vmem:[#allocation2 + $0x84] sm:$0xf]
      %v1473 = vld [vmem:[#allocation2 + $0x88] sm:$0xf]
      %v1474 = vld [vmem:[#allocation2 + $0x8c] sm:$0x1]
      %v1475 = vld [vmem:[#allocation2 + $0x90] sm:$0xf]
      %v1476 = vld [vmem:[#allocation2 + $0x94] sm:$0xf]
      %v1477 = vld [vmem:[#allocation2 + $0x98] sm:$0x1]
      %v1478 = vld [vmem:[#allocation2 + $0x9c] sm:$0xf]
      %v1479 = vld [vmem:[#allocation2 + $0xa0] sm:$0xf]
      %v1480 = vld [vmem:[#allocation2 + $0xa4] sm:$0x1]
      %v1481 = vld [vmem:[#allocation2 + $0xa8] sm:$0xf]
      %v1482 = vld [vmem:[#allocation2 + $0xac] sm:$0xf]
      %v1483 = vld [vmem:[#allocation2 + $0xb0] sm:$0x1]
      %v1484 = vld [vmem:[#allocation2 + $0xb4] sm:$0xf]
      %v1485 = vld [vmem:[#allocation2 + $0xb8] sm:$0xf]
      %v1486 = vld [vmem:[#allocation2 + $0xbc] sm:$0x1]
      %v1535 = vunpack.c.l.b16 %v1439
      %v1536 = vunpack.c.l.b16 %v1440
      %v1537 = vunpack.c.l.b16 %v1441
      %v1538 = vunpack.c.l.b16 %v1442
      %v1539 = vunpack.c.l.b16 %v1443
      %v1540 = vunpack.c.l.b16 %v1444
      %v1541 = vunpack.c.l.b16 %v1445
      %v1542 = vunpack.c.l.b16 %v1446
      %v1543 = vunpack.c.l.b16 %v1447
      %v1544 = vunpack.c.l.b16 %v1448
      %v1545 = vunpack.c.l.b16 %v1449
      %v1546 = vunpack.c.l.b16 %v1450
      %v1547 = vunpack.c.l.b16 %v1451
      %v1548 = vunpack.c.l.b16 %v1452
      %v1549 = vunpack.c.l.b16 %v1453
      %v1550 = vunpack.c.l.b16 %v1454
      %v1551 = vunpack.c.l.b16 %v1455
      %v1552 = vunpack.c.l.b16 %v1456
      %v1553 = vunpack.c.l.b16 %v1457
      %v1554 = vunpack.c.l.b16 %v1458
      %v1555 = vunpack.c.l.b16 %v1459
      %v1556 = vunpack.c.l.b16 %v1460
      %v1557 = vunpack.c.l.b16 %v1461
      %v1558 = vunpack.c.l.b16 %v1462
      %v1559 = vunpack.c.l.b16 %v1463
      %v1560 = vunpack.c.l.b16 %v1464
      %v1561 = vunpack.c.l.b16 %v1465
      %v1562 = vunpack.c.l.b16 %v1466
      %v1563 = vunpack.c.l.b16 %v1467
      %v1564 = vunpack.c.l.b16 %v1468
      %v1565 = vunpack.c.l.b16 %v1469
      %v1566 = vunpack.c.l.b16 %v1470
      %v1567 = vunpack.c.l.b16 %v1471
      %v1568 = vunpack.c.l.b16 %v1472
      %v1569 = vunpack.c.l.b16 %v1473
      %v1570 = vunpack.c.l.b16 %v1474
      %v1571 = vunpack.c.l.b16 %v1475
      %v1572 = vunpack.c.l.b16 %v1476
      %v1573 = vunpack.c.l.b16 %v1477
      %v1574 = vunpack.c.l.b16 %v1478
      %v1575 = vunpack.c.l.b16 %v1479
      %v1576 = vunpack.c.l.b16 %v1480
      %v1577 = vunpack.c.l.b16 %v1481
      %v1578 = vunpack.c.l.b16 %v1482
      %v1579 = vunpack.c.l.b16 %v1483
      %v1580 = vunpack.c.l.b16 %v1484
      %v1581 = vunpack.c.l.b16 %v1485
      %v1582 = vunpack.c.l.b16 %v1486
      %v1583 = vpack.c.b16 %v1536, %v1535
      %v1584 = vpack.c.b16 %v1537, %v1537
      %v1585 = vpack.c.b16 %v1539, %v1538
      %v1586 = vpack.c.b16 %v1540, %v1540
      %v1587 = vpack.c.b16 %v1542, %v1541
      %v1588 = vpack.c.b16 %v1543, %v1543
      %v1589 = vpack.c.b16 %v1545, %v1544
      %v1590 = vpack.c.b16 %v1546, %v1546
      %v1591 = vpack.c.b16 %v1548, %v1547
      %v1592 = vpack.c.b16 %v1549, %v1549
      %v1593 = vpack.c.b16 %v1551, %v1550
      %v1594 = vpack.c.b16 %v1552, %v1552
      %v1595 = vpack.c.b16 %v1554, %v1553
      %v1596 = vpack.c.b16 %v1555, %v1555
      %v1597 = vpack.c.b16 %v1557, %v1556
      %v1598 = vpack.c.b16 %v1558, %v1558
      %v1599 = vpack.c.b16 %v1560, %v1559
      %v1600 = vpack.c.b16 %v1561, %v1561
      %v1601 = vpack.c.b16 %v1563, %v1562
      %v1602 = vpack.c.b16 %v1564, %v1564
      %v1603 = vpack.c.b16 %v1566, %v1565
      %v1604 = vpack.c.b16 %v1567, %v1567
      %v1605 = vpack.c.b16 %v1569, %v1568
      %v1606 = vpack.c.b16 %v1570, %v1570
      %v1607 = vpack.c.b16 %v1572, %v1571
      %v1608 = vpack.c.b16 %v1573, %v1573
      %v1609 = vpack.c.b16 %v1575, %v1574
      %v1610 = vpack.c.b16 %v1576, %v1576
      %v1611 = vpack.c.b16 %v1578, %v1577
      %v1612 = vpack.c.b16 %v1579, %v1579
      %v1613 = vpack.c.b16 %v1581, %v1580
      %v1614 = vpack.c.b16 %v1582, %v1582
      %vm1615 = vsmask.f32 7424
      %v1617 = vshrl.u32 %v1583, 16
      %v1619 = vshll.u32 %v1583, 16
      %v1621 = vrot.slane %v1619, 1
      %v1622 = vor.u32 %v1617, %v1621
      %v1624 = vshll.u32 %v1584, 16
      %v1626 = vrot.slane %v1624, 1
      %v1627 = vsel %vm1615, %v1622, %v1626
      %v1629 = vshrl.u32 %v1585, 16
      %v1631 = vshll.u32 %v1585, 16
      %v1633 = vrot.slane %v1631, 1
      %v1634 = vor.u32 %v1629, %v1633
      %v1636 = vshll.u32 %v1586, 16
      %v1638 = vrot.slane %v1636, 1
      %v1639 = vsel %vm1615, %v1634, %v1638
      %v1641 = vshrl.u32 %v1587, 16
      %v1643 = vshll.u32 %v1587, 16
      %v1645 = vrot.slane %v1643, 1
      %v1646 = vor.u32 %v1641, %v1645
      %v1648 = vshll.u32 %v1588, 16
      %v1650 = vrot.slane %v1648, 1
      %v1651 = vsel %vm1615, %v1646, %v1650
      %v1653 = vshrl.u32 %v1589, 16
      %v1655 = vshll.u32 %v1589, 16
      %v1657 = vrot.slane %v1655, 1
      %v1658 = vor.u32 %v1653, %v1657
      %v1660 = vshll.u32 %v1590, 16
      %v1662 = vrot.slane %v1660, 1
      %v1663 = vsel %vm1615, %v1658, %v1662
      %v1665 = vshrl.u32 %v1591, 16
      %v1667 = vshll.u32 %v1591, 16
      %v1669 = vrot.slane %v1667, 1
      %v1670 = vor.u32 %v1665, %v1669
      %v1672 = vshll.u32 %v1592, 16
      %v1674 = vrot.slane %v1672, 1
      %v1675 = vsel %vm1615, %v1670, %v1674
      %v1677 = vshrl.u32 %v1593, 16
      %v1679 = vshll.u32 %v1593, 16
      %v1681 = vrot.slane %v1679, 1
      %v1682 = vor.u32 %v1677, %v1681
      %v1684 = vshll.u32 %v1594, 16
      %v1686 = vrot.slane %v1684, 1
      %v1687 = vsel %vm1615, %v1682, %v1686
      %v1689 = vshrl.u32 %v1595, 16
      %v1691 = vshll.u32 %v1595, 16
      %v1693 = vrot.slane %v1691, 1
      %v1694 = vor.u32 %v1689, %v1693
      %v1696 = vshll.u32 %v1596, 16
      %v1698 = vrot.slane %v1696, 1
      %v1699 = vsel %vm1615, %v1694, %v1698
      %v1701 = vshrl.u32 %v1597, 16
      %v1703 = vshll.u32 %v1597, 16
      %v1705 = vrot.slane %v1703, 1
      %v1706 = vor.u32 %v1701, %v1705
      %v1708 = vshll.u32 %v1598, 16
      %v1710 = vrot.slane %v1708, 1
      %v1711 = vsel %vm1615, %v1706, %v1710
      %v1713 = vshrl.u32 %v1599, 16
      %v1715 = vshll.u32 %v1599, 16
      %v1717 = vrot.slane %v1715, 1
      %v1718 = vor.u32 %v1713, %v1717
      %v1720 = vshll.u32 %v1600, 16
      %v1722 = vrot.slane %v1720, 1
      %v1723 = vsel %vm1615, %v1718, %v1722
      %v1725 = vshrl.u32 %v1601, 16
      %v1727 = vshll.u32 %v1601, 16
      %v1729 = vrot.slane %v1727, 1
      %v1730 = vor.u32 %v1725, %v1729
      %v1732 = vshll.u32 %v1602, 16
      %v1734 = vrot.slane %v1732, 1
      %v1735 = vsel %vm1615, %v1730, %v1734
      %v1737 = vshrl.u32 %v1603, 16
      %v1739 = vshll.u32 %v1603, 16
      %v1741 = vrot.slane %v1739, 1
      %v1742 = vor.u32 %v1737, %v1741
      %v1744 = vshll.u32 %v1604, 16
      %v1746 = vrot.slane %v1744, 1
      %v1747 = vsel %vm1615, %v1742, %v1746
      %v1749 = vshrl.u32 %v1605, 16
      %v1751 = vshll.u32 %v1605, 16
      %v1753 = vrot.slane %v1751, 1
      %v1754 = vor.u32 %v1749, %v1753
      %v1756 = vshll.u32 %v1606, 16
      %v1758 = vrot.slane %v1756, 1
      %v1759 = vsel %vm1615, %v1754, %v1758
      %v1761 = vshrl.u32 %v1607, 16
      %v1763 = vshll.u32 %v1607, 16
      %v1765 = vrot.slane %v1763, 1
      %v1766 = vor.u32 %v1761, %v1765
      %v1768 = vshll.u32 %v1608, 16
      %v1770 = vrot.slane %v1768, 1
      %v1771 = vsel %vm1615, %v1766, %v1770
      %v1773 = vshrl.u32 %v1609, 16
      %v1775 = vshll.u32 %v1609, 16
      %v1777 = vrot.slane %v1775, 1
      %v1778 = vor.u32 %v1773, %v1777
      %v1780 = vshll.u32 %v1610, 16
      %v1782 = vrot.slane %v1780, 1
      %v1783 = vsel %vm1615, %v1778, %v1782
      %v1785 = vshrl.u32 %v1611, 16
      %v1787 = vshll.u32 %v1611, 16
      %v1789 = vrot.slane %v1787, 1
      %v1790 = vor.u32 %v1785, %v1789
      %v1792 = vshll.u32 %v1612, 16
      %v1794 = vrot.slane %v1792, 1
      %v1795 = vsel %vm1615, %v1790, %v1794
      %v1797 = vshrl.u32 %v1613, 16
      %v1799 = vshll.u32 %v1613, 16
      %v1801 = vrot.slane %v1799, 1
      %v1802 = vor.u32 %v1797, %v1801
      %v1804 = vshll.u32 %v1614, 16
      %v1806 = vrot.slane %v1804, 1
      %v1807 = vsel %vm1615, %v1802, %v1806
      %1808 = vrot.lane.b32.xlu0 %v1627, 8
      %v1809 = vpop.permute.xlu0 %1808
      %1810 = vrot.lane.b32.xlu0 %v1639, 8
      %v1811 = vpop.permute.xlu0 %1810
      %1812 = vrot.lane.b32.xlu0 %v1651, 8
      %v1813 = vpop.permute.xlu0 %1812
      %1814 = vrot.lane.b32.xlu0 %v1663, 8
      %v1815 = vpop.permute.xlu0 %1814
      %1816 = vrot.lane.b32.xlu0 %v1675, 8
      %v1817 = vpop.permute.xlu0 %1816
      %1818 = vrot.lane.b32.xlu0 %v1687, 8
      %v1819 = vpop.permute.xlu0 %1818
      %1820 = vrot.lane.b32.xlu0 %v1699, 8
      %v1821 = vpop.permute.xlu0 %1820
      %1822 = vrot.lane.b32.xlu0 %v1711, 8
      %v1823 = vpop.permute.xlu0 %1822
      %1824 = vrot.lane.b32.xlu0 %v1723, 8
      %v1825 = vpop.permute.xlu0 %1824
      %1826 = vrot.lane.b32.xlu0 %v1735, 8
      %v1827 = vpop.permute.xlu0 %1826
      %1828 = vrot.lane.b32.xlu0 %v1747, 8
      %v1829 = vpop.permute.xlu0 %1828
      %1830 = vrot.lane.b32.xlu0 %v1759, 8
      %v1831 = vpop.permute.xlu0 %1830
      %1832 = vrot.lane.b32.xlu0 %v1771, 8
      %v1833 = vpop.permute.xlu0 %1832
      %1834 = vrot.lane.b32.xlu0 %v1783, 8
      %v1835 = vpop.permute.xlu0 %1834
      %1836 = vrot.lane.b32.xlu0 %v1795, 8
      %v1837 = vpop.permute.xlu0 %1836
      %1838 = vrot.lane.b32.xlu0 %v1807, 8
      %v1839 = vpop.permute.xlu0 %1838
      %vm1856 = vcmask 130112
      %1857 = vst.msk [vmem:[#allocation4] sm:$0xff] %vm1856, %v1809
      %1858 = vst.msk [vmem:[#allocation4 + $0x10] sm:$0xff] %vm1856, %v1811
      %1859 = vst.msk [vmem:[#allocation4 + $0x20] sm:$0xff] %vm1856, %v1813
      %1860 = vst.msk [vmem:[#allocation4 + $0x30] sm:$0xff] %vm1856, %v1815
      %1861 = vst.msk [vmem:[#allocation4 + $0x40] sm:$0xff] %vm1856, %v1817
      %1862 = vst.msk [vmem:[#allocation4 + $0x50] sm:$0xff] %vm1856, %v1819
      %1863 = vst.msk [vmem:[#allocation4 + $0x60] sm:$0xff] %vm1856, %v1821
      %1864 = vst.msk [vmem:[#allocation4 + $0x70] sm:$0xff] %vm1856, %v1823
      %1865 = vst.msk [vmem:[#allocation4 + $0x80] sm:$0xff] %vm1856, %v1825
      %1866 = vst.msk [vmem:[#allocation4 + $0x90] sm:$0xff] %vm1856, %v1827
      %1867 = vst.msk [vmem:[#allocation4 + $0xa0] sm:$0xff] %vm1856, %v1829
      %1868 = vst.msk [vmem:[#allocation4 + $0xb0] sm:$0xff] %vm1856, %v1831
      %1869 = vst.msk [vmem:[#allocation4 + $0xc0] sm:$0xff] %vm1856, %v1833
      %1870 = vst.msk [vmem:[#allocation4 + $0xd0] sm:$0xff] %vm1856, %v1835
      %1871 = vst.msk [vmem:[#allocation4 + $0xe0] sm:$0xff] %vm1856, %v1837
      %1872 = vst.msk [vmem:[#allocation4 + $0xf0] sm:$0xff] %vm1856, %v1839
      %v1873 = vld [vmem:[#allocation2] sm:$0xe]
      %v1874 = vld [vmem:[#allocation2 + $0x4] sm:$0xf]
      %v1875 = vld [vmem:[#allocation2 + $0x8] sm:$0x1]
      %v1876 = vld [vmem:[#allocation2 + $0xc] sm:$0xe]
      %v1877 = vld [vmem:[#allocation2 + $0x10] sm:$0xf]
      %v1878 = vld [vmem:[#allocation2 + $0x14] sm:$0x1]
      %v1879 = vld [vmem:[#allocation2 + $0x18] sm:$0xe]
      %v1880 = vld [vmem:[#allocation2 + $0x1c] sm:$0xf]
      %v1881 = vld [vmem:[#allocation2 + $0x20] sm:$0x1]
      %v1882 = vld [vmem:[#allocation2 + $0x24] sm:$0xe]
      %v1883 = vld [vmem:[#allocation2 + $0x28] sm:$0xf]
      %v1884 = vld [vmem:[#allocation2 + $0x2c] sm:$0x1]
      %v1885 = vld [vmem:[#allocation2 + $0x30] sm:$0xe]
      %v1886 = vld [vmem:[#allocation2 + $0x34] sm:$0xf]
      %v1887 = vld [vmem:[#allocation2 + $0x38] sm:$0x1]
      %v1888 = vld [vmem:[#allocation2 + $0x3c] sm:$0xe]
      %v1889 = vld [vmem:[#allocation2 + $0x40] sm:$0xf]
      %v1890 = vld [vmem:[#allocation2 + $0x44] sm:$0x1]
      %v1891 = vld [vmem:[#allocation2 + $0x48] sm:$0xe]
      %v1892 = vld [vmem:[#allocation2 + $0x4c] sm:$0xf]
      %v1893 = vld [vmem:[#allocation2 + $0x50] sm:$0x1]
      %v1894 = vld [vmem:[#allocation2 + $0x54] sm:$0xe]
      %v1895 = vld [vmem:[#allocation2 + $0x58] sm:$0xf]
      %v1896 = vld [vmem:[#allocation2 + $0x5c] sm:$0x1]
      %v1897 = vld [vmem:[#allocation2 + $0x60] sm:$0xe]
      %v1898 = vld [vmem:[#allocation2 + $0x64] sm:$0xf]
      %v1899 = vld [vmem:[#allocation2 + $0x68] sm:$0x1]
      %v1900 = vld [vmem:[#allocation2 + $0x6c] sm:$0xe]
      %v1901 = vld [vmem:[#allocation2 + $0x70] sm:$0xf]
      %v1902 = vld [vmem:[#allocation2 + $0x74] sm:$0x1]
      %v1903 = vld [vmem:[#allocation2 + $0x78] sm:$0xe]
      %v1904 = vld [vmem:[#allocation2 + $0x7c] sm:$0xf]
      %v1905 = vld [vmem:[#allocation2 + $0x80] sm:$0x1]
      %v1906 = vld [vmem:[#allocation2 + $0x84] sm:$0xe]
      %v1907 = vld [vmem:[#allocation2 + $0x88] sm:$0xf]
      %v1908 = vld [vmem:[#allocation2 + $0x8c] sm:$0x1]
      %v1909 = vld [vmem:[#allocation2 + $0x90] sm:$0xe]
      %v1910 = vld [vmem:[#allocation2 + $0x94] sm:$0xf]
      %v1911 = vld [vmem:[#allocation2 + $0x98] sm:$0x1]
      %v1912 = vld [vmem:[#allocation2 + $0x9c] sm:$0xe]
      %v1913 = vld [vmem:[#allocation2 + $0xa0] sm:$0xf]
      %v1914 = vld [vmem:[#allocation2 + $0xa4] sm:$0x1]
      %v1915 = vld [vmem:[#allocation2 + $0xa8] sm:$0xe]
      %v1916 = vld [vmem:[#allocation2 + $0xac] sm:$0xf]
      %v1917 = vld [vmem:[#allocation2 + $0xb0] sm:$0x1]
      %v1918 = vld [vmem:[#allocation2 + $0xb4] sm:$0xe]
      %v1919 = vld [vmem:[#allocation2 + $0xb8] sm:$0xf]
      %v1920 = vld [vmem:[#allocation2 + $0xbc] sm:$0x1]
      %v1969 = vunpack.c.l.b16 %v1873
      %v1970 = vunpack.c.l.b16 %v1874
      %v1971 = vunpack.c.l.b16 %v1875
      %v1972 = vunpack.c.l.b16 %v1876
      %v1973 = vunpack.c.l.b16 %v1877
      %v1974 = vunpack.c.l.b16 %v1878
      %v1975 = vunpack.c.l.b16 %v1879
      %v1976 = vunpack.c.l.b16 %v1880
      %v1977 = vunpack.c.l.b16 %v1881
      %v1978 = vunpack.c.l.b16 %v1882
      %v1979 = vunpack.c.l.b16 %v1883
      %v1980 = vunpack.c.l.b16 %v1884
      %v1981 = vunpack.c.l.b16 %v1885
      %v1982 = vunpack.c.l.b16 %v1886
      %v1983 = vunpack.c.l.b16 %v1887
      %v1984 = vunpack.c.l.b16 %v1888
      %v1985 = vunpack.c.l.b16 %v1889
      %v1986 = vunpack.c.l.b16 %v1890
      %v1987 = vunpack.c.l.b16 %v1891
      %v1988 = vunpack.c.l.b16 %v1892
      %v1989 = vunpack.c.l.b16 %v1893
      %v1990 = vunpack.c.l.b16 %v1894
      %v1991 = vunpack.c.l.b16 %v1895
      %v1992 = vunpack.c.l.b16 %v1896
      %v1993 = vunpack.c.l.b16 %v1897
      %v1994 = vunpack.c.l.b16 %v1898
      %v1995 = vunpack.c.l.b16 %v1899
      %v1996 = vunpack.c.l.b16 %v1900
      %v1997 = vunpack.c.l.b16 %v1901
      %v1998 = vunpack.c.l.b16 %v1902
      %v1999 = vunpack.c.l.b16 %v1903
      %v2000 = vunpack.c.l.b16 %v1904
      %v2001 = vunpack.c.l.b16 %v1905
      %v2002 = vunpack.c.l.b16 %v1906
      %v2003 = vunpack.c.l.b16 %v1907
      %v2004 = vunpack.c.l.b16 %v1908
      %v2005 = vunpack.c.l.b16 %v1909
      %v2006 = vunpack.c.l.b16 %v1910
      %v2007 = vunpack.c.l.b16 %v1911
      %v2008 = vunpack.c.l.b16 %v1912
      %v2009 = vunpack.c.l.b16 %v1913
      %v2010 = vunpack.c.l.b16 %v1914
      %v2011 = vunpack.c.l.b16 %v1915
      %v2012 = vunpack.c.l.b16 %v1916
      %v2013 = vunpack.c.l.b16 %v1917
      %v2014 = vunpack.c.l.b16 %v1918
      %v2015 = vunpack.c.l.b16 %v1919
      %v2016 = vunpack.c.l.b16 %v1920
      %v2017 = vpack.c.b16 %v1970, %v1969
      %v2018 = vpack.c.b16 %v1971, %v1971
      %v2019 = vpack.c.b16 %v1973, %v1972
      %v2020 = vpack.c.b16 %v1974, %v1974
      %v2021 = vpack.c.b16 %v1976, %v1975
      %v2022 = vpack.c.b16 %v1977, %v1977
      %v2023 = vpack.c.b16 %v1979, %v1978
      %v2024 = vpack.c.b16 %v1980, %v1980
      %v2025 = vpack.c.b16 %v1982, %v1981
      %v2026 = vpack.c.b16 %v1983, %v1983
      %v2027 = vpack.c.b16 %v1985, %v1984
      %v2028 = vpack.c.b16 %v1986, %v1986
      %v2029 = vpack.c.b16 %v1988, %v1987
      %v2030 = vpack.c.b16 %v1989, %v1989
      %v2031 = vpack.c.b16 %v1991, %v1990
      %v2032 = vpack.c.b16 %v1992, %v1992
      %v2033 = vpack.c.b16 %v1994, %v1993
      %v2034 = vpack.c.b16 %v1995, %v1995
      %v2035 = vpack.c.b16 %v1997, %v1996
      %v2036 = vpack.c.b16 %v1998, %v1998
      %v2037 = vpack.c.b16 %v2000, %v1999
      %v2038 = vpack.c.b16 %v2001, %v2001
      %v2039 = vpack.c.b16 %v2003, %v2002
      %v2040 = vpack.c.b16 %v2004, %v2004
      %v2041 = vpack.c.b16 %v2006, %v2005
      %v2042 = vpack.c.b16 %v2007, %v2007
      %v2043 = vpack.c.b16 %v2009, %v2008
      %v2044 = vpack.c.b16 %v2010, %v2010
      %v2045 = vpack.c.b16 %v2012, %v2011
      %v2046 = vpack.c.b16 %v2013, %v2013
      %v2047 = vpack.c.b16 %v2015, %v2014
      %v2048 = vpack.c.b16 %v2016, %v2016
      %vm2049 = vcmask 1046528
      %v2050 = vrot.slane %v2017, 1
      %v2051 = vrot.slane %v2018, 1
      %v2052 = vsel %vm2049, %v2050, %v2051
      %v2053 = vrot.slane %v2019, 1
      %v2054 = vrot.slane %v2020, 1
      %v2055 = vsel %vm2049, %v2053, %v2054
      %v2056 = vrot.slane %v2021, 1
      %v2057 = vrot.slane %v2022, 1
      %v2058 = vsel %vm2049, %v2056, %v2057
      %v2059 = vrot.slane %v2023, 1
      %v2060 = vrot.slane %v2024, 1
      %v2061 = vsel %vm2049, %v2059, %v2060
      %v2062 = vrot.slane %v2025, 1
      %v2063 = vrot.slane %v2026, 1
      %v2064 = vsel %vm2049, %v2062, %v2063
      %v2065 = vrot.slane %v2027, 1
      %v2066 = vrot.slane %v2028, 1
      %v2067 = vsel %vm2049, %v2065, %v2066
      %v2068 = vrot.slane %v2029, 1
      %v2069 = vrot.slane %v2030, 1
      %v2070 = vsel %vm2049, %v2068, %v2069
      %v2071 = vrot.slane %v2031, 1
      %v2072 = vrot.slane %v2032, 1
      %v2073 = vsel %vm2049, %v2071, %v2072
      %v2074 = vrot.slane %v2033, 1
      %v2075 = vrot.slane %v2034, 1
      %v2076 = vsel %vm2049, %v2074, %v2075
      %v2077 = vrot.slane %v2035, 1
      %v2078 = vrot.slane %v2036, 1
      %v2079 = vsel %vm2049, %v2077, %v2078
      %v2080 = vrot.slane %v2037, 1
      %v2081 = vrot.slane %v2038, 1
      %v2082 = vsel %vm2049, %v2080, %v2081
      %v2083 = vrot.slane %v2039, 1
      %v2084 = vrot.slane %v2040, 1
      %v2085 = vsel %vm2049, %v2083, %v2084
      %v2086 = vrot.slane %v2041, 1
      %v2087 = vrot.slane %v2042, 1
      %v2088 = vsel %vm2049, %v2086, %v2087
      %v2089 = vrot.slane %v2043, 1
      %v2090 = vrot.slane %v2044, 1
      %v2091 = vsel %vm2049, %v2089, %v2090
      %v2092 = vrot.slane %v2045, 1
      %v2093 = vrot.slane %v2046, 1
      %v2094 = vsel %vm2049, %v2092, %v2093
      %v2095 = vrot.slane %v2047, 1
      %v2096 = vrot.slane %v2048, 1
      %v2097 = vsel %vm2049, %v2095, %v2096
      %2098 = vrot.lane.b32.xlu0 %v2052, 16
      %v2099 = vpop.permute.xlu0 %2098
      %2100 = vrot.lane.b32.xlu0 %v2055, 16
      %v2101 = vpop.permute.xlu0 %2100
      %2102 = vrot.lane.b32.xlu0 %v2058, 16
      %v2103 = vpop.permute.xlu0 %2102
      %2104 = vrot.lane.b32.xlu0 %v2061, 16
      %v2105 = vpop.permute.xlu0 %2104
      %2106 = vrot.lane.b32.xlu0 %v2064, 16
      %v2107 = vpop.permute.xlu0 %2106
      %2108 = vrot.lane.b32.xlu0 %v2067, 16
      %v2109 = vpop.permute.xlu0 %2108
      %2110 = vrot.lane.b32.xlu0 %v2070, 16
      %v2111 = vpop.permute.xlu0 %2110
      %2112 = vrot.lane.b32.xlu0 %v2073, 16
      %v2113 = vpop.permute.xlu0 %2112
      %2114 = vrot.lane.b32.xlu0 %v2076, 16
      %v2115 = vpop.permute.xlu0 %2114
      %2116 = vrot.lane.b32.xlu0 %v2079, 16
      %v2117 = vpop.permute.xlu0 %2116
      %2118 = vrot.lane.b32.xlu0 %v2082, 16
      %v2119 = vpop.permute.xlu0 %2118
      %2120 = vrot.lane.b32.xlu0 %v2085, 16
      %v2121 = vpop.permute.xlu0 %2120
      %2122 = vrot.lane.b32.xlu0 %v2088, 16
      %v2123 = vpop.permute.xlu0 %2122
      %2124 = vrot.lane.b32.xlu0 %v2091, 16
      %v2125 = vpop.permute.xlu0 %2124
      %2126 = vrot.lane.b32.xlu0 %v2094, 16
      %v2127 = vpop.permute.xlu0 %2126
      %2128 = vrot.lane.b32.xlu0 %v2097, 16
      %v2129 = vpop.permute.xlu0 %2128
      %vm2146 = vcmask 195712
      %2147 = vst.msk [vmem:[#allocation4] sm:$0xff] %vm2146, %v2099
      %2148 = vst.msk [vmem:[#allocation4 + $0x10] sm:$0xff] %vm2146, %v2101
      %2149 = vst.msk [vmem:[#allocation4 + $0x20] sm:$0xff] %vm2146, %v2103
      %2150 = vst.msk [vmem:[#allocation4 + $0x30] sm:$0xff] %vm2146, %v2105
      %2151 = vst.msk [vmem:[#allocation4 + $0x40] sm:$0xff] %vm2146, %v2107
      %2152 = vst.msk [vmem:[#allocation4 + $0x50] sm:$0xff] %vm2146, %v2109
      %2153 = vst.msk [vmem:[#allocation4 + $0x60] sm:$0xff] %vm2146, %v2111
      %2154 = vst.msk [vmem:[#allocation4 + $0x70] sm:$0xff] %vm2146, %v2113
      %2155 = vst.msk [vmem:[#allocation4 + $0x80] sm:$0xff] %vm2146, %v2115
      %2156 = vst.msk [vmem:[#allocation4 + $0x90] sm:$0xff] %vm2146, %v2117
      %2157 = vst.msk [vmem:[#allocation4 + $0xa0] sm:$0xff] %vm2146, %v2119
      %2158 = vst.msk [vmem:[#allocation4 + $0xb0] sm:$0xff] %vm2146, %v2121
      %2159 = vst.msk [vmem:[#allocation4 + $0xc0] sm:$0xff] %vm2146, %v2123
      %2160 = vst.msk [vmem:[#allocation4 + $0xd0] sm:$0xff] %vm2146, %v2125
      %2161 = vst.msk [vmem:[#allocation4 + $0xe0] sm:$0xff] %vm2146, %v2127
      %2162 = vst.msk [vmem:[#allocation4 + $0xf0] sm:$0xff] %vm2146, %v2129
      %v2163 = vld [vmem:[%s711] sm:$0xf]
      %v2164 = vld [vmem:[%s711 + $0x4] sm:$0xf]
      %v2165 = vld [vmem:[%s711 + $0xc] sm:$0xf]
      %v2166 = vld [vmem:[%s711 + $0x10] sm:$0xf]
      %v2167 = vld [vmem:[%s711 + $0x18] sm:$0xf]
      %v2168 = vld [vmem:[%s711 + $0x1c] sm:$0xf]
      %v2169 = vld [vmem:[%s711 + $0x24] sm:$0xf]
      %v2170 = vld [vmem:[%s711 + $0x28] sm:$0xf]
      %v2171 = vld [vmem:[%s711 + $0x30] sm:$0xf]
      %v2172 = vld [vmem:[%s711 + $0x34] sm:$0xf]
      %v2173 = vld [vmem:[%s711 + $0x3c] sm:$0xf]
      %v2174 = vld [vmem:[%s711 + $0x40] sm:$0xf]
      %v2175 = vld [vmem:[%s711 + $0x48] sm:$0xf]
      %v2176 = vld [vmem:[%s711 + $0x4c] sm:$0xf]
      %v2177 = vld [vmem:[%s711 + $0x54] sm:$0xf]
      %v2178 = vld [vmem:[%s711 + $0x58] sm:$0xf]
      %v2179 = vld [vmem:[%s711 + $0x60] sm:$0xf]
      %v2180 = vld [vmem:[%s711 + $0x64] sm:$0xf]
      %v2181 = vld [vmem:[%s711 + $0x6c] sm:$0xf]
      %v2182 = vld [vmem:[%s711 + $0x70] sm:$0xf]
      %v2183 = vld [vmem:[%s711 + $0x78] sm:$0xf]
      %v2184 = vld [vmem:[%s711 + $0x7c] sm:$0xf]
      %v2185 = vld [vmem:[%s711 + $0x84] sm:$0xf]
      %v2186 = vld [vmem:[%s711 + $0x88] sm:$0xf]
      %v2187 = vld [vmem:[%s711 + $0x90] sm:$0xf]
      %v2188 = vld [vmem:[%s711 + $0x94] sm:$0xf]
      %v2189 = vld [vmem:[%s711 + $0x9c] sm:$0xf]
      %v2190 = vld [vmem:[%s711 + $0xa0] sm:$0xf]
      %v2191 = vld [vmem:[%s711 + $0xa8] sm:$0xf]
      %v2192 = vld [vmem:[%s711 + $0xac] sm:$0xf]
      %v2193 = vld [vmem:[%s711 + $0xb4] sm:$0xf]
      %v2194 = vld [vmem:[%s711 + $0xb8] sm:$0xf]
      %v2227 = vunpack.c.l.b16 %v2163
      %v2228 = vunpack.c.l.b16 %v2164
      %v2229 = vunpack.c.l.b16 %v2165
      %v2230 = vunpack.c.l.b16 %v2166
      %v2231 = vunpack.c.l.b16 %v2167
      %v2232 = vunpack.c.l.b16 %v2168
      %v2233 = vunpack.c.l.b16 %v2169
      %v2234 = vunpack.c.l.b16 %v2170
      %v2235 = vunpack.c.l.b16 %v2171
      %v2236 = vunpack.c.l.b16 %v2172
      %v2237 = vunpack.c.l.b16 %v2173
      %v2238 = vunpack.c.l.b16 %v2174
      %v2239 = vunpack.c.l.b16 %v2175
      %v2240 = vunpack.c.l.b16 %v2176
      %v2241 = vunpack.c.l.b16 %v2177
      %v2242 = vunpack.c.l.b16 %v2178
      %v2243 = vunpack.c.l.b16 %v2179
      %v2244 = vunpack.c.l.b16 %v2180
      %v2245 = vunpack.c.l.b16 %v2181
      %v2246 = vunpack.c.l.b16 %v2182
      %v2247 = vunpack.c.l.b16 %v2183
      %v2248 = vunpack.c.l.b16 %v2184
      %v2249 = vunpack.c.l.b16 %v2185
      %v2250 = vunpack.c.l.b16 %v2186
      %v2251 = vunpack.c.l.b16 %v2187
      %v2252 = vunpack.c.l.b16 %v2188
      %v2253 = vunpack.c.l.b16 %v2189
      %v2254 = vunpack.c.l.b16 %v2190
      %v2255 = vunpack.c.l.b16 %v2191
      %v2256 = vunpack.c.l.b16 %v2192
      %v2257 = vunpack.c.l.b16 %v2193
      %v2258 = vunpack.c.l.b16 %v2194
      %v2259 = vpack.c.b16 %v2228, %v2227
      %v2260 = vpack.c.b16 %v2230, %v2229
      %v2261 = vpack.c.b16 %v2232, %v2231
      %v2262 = vpack.c.b16 %v2234, %v2233
      %v2263 = vpack.c.b16 %v2236, %v2235
      %v2264 = vpack.c.b16 %v2238, %v2237
      %v2265 = vpack.c.b16 %v2240, %v2239
      %v2266 = vpack.c.b16 %v2242, %v2241
      %v2267 = vpack.c.b16 %v2244, %v2243
      %v2268 = vpack.c.b16 %v2246, %v2245
      %v2269 = vpack.c.b16 %v2248, %v2247
      %v2270 = vpack.c.b16 %v2250, %v2249
      %v2271 = vpack.c.b16 %v2252, %v2251
      %v2272 = vpack.c.b16 %v2254, %v2253
      %v2273 = vpack.c.b16 %v2256, %v2255
      %v2274 = vpack.c.b16 %v2258, %v2257
      %2275 = vrot.lane.b32.xlu0 %v2259, 24
      %v2276 = vpop.permute.xlu0 %2275
      %2277 = vrot.lane.b32.xlu0 %v2260, 24
      %v2278 = vpop.permute.xlu0 %2277
      %2279 = vrot.lane.b32.xlu0 %v2261, 24
      %v2280 = vpop.permute.xlu0 %2279
      %2281 = vrot.lane.b32.xlu0 %v2262, 24
      %v2282 = vpop.permute.xlu0 %2281
      %2283 = vrot.lane.b32.xlu0 %v2263, 24
      %v2284 = vpop.permute.xlu0 %2283
      %2285 = vrot.lane.b32.xlu0 %v2264, 24
      %v2286 = vpop.permute.xlu0 %2285
      %2287 = vrot.lane.b32.xlu0 %v2265, 24
      %v2288 = vpop.permute.xlu0 %2287
      %2289 = vrot.lane.b32.xlu0 %v2266, 24
      %v2290 = vpop.permute.xlu0 %2289
      %2291 = vrot.lane.b32.xlu0 %v2267, 24
      %v2292 = vpop.permute.xlu0 %2291
      %2293 = vrot.lane.b32.xlu0 %v2268, 24
      %v2294 = vpop.permute.xlu0 %2293
      %2295 = vrot.lane.b32.xlu0 %v2269, 24
      %v2296 = vpop.permute.xlu0 %2295
      %2297 = vrot.lane.b32.xlu0 %v2270, 24
      %v2298 = vpop.permute.xlu0 %2297
      %2299 = vrot.lane.b32.xlu0 %v2271, 24
      %v2300 = vpop.permute.xlu0 %2299
      %2301 = vrot.lane.b32.xlu0 %v2272, 24
      %v2302 = vpop.permute.xlu0 %2301
      %2303 = vrot.lane.b32.xlu0 %v2273, 24
      %v2304 = vpop.permute.xlu0 %2303
      %2305 = vrot.lane.b32.xlu0 %v2274, 24
      %v2306 = vpop.permute.xlu0 %2305
      %vm2323 = vcmask 261312
      %2324 = vst.msk [vmem:[#allocation4] sm:$0xff] %vm2323, %v2276
      %2325 = vst.msk [vmem:[#allocation4 + $0x10] sm:$0xff] %vm2323, %v2278
      %2326 = vst.msk [vmem:[#allocation4 + $0x20] sm:$0xff] %vm2323, %v2280
      %2327 = vst.msk [vmem:[#allocation4 + $0x30] sm:$0xff] %vm2323, %v2282
      %2328 = vst.msk [vmem:[#allocation4 + $0x40] sm:$0xff] %vm2323, %v2284
      %2329 = vst.msk [vmem:[#allocation4 + $0x50] sm:$0xff] %vm2323, %v2286
      %2330 = vst.msk [vmem:[#allocation4 + $0x60] sm:$0xff] %vm2323, %v2288
      %2331 = vst.msk [vmem:[#allocation4 + $0x70] sm:$0xff] %vm2323, %v2290
      %2332 = vst.msk [vmem:[#allocation4 + $0x80] sm:$0xff] %vm2323, %v2292
      %2333 = vst.msk [vmem:[#allocation4 + $0x90] sm:$0xff] %vm2323, %v2294
      %2334 = vst.msk [vmem:[#allocation4 + $0xa0] sm:$0xff] %vm2323, %v2296
      %2335 = vst.msk [vmem:[#allocation4 + $0xb0] sm:$0xff] %vm2323, %v2298
      %2336 = vst.msk [vmem:[#allocation4 + $0xc0] sm:$0xff] %vm2323, %v2300
      %2337 = vst.msk [vmem:[#allocation4 + $0xd0] sm:$0xff] %vm2323, %v2302
      %2338 = vst.msk [vmem:[#allocation4 + $0xe0] sm:$0xff] %vm2323, %v2304
      %2339 = vst.msk [vmem:[#allocation4 + $0xf0] sm:$0xff] %vm2323, %v2306
      %v2340 = vld [vmem:[%s711] sm:$0xf]
      %v2341 = vld [vmem:[%s711 + $0x4] sm:$0xf]
      %v2342 = vld [vmem:[%s711 + $0x8] sm:$0x1]
      %v2343 = vld [vmem:[%s711 + $0xc] sm:$0xf]
      %v2344 = vld [vmem:[%s711 + $0x10] sm:$0xf]
      %v2345 = vld [vmem:[%s711 + $0x14] sm:$0x1]
      %v2346 = vld [vmem:[%s711 + $0x18] sm:$0xf]
      %v2347 = vld [vmem:[%s711 + $0x1c] sm:$0xf]
      %v2348 = vld [vmem:[%s711 + $0x20] sm:$0x1]
      %v2349 = vld [vmem:[%s711 + $0x24] sm:$0xf]
      %v2350 = vld [vmem:[%s711 + $0x28] sm:$0xf]
      %v2351 = vld [vmem:[%s711 + $0x2c] sm:$0x1]
      %v2352 = vld [vmem:[%s711 + $0x30] sm:$0xf]
      %v2353 = vld [vmem:[%s711 + $0x34] sm:$0xf]
      %v2354 = vld [vmem:[%s711 + $0x38] sm:$0x1]
      %v2355 = vld [vmem:[%s711 + $0x3c] sm:$0xf]
      %v2356 = vld [vmem:[%s711 + $0x40] sm:$0xf]
      %v2357 = vld [vmem:[%s711 + $0x44] sm:$0x1]
      %v2358 = vld [vmem:[%s711 + $0x48] sm:$0xf]
      %v2359 = vld [vmem:[%s711 + $0x4c] sm:$0xf]
      %v2360 = vld [vmem:[%s711 + $0x50] sm:$0x1]
      %v2361 = vld [vmem:[%s711 + $0x54] sm:$0xf]
      %v2362 = vld [vmem:[%s711 + $0x58] sm:$0xf]
      %v2363 = vld [vmem:[%s711 + $0x5c] sm:$0x1]
      %v2364 = vld [vmem:[%s711 + $0x60] sm:$0xf]
      %v2365 = vld [vmem:[%s711 + $0x64] sm:$0xf]
      %v2366 = vld [vmem:[%s711 + $0x68] sm:$0x1]
      %v2367 = vld [vmem:[%s711 + $0x6c] sm:$0xf]
      %v2368 = vld [vmem:[%s711 + $0x70] sm:$0xf]
      %v2369 = vld [vmem:[%s711 + $0x74] sm:$0x1]
      %v2370 = vld [vmem:[%s711 + $0x78] sm:$0xf]
      %v2371 = vld [vmem:[%s711 + $0x7c] sm:$0xf]
      %v2372 = vld [vmem:[%s711 + $0x80] sm:$0x1]
      %v2373 = vld [vmem:[%s711 + $0x84] sm:$0xf]
      %v2374 = vld [vmem:[%s711 + $0x88] sm:$0xf]
      %v2375 = vld [vmem:[%s711 + $0x8c] sm:$0x1]
      %v2376 = vld [vmem:[%s711 + $0x90] sm:$0xf]
      %v2377 = vld [vmem:[%s711 + $0x94] sm:$0xf]
      %v2378 = vld [vmem:[%s711 + $0x98] sm:$0x1]
      %v2379 = vld [vmem:[%s711 + $0x9c] sm:$0xf]
      %v2380 = vld [vmem:[%s711 + $0xa0] sm:$0xf]
      %v2381 = vld [vmem:[%s711 + $0xa4] sm:$0x1]
      %v2382 = vld [vmem:[%s711 + $0xa8] sm:$0xf]
      %v2383 = vld [vmem:[%s711 + $0xac] sm:$0xf]
      %v2384 = vld [vmem:[%s711 + $0xb0] sm:$0x1]
      %v2385 = vld [vmem:[%s711 + $0xb4] sm:$0xf]
      %v2386 = vld [vmem:[%s711 + $0xb8] sm:$0xf]
      %v2387 = vld [vmem:[%s711 + $0xbc] sm:$0x1]
      %v2436 = vunpack.c.l.b16 %v2340
      %v2437 = vunpack.c.l.b16 %v2341
      %v2438 = vunpack.c.l.b16 %v2342
      %v2439 = vunpack.c.l.b16 %v2343
      %v2440 = vunpack.c.l.b16 %v2344
      %v2441 = vunpack.c.l.b16 %v2345
      %v2442 = vunpack.c.l.b16 %v2346
      %v2443 = vunpack.c.l.b16 %v2347
      %v2444 = vunpack.c.l.b16 %v2348
      %v2445 = vunpack.c.l.b16 %v2349
      %v2446 = vunpack.c.l.b16 %v2350
      %v2447 = vunpack.c.l.b16 %v2351
      %v2448 = vunpack.c.l.b16 %v2352
      %v2449 = vunpack.c.l.b16 %v2353
      %v2450 = vunpack.c.l.b16 %v2354
      %v2451 = vunpack.c.l.b16 %v2355
      %v2452 = vunpack.c.l.b16 %v2356
      %v2453 = vunpack.c.l.b16 %v2357
      %v2454 = vunpack.c.l.b16 %v2358
      %v2455 = vunpack.c.l.b16 %v2359
      %v2456 = vunpack.c.l.b16 %v2360
      %v2457 = vunpack.c.l.b16 %v2361
      %v2458 = vunpack.c.l.b16 %v2362
      %v2459 = vunpack.c.l.b16 %v2363
      %v2460 = vunpack.c.l.b16 %v2364
      %v2461 = vunpack.c.l.b16 %v2365
      %v2462 = vunpack.c.l.b16 %v2366
      %v2463 = vunpack.c.l.b16 %v2367
      %v2464 = vunpack.c.l.b16 %v2368
      %v2465 = vunpack.c.l.b16 %v2369
      %v2466 = vunpack.c.l.b16 %v2370
      %v2467 = vunpack.c.l.b16 %v2371
      %v2468 = vunpack.c.l.b16 %v2372
      %v2469 = vunpack.c.l.b16 %v2373
      %v2470 = vunpack.c.l.b16 %v2374
      %v2471 = vunpack.c.l.b16 %v2375
      %v2472 = vunpack.c.l.b16 %v2376
      %v2473 = vunpack.c.l.b16 %v2377
      %v2474 = vunpack.c.l.b16 %v2378
      %v2475 = vunpack.c.l.b16 %v2379
      %v2476 = vunpack.c.l.b16 %v2380
      %v2477 = vunpack.c.l.b16 %v2381
      %v2478 = vunpack.c.l.b16 %v2382
      %v2479 = vunpack.c.l.b16 %v2383
      %v2480 = vunpack.c.l.b16 %v2384
      %v2481 = vunpack.c.l.b16 %v2385
      %v2482 = vunpack.c.l.b16 %v2386
      %v2483 = vunpack.c.l.b16 %v2387
      %v2484 = vpack.c.b16 %v2437, %v2436
      %v2485 = vpack.c.b16 %v2438, %v2438
      %v2486 = vpack.c.b16 %v2440, %v2439
      %v2487 = vpack.c.b16 %v2441, %v2441
      %v2488 = vpack.c.b16 %v2443, %v2442
      %v2489 = vpack.c.b16 %v2444, %v2444
      %v2490 = vpack.c.b16 %v2446, %v2445
      %v2491 = vpack.c.b16 %v2447, %v2447
      %v2492 = vpack.c.b16 %v2449, %v2448
      %v2493 = vpack.c.b16 %v2450, %v2450
      %v2494 = vpack.c.b16 %v2452, %v2451
      %v2495 = vpack.c.b16 %v2453, %v2453
      %v2496 = vpack.c.b16 %v2455, %v2454
      %v2497 = vpack.c.b16 %v2456, %v2456
      %v2498 = vpack.c.b16 %v2458, %v2457
      %v2499 = vpack.c.b16 %v2459, %v2459
      %v2500 = vpack.c.b16 %v2461, %v2460
      %v2501 = vpack.c.b16 %v2462, %v2462
      %v2502 = vpack.c.b16 %v2464, %v2463
      %v2503 = vpack.c.b16 %v2465, %v2465
      %v2504 = vpack.c.b16 %v2467, %v2466
      %v2505 = vpack.c.b16 %v2468, %v2468
      %v2506 = vpack.c.b16 %v2470, %v2469
      %v2507 = vpack.c.b16 %v2471, %v2471
      %v2508 = vpack.c.b16 %v2473, %v2472
      %v2509 = vpack.c.b16 %v2474, %v2474
      %v2510 = vpack.c.b16 %v2476, %v2475
      %v2511 = vpack.c.b16 %v2477, %v2477
      %v2512 = vpack.c.b16 %v2479, %v2478
      %v2513 = vpack.c.b16 %v2480, %v2480
      %v2514 = vpack.c.b16 %v2482, %v2481
      %v2515 = vpack.c.b16 %v2483, %v2483
      %v2517 = vshrl.u32 %v2484, 16
      %v2519 = vshll.u32 %v2484, 16
      %v2521 = vrot.slane %v2519, 1
      %v2522 = vor.u32 %v2517, %v2521
      %v2524 = vshll.u32 %v2485, 16
      %v2526 = vrot.slane %v2524, 1
      %v2527 = vsel %vm1615, %v2522, %v2526
      %v2529 = vshrl.u32 %v2486, 16
      %v2531 = vshll.u32 %v2486, 16
      %v2533 = vrot.slane %v2531, 1
      %v2534 = vor.u32 %v2529, %v2533
      %v2536 = vshll.u32 %v2487, 16
      %v2538 = vrot.slane %v2536, 1
      %v2539 = vsel %vm1615, %v2534, %v2538
      %v2541 = vshrl.u32 %v2488, 16
      %v2543 = vshll.u32 %v2488, 16
      %v2545 = vrot.slane %v2543, 1
      %v2546 = vor.u32 %v2541, %v2545
      %v2548 = vshll.u32 %v2489, 16
      %v2550 = vrot.slane %v2548, 1
      %v2551 = vsel %vm1615, %v2546, %v2550
      %v2553 = vshrl.u32 %v2490, 16
      %v2555 = vshll.u32 %v2490, 16
      %v2557 = vrot.slane %v2555, 1
      %v2558 = vor.u32 %v2553, %v2557
      %v2560 = vshll.u32 %v2491, 16
      %v2562 = vrot.slane %v2560, 1
      %v2563 = vsel %vm1615, %v2558, %v2562
      %v2565 = vshrl.u32 %v2492, 16
      %v2567 = vshll.u32 %v2492, 16
      %v2569 = vrot.slane %v2567, 1
      %v2570 = vor.u32 %v2565, %v2569
      %v2572 = vshll.u32 %v2493, 16
      %v2574 = vrot.slane %v2572, 1
      %v2575 = vsel %vm1615, %v2570, %v2574
      %v2577 = vshrl.u32 %v2494, 16
      %v2579 = vshll.u32 %v2494, 16
      %v2581 = vrot.slane %v2579, 1
      %v2582 = vor.u32 %v2577, %v2581
      %v2584 = vshll.u32 %v2495, 16
      %v2586 = vrot.slane %v2584, 1
      %v2587 = vsel %vm1615, %v2582, %v2586
      %v2589 = vshrl.u32 %v2496, 16
      %v2591 = vshll.u32 %v2496, 16
      %v2593 = vrot.slane %v2591, 1
      %v2594 = vor.u32 %v2589, %v2593
      %v2596 = vshll.u32 %v2497, 16
      %v2598 = vrot.slane %v2596, 1
      %v2599 = vsel %vm1615, %v2594, %v2598
      %v2601 = vshrl.u32 %v2498, 16
      %v2603 = vshll.u32 %v2498, 16
      %v2605 = vrot.slane %v2603, 1
      %v2606 = vor.u32 %v2601, %v2605
      %v2608 = vshll.u32 %v2499, 16
      %v2610 = vrot.slane %v2608, 1
      %v2611 = vsel %vm1615, %v2606, %v2610
      %v2613 = vshrl.u32 %v2500, 16
      %v2615 = vshll.u32 %v2500, 16
      %v2617 = vrot.slane %v2615, 1
      %v2618 = vor.u32 %v2613, %v2617
      %v2620 = vshll.u32 %v2501, 16
      %v2622 = vrot.slane %v2620, 1
      %v2623 = vsel %vm1615, %v2618, %v2622
      %v2625 = vshrl.u32 %v2502, 16
      %v2627 = vshll.u32 %v2502, 16
      %v2629 = vrot.slane %v2627, 1
      %v2630 = vor.u32 %v2625, %v2629
      %v2632 = vshll.u32 %v2503, 16
      %v2634 = vrot.slane %v2632, 1
      %v2635 = vsel %vm1615, %v2630, %v2634
      %v2637 = vshrl.u32 %v2504, 16
      %v2639 = vshll.u32 %v2504, 16
      %v2641 = vrot.slane %v2639, 1
      %v2642 = vor.u32 %v2637, %v2641
      %v2644 = vshll.u32 %v2505, 16
      %v2646 = vrot.slane %v2644, 1
      %v2647 = vsel %vm1615, %v2642, %v2646
      %v2649 = vshrl.u32 %v2506, 16
      %v2651 = vshll.u32 %v2506, 16
      %v2653 = vrot.slane %v2651, 1
      %v2654 = vor.u32 %v2649, %v2653
      %v2656 = vshll.u32 %v2507, 16
      %v2658 = vrot.slane %v2656, 1
      %v2659 = vsel %vm1615, %v2654, %v2658
      %v2661 = vshrl.u32 %v2508, 16
      %v2663 = vshll.u32 %v2508, 16
      %v2665 = vrot.slane %v2663, 1
      %v2666 = vor.u32 %v2661, %v2665
      %v2668 = vshll.u32 %v2509, 16
      %v2670 = vrot.slane %v2668, 1
      %v2671 = vsel %vm1615, %v2666, %v2670
      %v2673 = vshrl.u32 %v2510, 16
      %v2675 = vshll.u32 %v2510, 16
      %v2677 = vrot.slane %v2675, 1
      %v2678 = vor.u32 %v2673, %v2677
      %v2680 = vshll.u32 %v2511, 16
      %v2682 = vrot.slane %v2680, 1
      %v2683 = vsel %vm1615, %v2678, %v2682
      %v2685 = vshrl.u32 %v2512, 16
      %v2687 = vshll.u32 %v2512, 16
      %v2689 = vrot.slane %v2687, 1
      %v2690 = vor.u32 %v2685, %v2689
      %v2692 = vshll.u32 %v2513, 16
      %v2694 = vrot.slane %v2692, 1
      %v2695 = vsel %vm1615, %v2690, %v2694
      %v2697 = vshrl.u32 %v2514, 16
      %v2699 = vshll.u32 %v2514, 16
      %v2701 = vrot.slane %v2699, 1
      %v2702 = vor.u32 %v2697, %v2701
      %v2704 = vshll.u32 %v2515, 16
      %v2706 = vrot.slane %v2704, 1
      %v2707 = vsel %vm1615, %v2702, %v2706
      %2708 = vrot.lane.b32.xlu0 %v2527, 32
      %v2709 = vpop.permute.xlu0 %2708
      %2710 = vrot.lane.b32.xlu0 %v2539, 32
      %v2711 = vpop.permute.xlu0 %2710
      %2712 = vrot.lane.b32.xlu0 %v2551, 32
      %v2713 = vpop.permute.xlu0 %2712
      %2714 = vrot.lane.b32.xlu0 %v2563, 32
      %v2715 = vpop.permute.xlu0 %2714
      %2716 = vrot.lane.b32.xlu0 %v2575, 32
      %v2717 = vpop.permute.xlu0 %2716
      %2718 = vrot.lane.b32.xlu0 %v2587, 32
      %v2719 = vpop.permute.xlu0 %2718
      %2720 = vrot.lane.b32.xlu0 %v2599, 32
      %v2721 = vpop.permute.xlu0 %2720
      %2722 = vrot.lane.b32.xlu0 %v2611, 32
      %v2723 = vpop.permute.xlu0 %2722
      %2724 = vrot.lane.b32.xlu0 %v2623, 32
      %v2725 = vpop.permute.xlu0 %2724
      %2726 = vrot.lane.b32.xlu0 %v2635, 32
      %v2727 = vpop.permute.xlu0 %2726
      %2728 = vrot.lane.b32.xlu0 %v2647, 32
      %v2729 = vpop.permute.xlu0 %2728
      %2730 = vrot.lane.b32.xlu0 %v2659, 32
      %v2731 = vpop.permute.xlu0 %2730
      %2732 = vrot.lane.b32.xlu0 %v2671, 32
      %v2733 = vpop.permute.xlu0 %2732
      %2734 = vrot.lane.b32.xlu0 %v2683, 32
      %v2735 = vpop.permute.xlu0 %2734
      %2736 = vrot.lane.b32.xlu0 %v2695, 32
      %v2737 = vpop.permute.xlu0 %2736
      %2738 = vrot.lane.b32.xlu0 %v2707, 32
      %v2739 = vpop.permute.xlu0 %2738
      %vm2756 = vcmask 326912
      %2757 = vst.msk [vmem:[#allocation4] sm:$0xff] %vm2756, %v2709
      %2758 = vst.msk [vmem:[#allocation4 + $0x10] sm:$0xff] %vm2756, %v2711
      %2759 = vst.msk [vmem:[#allocation4 + $0x20] sm:$0xff] %vm2756, %v2713
      %2760 = vst.msk [vmem:[#allocation4 + $0x30] sm:$0xff] %vm2756, %v2715
      %2761 = vst.msk [vmem:[#allocation4 + $0x40] sm:$0xff] %vm2756, %v2717
      %2762 = vst.msk [vmem:[#allocation4 + $0x50] sm:$0xff] %vm2756, %v2719
      %2763 = vst.msk [vmem:[#allocation4 + $0x60] sm:$0xff] %vm2756, %v2721
      %2764 = vst.msk [vmem:[#allocation4 + $0x70] sm:$0xff] %vm2756, %v2723
      %2765 = vst.msk [vmem:[#allocation4 + $0x80] sm:$0xff] %vm2756, %v2725
      %2766 = vst.msk [vmem:[#allocation4 + $0x90] sm:$0xff] %vm2756, %v2727
      %2767 = vst.msk [vmem:[#allocation4 + $0xa0] sm:$0xff] %vm2756, %v2729
      %2768 = vst.msk [vmem:[#allocation4 + $0xb0] sm:$0xff] %vm2756, %v2731
      %2769 = vst.msk [vmem:[#allocation4 + $0xc0] sm:$0xff] %vm2756, %v2733
      %2770 = vst.msk [vmem:[#allocation4 + $0xd0] sm:$0xff] %vm2756, %v2735
      %2771 = vst.msk [vmem:[#allocation4 + $0xe0] sm:$0xff] %vm2756, %v2737
      %2772 = vst.msk [vmem:[#allocation4 + $0xf0] sm:$0xff] %vm2756, %v2739
      %v2773 = vld [vmem:[%s711] sm:$0xe]
      %v2774 = vld [vmem:[%s711 + $0x4] sm:$0xf]
      %v2775 = vld [vmem:[%s711 + $0x8] sm:$0x1]
      %v2776 = vld [vmem:[%s711 + $0xc] sm:$0xe]
      %v2777 = vld [vmem:[%s711 + $0x10] sm:$0xf]
      %v2778 = vld [vmem:[%s711 + $0x14] sm:$0x1]
      %v2779 = vld [vmem:[%s711 + $0x18] sm:$0xe]
      %v2780 = vld [vmem:[%s711 + $0x1c] sm:$0xf]
      %v2781 = vld [vmem:[%s711 + $0x20] sm:$0x1]
      %v2782 = vld [vmem:[%s711 + $0x24] sm:$0xe]
      %v2783 = vld [vmem:[%s711 + $0x28] sm:$0xf]
      %v2784 = vld [vmem:[%s711 + $0x2c] sm:$0x1]
      %v2785 = vld [vmem:[%s711 + $0x30] sm:$0xe]
      %v2786 = vld [vmem:[%s711 + $0x34] sm:$0xf]
      %v2787 = vld [vmem:[%s711 + $0x38] sm:$0x1]
      %v2788 = vld [vmem:[%s711 + $0x3c] sm:$0xe]
      %v2789 = vld [vmem:[%s711 + $0x40] sm:$0xf]
      %v2790 = vld [vmem:[%s711 + $0x44] sm:$0x1]
      %v2791 = vld [vmem:[%s711 + $0x48] sm:$0xe]
      %v2792 = vld [vmem:[%s711 + $0x4c] sm:$0xf]
      %v2793 = vld [vmem:[%s711 + $0x50] sm:$0x1]
      %v2794 = vld [vmem:[%s711 + $0x54] sm:$0xe]
      %v2795 = vld [vmem:[%s711 + $0x58] sm:$0xf]
      %v2796 = vld [vmem:[%s711 + $0x5c] sm:$0x1]
      %v2797 = vld [vmem:[%s711 + $0x60] sm:$0xe]
      %v2798 = vld [vmem:[%s711 + $0x64] sm:$0xf]
      %v2799 = vld [vmem:[%s711 + $0x68] sm:$0x1]
      %v2800 = vld [vmem:[%s711 + $0x6c] sm:$0xe]
      %v2801 = vld [vmem:[%s711 + $0x70] sm:$0xf]
      %v2802 = vld [vmem:[%s711 + $0x74] sm:$0x1]
      %v2803 = vld [vmem:[%s711 + $0x78] sm:$0xe]
      %v2804 = vld [vmem:[%s711 + $0x7c] sm:$0xf]
      %v2805 = vld [vmem:[%s711 + $0x80] sm:$0x1]
      %v2806 = vld [vmem:[%s711 + $0x84] sm:$0xe]
      %v2807 = vld [vmem:[%s711 + $0x88] sm:$0xf]
      %v2808 = vld [vmem:[%s711 + $0x8c] sm:$0x1]
      %v2809 = vld [vmem:[%s711 + $0x90] sm:$0xe]
      %v2810 = vld [vmem:[%s711 + $0x94] sm:$0xf]
      %v2811 = vld [vmem:[%s711 + $0x98] sm:$0x1]
      %v2812 = vld [vmem:[%s711 + $0x9c] sm:$0xe]
      %v2813 = vld [vmem:[%s711 + $0xa0] sm:$0xf]
      %v2814 = vld [vmem:[%s711 + $0xa4] sm:$0x1]
      %v2815 = vld [vmem:[%s711 + $0xa8] sm:$0xe]
      %v2816 = vld [vmem:[%s711 + $0xac] sm:$0xf]
      %v2817 = vld [vmem:[%s711 + $0xb0] sm:$0x1]
      %v2818 = vld [vmem:[%s711 + $0xb4] sm:$0xe]
      %v2819 = vld [vmem:[%s711 + $0xb8] sm:$0xf]
      %v2820 = vld [vmem:[%s711 + $0xbc] sm:$0x1]
      %v2869 = vunpack.c.l.b16 %v2773
      %v2870 = vunpack.c.l.b16 %v2774
      %v2871 = vunpack.c.l.b16 %v2775
      %v2872 = vunpack.c.l.b16 %v2776
      %v2873 = vunpack.c.l.b16 %v2777
      %v2874 = vunpack.c.l.b16 %v2778
      %v2875 = vunpack.c.l.b16 %v2779
      %v2876 = vunpack.c.l.b16 %v2780
      %v2877 = vunpack.c.l.b16 %v2781
      %v2878 = vunpack.c.l.b16 %v2782
      %v2879 = vunpack.c.l.b16 %v2783
      %v2880 = vunpack.c.l.b16 %v2784
      %v2881 = vunpack.c.l.b16 %v2785
      %v2882 = vunpack.c.l.b16 %v2786
      %v2883 = vunpack.c.l.b16 %v2787
      %v2884 = vunpack.c.l.b16 %v2788
      %v2885 = vunpack.c.l.b16 %v2789
      %v2886 = vunpack.c.l.b16 %v2790
      %v2887 = vunpack.c.l.b16 %v2791
      %v2888 = vunpack.c.l.b16 %v2792
      %v2889 = vunpack.c.l.b16 %v2793
      %v2890 = vunpack.c.l.b16 %v2794
      %v2891 = vunpack.c.l.b16 %v2795
      %v2892 = vunpack.c.l.b16 %v2796
      %v2893 = vunpack.c.l.b16 %v2797
      %v2894 = vunpack.c.l.b16 %v2798
      %v2895 = vunpack.c.l.b16 %v2799
      %v2896 = vunpack.c.l.b16 %v2800
      %v2897 = vunpack.c.l.b16 %v2801
      %v2898 = vunpack.c.l.b16 %v2802
      %v2899 = vunpack.c.l.b16 %v2803
      %v2900 = vunpack.c.l.b16 %v2804
      %v2901 = vunpack.c.l.b16 %v2805
      %v2902 = vunpack.c.l.b16 %v2806
      %v2903 = vunpack.c.l.b16 %v2807
      %v2904 = vunpack.c.l.b16 %v2808
      %v2905 = vunpack.c.l.b16 %v2809
      %v2906 = vunpack.c.l.b16 %v2810
      %v2907 = vunpack.c.l.b16 %v2811
      %v2908 = vunpack.c.l.b16 %v2812
      %v2909 = vunpack.c.l.b16 %v2813
      %v2910 = vunpack.c.l.b16 %v2814
      %v2911 = vunpack.c.l.b16 %v2815
      %v2912 = vunpack.c.l.b16 %v2816
      %v2913 = vunpack.c.l.b16 %v2817
      %v2914 = vunpack.c.l.b16 %v2818
      %v2915 = vunpack.c.l.b16 %v2819
      %v2916 = vunpack.c.l.b16 %v2820
      %v2917 = vpack.c.b16 %v2870, %v2869
      %v2918 = vpack.c.b16 %v2871, %v2871
      %v2919 = vpack.c.b16 %v2873, %v2872
      %v2920 = vpack.c.b16 %v2874, %v2874
      %v2921 = vpack.c.b16 %v2876, %v2875
      %v2922 = vpack.c.b16 %v2877, %v2877
      %v2923 = vpack.c.b16 %v2879, %v2878
      %v2924 = vpack.c.b16 %v2880, %v2880
      %v2925 = vpack.c.b16 %v2882, %v2881
      %v2926 = vpack.c.b16 %v2883, %v2883
      %v2927 = vpack.c.b16 %v2885, %v2884
      %v2928 = vpack.c.b16 %v2886, %v2886
      %v2929 = vpack.c.b16 %v2888, %v2887
      %v2930 = vpack.c.b16 %v2889, %v2889
      %v2931 = vpack.c.b16 %v2891, %v2890
      %v2932 = vpack.c.b16 %v2892, %v2892
      %v2933 = vpack.c.b16 %v2894, %v2893
      %v2934 = vpack.c.b16 %v2895, %v2895
      %v2935 = vpack.c.b16 %v2897, %v2896
      %v2936 = vpack.c.b16 %v2898, %v2898
      %v2937 = vpack.c.b16 %v2900, %v2899
      %v2938 = vpack.c.b16 %v2901, %v2901
      %v2939 = vpack.c.b16 %v2903, %v2902
      %v2940 = vpack.c.b16 %v2904, %v2904
      %v2941 = vpack.c.b16 %v2906, %v2905
      %v2942 = vpack.c.b16 %v2907, %v2907
      %v2943 = vpack.c.b16 %v2909, %v2908
      %v2944 = vpack.c.b16 %v2910, %v2910
      %v2945 = vpack.c.b16 %v2912, %v2911
      %v2946 = vpack.c.b16 %v2913, %v2913
      %v2947 = vpack.c.b16 %v2915, %v2914
      %v2948 = vpack.c.b16 %v2916, %v2916
      %v2949 = vrot.slane %v2917, 1
      %v2950 = vrot.slane %v2918, 1
      %v2951 = vsel %vm2049, %v2949, %v2950
      %v2952 = vrot.slane %v2919, 1
      %v2953 = vrot.slane %v2920, 1
      %v2954 = vsel %vm2049, %v2952, %v2953
      %v2955 = vrot.slane %v2921, 1
      %v2956 = vrot.slane %v2922, 1
      %v2957 = vsel %vm2049, %v2955, %v2956
      %v2958 = vrot.slane %v2923, 1
      %v2959 = vrot.slane %v2924, 1
      %v2960 = vsel %vm2049, %v2958, %v2959
      %v2961 = vrot.slane %v2925, 1
      %v2962 = vrot.slane %v2926, 1
      %v2963 = vsel %vm2049, %v2961, %v2962
      %v2964 = vrot.slane %v2927, 1
      %v2965 = vrot.slane %v2928, 1
      %v2966 = vsel %vm2049, %v2964, %v2965
      %v2967 = vrot.slane %v2929, 1
      %v2968 = vrot.slane %v2930, 1
      %v2969 = vsel %vm2049, %v2967, %v2968
      %v2970 = vrot.slane %v2931, 1
      %v2971 = vrot.slane %v2932, 1
      %v2972 = vsel %vm2049, %v2970, %v2971
      %v2973 = vrot.slane %v2933, 1
      %v2974 = vrot.slane %v2934, 1
      %v2975 = vsel %vm2049, %v2973, %v2974
      %v2976 = vrot.slane %v2935, 1
      %v2977 = vrot.slane %v2936, 1
      %v2978 = vsel %vm2049, %v2976, %v2977
      %v2979 = vrot.slane %v2937, 1
      %v2980 = vrot.slane %v2938, 1
      %v2981 = vsel %vm2049, %v2979, %v2980
      %v2982 = vrot.slane %v2939, 1
      %v2983 = vrot.slane %v2940, 1
      %v2984 = vsel %vm2049, %v2982, %v2983
      %v2985 = vrot.slane %v2941, 1
      %v2986 = vrot.slane %v2942, 1
      %v2987 = vsel %vm2049, %v2985, %v2986
      %v2988 = vrot.slane %v2943, 1
      %v2989 = vrot.slane %v2944, 1
      %v2990 = vsel %vm2049, %v2988, %v2989
      %v2991 = vrot.slane %v2945, 1
      %v2992 = vrot.slane %v2946, 1
      %v2993 = vsel %vm2049, %v2991, %v2992
      %v2994 = vrot.slane %v2947, 1
      %v2995 = vrot.slane %v2948, 1
      %v2996 = vsel %vm2049, %v2994, %v2995
      %2997 = vrot.lane.b32.xlu0 %v2951, 40
      %v2998 = vpop.permute.xlu0 %2997
      %2999 = vrot.lane.b32.xlu0 %v2954, 40
      %v3000 = vpop.permute.xlu0 %2999
      %3001 = vrot.lane.b32.xlu0 %v2957, 40
      %v3002 = vpop.permute.xlu0 %3001
      %3003 = vrot.lane.b32.xlu0 %v2960, 40
      %v3004 = vpop.permute.xlu0 %3003
      %3005 = vrot.lane.b32.xlu0 %v2963, 40
      %v3006 = vpop.permute.xlu0 %3005
      %3007 = vrot.lane.b32.xlu0 %v2966, 40
      %v3008 = vpop.permute.xlu0 %3007
      %3009 = vrot.lane.b32.xlu0 %v2969, 40
      %v3010 = vpop.permute.xlu0 %3009
      %3011 = vrot.lane.b32.xlu0 %v2972, 40
      %v3012 = vpop.permute.xlu0 %3011
      %3013 = vrot.lane.b32.xlu0 %v2975, 40
      %v3014 = vpop.permute.xlu0 %3013
      %3015 = vrot.lane.b32.xlu0 %v2978, 40
      %v3016 = vpop.permute.xlu0 %3015
      %3017 = vrot.lane.b32.xlu0 %v2981, 40
      %v3018 = vpop.permute.xlu0 %3017
      %3019 = vrot.lane.b32.xlu0 %v2984, 40
      %v3020 = vpop.permute.xlu0 %3019
      %3021 = vrot.lane.b32.xlu0 %v2987, 40
      %v3022 = vpop.permute.xlu0 %3021
      %3023 = vrot.lane.b32.xlu0 %v2990, 40
      %v3024 = vpop.permute.xlu0 %3023
      %3025 = vrot.lane.b32.xlu0 %v2993, 40
      %v3026 = vpop.permute.xlu0 %3025
      %3027 = vrot.lane.b32.xlu0 %v2996, 40
      %v3028 = vpop.permute.xlu0 %3027
      %vm3045 = vcmask 392512
      %3046 = vst.msk [vmem:[#allocation4] sm:$0xff] %vm3045, %v2998
      %3047 = vst.msk [vmem:[#allocation4 + $0x10] sm:$0xff] %vm3045, %v3000
      %3048 = vst.msk [vmem:[#allocation4 + $0x20] sm:$0xff] %vm3045, %v3002
      %3049 = vst.msk [vmem:[#allocation4 + $0x30] sm:$0xff] %vm3045, %v3004
      %3050 = vst.msk [vmem:[#allocation4 + $0x40] sm:$0xff] %vm3045, %v3006
      %3051 = vst.msk [vmem:[#allocation4 + $0x50] sm:$0xff] %vm3045, %v3008
      %3052 = vst.msk [vmem:[#allocation4 + $0x60] sm:$0xff] %vm3045, %v3010
      %3053 = vst.msk [vmem:[#allocation4 + $0x70] sm:$0xff] %vm3045, %v3012
      %3054 = vst.msk [vmem:[#allocation4 + $0x80] sm:$0xff] %vm3045, %v3014
      %3055 = vst.msk [vmem:[#allocation4 + $0x90] sm:$0xff] %vm3045, %v3016
      %3056 = vst.msk [vmem:[#allocation4 + $0xa0] sm:$0xff] %vm3045, %v3018
      %3057 = vst.msk [vmem:[#allocation4 + $0xb0] sm:$0xff] %vm3045, %v3020
      %3058 = vst.msk [vmem:[#allocation4 + $0xc0] sm:$0xff] %vm3045, %v3022
      %3059 = vst.msk [vmem:[#allocation4 + $0xd0] sm:$0xff] %vm3045, %v3024
      %3060 = vst.msk [vmem:[#allocation4 + $0xe0] sm:$0xff] %vm3045, %v3026
      %3061 = vst.msk [vmem:[#allocation4 + $0xf0] sm:$0xff] %vm3045, %v3028
      %s3062 = scalar_lea.vmem [#allocation2], 24
      %v3063 = vld [vmem:[%s3062] sm:$0xf]
      %v3064 = vld [vmem:[%s3062 + $0x4] sm:$0xf]
      %v3065 = vld [vmem:[%s3062 + $0xc] sm:$0xf]
      %v3066 = vld [vmem:[%s3062 + $0x10] sm:$0xf]
      %v3067 = vld [vmem:[%s3062 + $0x18] sm:$0xf]
      %v3068 = vld [vmem:[%s3062 + $0x1c] sm:$0xf]
      %v3069 = vld [vmem:[%s3062 + $0x24] sm:$0xf]
      %v3070 = vld [vmem:[%s3062 + $0x28] sm:$0xf]
      %v3071 = vld [vmem:[%s3062 + $0x30] sm:$0xf]
      %v3072 = vld [vmem:[%s3062 + $0x34] sm:$0xf]
      %v3073 = vld [vmem:[%s3062 + $0x3c] sm:$0xf]
      %v3074 = vld [vmem:[%s3062 + $0x40] sm:$0xf]
      %v3075 = vld [vmem:[%s3062 + $0x48] sm:$0xf]
      %v3076 = vld [vmem:[%s3062 + $0x4c] sm:$0xf]
      %v3077 = vld [vmem:[%s3062 + $0x54] sm:$0xf]
      %v3078 = vld [vmem:[%s3062 + $0x58] sm:$0xf]
      %v3079 = vld [vmem:[%s3062 + $0x60] sm:$0xf]
      %v3080 = vld [vmem:[%s3062 + $0x64] sm:$0xf]
      %v3081 = vld [vmem:[%s3062 + $0x6c] sm:$0xf]
      %v3082 = vld [vmem:[%s3062 + $0x70] sm:$0xf]
      %v3083 = vld [vmem:[%s3062 + $0x78] sm:$0xf]
      %v3084 = vld [vmem:[%s3062 + $0x7c] sm:$0xf]
      %v3085 = vld [vmem:[%s3062 + $0x84] sm:$0xf]
      %v3086 = vld [vmem:[%s3062 + $0x88] sm:$0xf]
      %v3087 = vld [vmem:[%s3062 + $0x90] sm:$0xf]
      %v3088 = vld [vmem:[%s3062 + $0x94] sm:$0xf]
      %v3089 = vld [vmem:[%s3062 + $0x9c] sm:$0xf]
      %v3090 = vld [vmem:[%s3062 + $0xa0] sm:$0xf]
      %v3091 = vld [vmem:[%s3062 + $0xa8] sm:$0xf]
      %v3092 = vld [vmem:[%s3062 + $0xac] sm:$0xf]
      %v3093 = vld [vmem:[%s3062 + $0xb4] sm:$0xf]
      %v3094 = vld [vmem:[%s3062 + $0xb8] sm:$0xf]
      %v3127 = vunpack.c.l.b16 %v3063
      %v3128 = vunpack.c.l.b16 %v3064
      %v3129 = vunpack.c.l.b16 %v3065
      %v3130 = vunpack.c.l.b16 %v3066
      %v3131 = vunpack.c.l.b16 %v3067
      %v3132 = vunpack.c.l.b16 %v3068
      %v3133 = vunpack.c.l.b16 %v3069
      %v3134 = vunpack.c.l.b16 %v3070
      %v3135 = vunpack.c.l.b16 %v3071
      %v3136 = vunpack.c.l.b16 %v3072
      %v3137 = vunpack.c.l.b16 %v3073
      %v3138 = vunpack.c.l.b16 %v3074
      %v3139 = vunpack.c.l.b16 %v3075
      %v3140 = vunpack.c.l.b16 %v3076
      %v3141 = vunpack.c.l.b16 %v3077
      %v3142 = vunpack.c.l.b16 %v3078
      %v3143 = vunpack.c.l.b16 %v3079
      %v3144 = vunpack.c.l.b16 %v3080
      %v3145 = vunpack.c.l.b16 %v3081
      %v3146 = vunpack.c.l.b16 %v3082
      %v3147 = vunpack.c.l.b16 %v3083
      %v3148 = vunpack.c.l.b16 %v3084
      %v3149 = vunpack.c.l.b16 %v3085
      %v3150 = vunpack.c.l.b16 %v3086
      %v3151 = vunpack.c.l.b16 %v3087
      %v3152 = vunpack.c.l.b16 %v3088
      %v3153 = vunpack.c.l.b16 %v3089
      %v3154 = vunpack.c.l.b16 %v3090
      %v3155 = vunpack.c.l.b16 %v3091
      %v3156 = vunpack.c.l.b16 %v3092
      %v3157 = vunpack.c.l.b16 %v3093
      %v3158 = vunpack.c.l.b16 %v3094
      %v3159 = vpack.c.b16 %v3128, %v3127
      %v3160 = vpack.c.b16 %v3130, %v3129
      %v3161 = vpack.c.b16 %v3132, %v3131
      %v3162 = vpack.c.b16 %v3134, %v3133
      %v3163 = vpack.c.b16 %v3136, %v3135
      %v3164 = vpack.c.b16 %v3138, %v3137
      %v3165 = vpack.c.b16 %v3140, %v3139
      %v3166 = vpack.c.b16 %v3142, %v3141
      %v3167 = vpack.c.b16 %v3144, %v3143
      %v3168 = vpack.c.b16 %v3146, %v3145
      %v3169 = vpack.c.b16 %v3148, %v3147
      %v3170 = vpack.c.b16 %v3150, %v3149
      %v3171 = vpack.c.b16 %v3152, %v3151
      %v3172 = vpack.c.b16 %v3154, %v3153
      %v3173 = vpack.c.b16 %v3156, %v3155
      %v3174 = vpack.c.b16 %v3158, %v3157
      %3175 = vrot.lane.b32.xlu0 %v3159, 48
      %v3176 = vpop.permute.xlu0 %3175
      %3177 = vrot.lane.b32.xlu0 %v3160, 48
      %v3178 = vpop.permute.xlu0 %3177
      %3179 = vrot.lane.b32.xlu0 %v3161, 48
      %v3180 = vpop.permute.xlu0 %3179
      %3181 = vrot.lane.b32.xlu0 %v3162, 48
      %v3182 = vpop.permute.xlu0 %3181
      %3183 = vrot.lane.b32.xlu0 %v3163, 48
      %v3184 = vpop.permute.xlu0 %3183
      %3185 = vrot.lane.b32.xlu0 %v3164, 48
      %v3186 = vpop.permute.xlu0 %3185
      %3187 = vrot.lane.b32.xlu0 %v3165, 48
      %v3188 = vpop.permute.xlu0 %3187
      %3189 = vrot.lane.b32.xlu0 %v3166, 48
      %v3190 = vpop.permute.xlu0 %3189
      %3191 = vrot.lane.b32.xlu0 %v3167, 48
      %v3192 = vpop.permute.xlu0 %3191
      %3193 = vrot.lane.b32.xlu0 %v3168, 48
      %v3194 = vpop.permute.xlu0 %3193
      %3195 = vrot.lane.b32.xlu0 %v3169, 48
      %v3196 = vpop.permute.xlu0 %3195
      %3197 = vrot.lane.b32.xlu0 %v3170, 48
      %v3198 = vpop.permute.xlu0 %3197
      %3199 = vrot.lane.b32.xlu0 %v3171, 48
      %v3200 = vpop.permute.xlu0 %3199
      %3201 = vrot.lane.b32.xlu0 %v3172, 48
      %v3202 = vpop.permute.xlu0 %3201
      %3203 = vrot.lane.b32.xlu0 %v3173, 48
      %v3204 = vpop.permute.xlu0 %3203
      %3205 = vrot.lane.b32.xlu0 %v3174, 48
      %v3206 = vpop.permute.xlu0 %3205
      %vm3223 = vcmask 458112
      %3224 = vst.msk [vmem:[#allocation4] sm:$0xff] %vm3223, %v3176
      %3225 = vst.msk [vmem:[#allocation4 + $0x10] sm:$0xff] %vm3223, %v3178
      %3226 = vst.msk [vmem:[#allocation4 + $0x20] sm:$0xff] %vm3223, %v3180
      %3227 = vst.msk [vmem:[#allocation4 + $0x30] sm:$0xff] %vm3223, %v3182
      %3228 = vst.msk [vmem:[#allocation4 + $0x40] sm:$0xff] %vm3223, %v3184
      %3229 = vst.msk [vmem:[#allocation4 + $0x50] sm:$0xff] %vm3223, %v3186
      %3230 = vst.msk [vmem:[#allocation4 + $0x60] sm:$0xff] %vm3223, %v3188
      %3231 = vst.msk [vmem:[#allocation4 + $0x70] sm:$0xff] %vm3223, %v3190
      %3232 = vst.msk [vmem:[#allocation4 + $0x80] sm:$0xff] %vm3223, %v3192
      %3233 = vst.msk [vmem:[#allocation4 + $0x90] sm:$0xff] %vm3223, %v3194
      %3234 = vst.msk [vmem:[#allocation4 + $0xa0] sm:$0xff] %vm3223, %v3196
      %3235 = vst.msk [vmem:[#allocation4 + $0xb0] sm:$0xff] %vm3223, %v3198
      %3236 = vst.msk [vmem:[#allocation4 + $0xc0] sm:$0xff] %vm3223, %v3200
      %3237 = vst.msk [vmem:[#allocation4 + $0xd0] sm:$0xff] %vm3223, %v3202
      %3238 = vst.msk [vmem:[#allocation4 + $0xe0] sm:$0xff] %vm3223, %v3204
      %3239 = vst.msk [vmem:[#allocation4 + $0xf0] sm:$0xff] %vm3223, %v3206
      %v3240 = vld [vmem:[%s3062] sm:$0xf]
      %v3241 = vld [vmem:[%s3062 + $0x4] sm:$0xf]
      %v3242 = vld [vmem:[%s3062 + $0x8] sm:$0x1]
      %v3243 = vld [vmem:[%s3062 + $0xc] sm:$0xf]
      %v3244 = vld [vmem:[%s3062 + $0x10] sm:$0xf]
      %v3245 = vld [vmem:[%s3062 + $0x14] sm:$0x1]
      %v3246 = vld [vmem:[%s3062 + $0x18] sm:$0xf]
      %v3247 = vld [vmem:[%s3062 + $0x1c] sm:$0xf]
      %v3248 = vld [vmem:[%s3062 + $0x20] sm:$0x1]
      %v3249 = vld [vmem:[%s3062 + $0x24] sm:$0xf]
      %v3250 = vld [vmem:[%s3062 + $0x28] sm:$0xf]
      %v3251 = vld [vmem:[%s3062 + $0x2c] sm:$0x1]
      %v3252 = vld [vmem:[%s3062 + $0x30] sm:$0xf]
      %v3253 = vld [vmem:[%s3062 + $0x34] sm:$0xf]
      %v3254 = vld [vmem:[%s3062 + $0x38] sm:$0x1]
      %v3255 = vld [vmem:[%s3062 + $0x3c] sm:$0xf]
      %v3256 = vld [vmem:[%s3062 + $0x40] sm:$0xf]
      %v3257 = vld [vmem:[%s3062 + $0x44] sm:$0x1]
      %v3258 = vld [vmem:[%s3062 + $0x48] sm:$0xf]
      %v3259 = vld [vmem:[%s3062 + $0x4c] sm:$0xf]
      %v3260 = vld [vmem:[%s3062 + $0x50] sm:$0x1]
      %v3261 = vld [vmem:[%s3062 + $0x54] sm:$0xf]
      %v3262 = vld [vmem:[%s3062 + $0x58] sm:$0xf]
      %v3263 = vld [vmem:[%s3062 + $0x5c] sm:$0x1]
      %v3264 = vld [vmem:[%s3062 + $0x60] sm:$0xf]
      %v3265 = vld [vmem:[%s3062 + $0x64] sm:$0xf]
      %v3266 = vld [vmem:[%s3062 + $0x68] sm:$0x1]
      %v3267 = vld [vmem:[%s3062 + $0x6c] sm:$0xf]
      %v3268 = vld [vmem:[%s3062 + $0x70] sm:$0xf]
      %v3269 = vld [vmem:[%s3062 + $0x74] sm:$0x1]
      %v3270 = vld [vmem:[%s3062 + $0x78] sm:$0xf]
      %v3271 = vld [vmem:[%s3062 + $0x7c] sm:$0xf]
      %v3272 = vld [vmem:[%s3062 + $0x80] sm:$0x1]
      %v3273 = vld [vmem:[%s3062 + $0x84] sm:$0xf]
      %v3274 = vld [vmem:[%s3062 + $0x88] sm:$0xf]
      %v3275 = vld [vmem:[%s3062 + $0x8c] sm:$0x1]
      %v3276 = vld [vmem:[%s3062 + $0x90] sm:$0xf]
      %v3277 = vld [vmem:[%s3062 + $0x94] sm:$0xf]
      %v3278 = vld [vmem:[%s3062 + $0x98] sm:$0x1]
      %v3279 = vld [vmem:[%s3062 + $0x9c] sm:$0xf]
      %v3280 = vld [vmem:[%s3062 + $0xa0] sm:$0xf]
      %v3281 = vld [vmem:[%s3062 + $0xa4] sm:$0x1]
      %v3282 = vld [vmem:[%s3062 + $0xa8] sm:$0xf]
      %v3283 = vld [vmem:[%s3062 + $0xac] sm:$0xf]
      %v3284 = vld [vmem:[%s3062 + $0xb0] sm:$0x1]
      %v3285 = vld [vmem:[%s3062 + $0xb4] sm:$0xf]
      %v3286 = vld [vmem:[%s3062 + $0xb8] sm:$0xf]
      %v3287 = vld [vmem:[%s3062 + $0xbc] sm:$0x1]
      %v3336 = vunpack.c.l.b16 %v3240
      %v3337 = vunpack.c.l.b16 %v3241
      %v3338 = vunpack.c.l.b16 %v3242
      %v3339 = vunpack.c.l.b16 %v3243
      %v3340 = vunpack.c.l.b16 %v3244
      %v3341 = vunpack.c.l.b16 %v3245
      %v3342 = vunpack.c.l.b16 %v3246
      %v3343 = vunpack.c.l.b16 %v3247
      %v3344 = vunpack.c.l.b16 %v3248
      %v3345 = vunpack.c.l.b16 %v3249
      %v3346 = vunpack.c.l.b16 %v3250
      %v3347 = vunpack.c.l.b16 %v3251
      %v3348 = vunpack.c.l.b16 %v3252
      %v3349 = vunpack.c.l.b16 %v3253
      %v3350 = vunpack.c.l.b16 %v3254
      %v3351 = vunpack.c.l.b16 %v3255
      %v3352 = vunpack.c.l.b16 %v3256
      %v3353 = vunpack.c.l.b16 %v3257
      %v3354 = vunpack.c.l.b16 %v3258
      %v3355 = vunpack.c.l.b16 %v3259
      %v3356 = vunpack.c.l.b16 %v3260
      %v3357 = vunpack.c.l.b16 %v3261
      %v3358 = vunpack.c.l.b16 %v3262
      %v3359 = vunpack.c.l.b16 %v3263
      %v3360 = vunpack.c.l.b16 %v3264
      %v3361 = vunpack.c.l.b16 %v3265
      %v3362 = vunpack.c.l.b16 %v3266
      %v3363 = vunpack.c.l.b16 %v3267
      %v3364 = vunpack.c.l.b16 %v3268
      %v3365 = vunpack.c.l.b16 %v3269
      %v3366 = vunpack.c.l.b16 %v3270
      %v3367 = vunpack.c.l.b16 %v3271
      %v3368 = vunpack.c.l.b16 %v3272
      %v3369 = vunpack.c.l.b16 %v3273
      %v3370 = vunpack.c.l.b16 %v3274
      %v3371 = vunpack.c.l.b16 %v3275
      %v3372 = vunpack.c.l.b16 %v3276
      %v3373 = vunpack.c.l.b16 %v3277
      %v3374 = vunpack.c.l.b16 %v3278
      %v3375 = vunpack.c.l.b16 %v3279
      %v3376 = vunpack.c.l.b16 %v3280
      %v3377 = vunpack.c.l.b16 %v3281
      %v3378 = vunpack.c.l.b16 %v3282
      %v3379 = vunpack.c.l.b16 %v3283
      %v3380 = vunpack.c.l.b16 %v3284
      %v3381 = vunpack.c.l.b16 %v3285
      %v3382 = vunpack.c.l.b16 %v3286
      %v3383 = vunpack.c.l.b16 %v3287
      %v3384 = vpack.c.b16 %v3337, %v3336
      %v3385 = vpack.c.b16 %v3338, %v3338
      %v3386 = vpack.c.b16 %v3340, %v3339
      %v3387 = vpack.c.b16 %v3341, %v3341
      %v3388 = vpack.c.b16 %v3343, %v3342
      %v3389 = vpack.c.b16 %v3344, %v3344
      %v3390 = vpack.c.b16 %v3346, %v3345
      %v3391 = vpack.c.b16 %v3347, %v3347
      %v3392 = vpack.c.b16 %v3349, %v3348
      %v3393 = vpack.c.b16 %v3350, %v3350
      %v3394 = vpack.c.b16 %v3352, %v3351
      %v3395 = vpack.c.b16 %v3353, %v3353
      %v3396 = vpack.c.b16 %v3355, %v3354
      %v3397 = vpack.c.b16 %v3356, %v3356
      %v3398 = vpack.c.b16 %v3358, %v3357
      %v3399 = vpack.c.b16 %v3359, %v3359
      %v3400 = vpack.c.b16 %v3361, %v3360
      %v3401 = vpack.c.b16 %v3362, %v3362
      %v3402 = vpack.c.b16 %v3364, %v3363
      %v3403 = vpack.c.b16 %v3365, %v3365
      %v3404 = vpack.c.b16 %v3367, %v3366
      %v3405 = vpack.c.b16 %v3368, %v3368
      %v3406 = vpack.c.b16 %v3370, %v3369
      %v3407 = vpack.c.b16 %v3371, %v3371
      %v3408 = vpack.c.b16 %v3373, %v3372
      %v3409 = vpack.c.b16 %v3374, %v3374
      %v3410 = vpack.c.b16 %v3376, %v3375
      %v3411 = vpack.c.b16 %v3377, %v3377
      %v3412 = vpack.c.b16 %v3379, %v3378
      %v3413 = vpack.c.b16 %v3380, %v3380
      %v3414 = vpack.c.b16 %v3382, %v3381
      %v3415 = vpack.c.b16 %v3383, %v3383
      %v3417 = vshrl.u32 %v3384, 16
      %v3419 = vshll.u32 %v3384, 16
      %v3421 = vrot.slane %v3419, 1
      %v3422 = vor.u32 %v3417, %v3421
      %v3424 = vshll.u32 %v3385, 16
      %v3426 = vrot.slane %v3424, 1
      %v3427 = vsel %vm1615, %v3422, %v3426
      %v3429 = vshrl.u32 %v3386, 16
      %v3431 = vshll.u32 %v3386, 16
      %v3433 = vrot.slane %v3431, 1
      %v3434 = vor.u32 %v3429, %v3433
      %v3436 = vshll.u32 %v3387, 16
      %v3438 = vrot.slane %v3436, 1
      %v3439 = vsel %vm1615, %v3434, %v3438
      %v3441 = vshrl.u32 %v3388, 16
      %v3443 = vshll.u32 %v3388, 16
      %v3445 = vrot.slane %v3443, 1
      %v3446 = vor.u32 %v3441, %v3445
      %v3448 = vshll.u32 %v3389, 16
      %v3450 = vrot.slane %v3448, 1
      %v3451 = vsel %vm1615, %v3446, %v3450
      %v3453 = vshrl.u32 %v3390, 16
      %v3455 = vshll.u32 %v3390, 16
      %v3457 = vrot.slane %v3455, 1
      %v3458 = vor.u32 %v3453, %v3457
      %v3460 = vshll.u32 %v3391, 16
      %v3462 = vrot.slane %v3460, 1
      %v3463 = vsel %vm1615, %v3458, %v3462
      %v3465 = vshrl.u32 %v3392, 16
      %v3467 = vshll.u32 %v3392, 16
      %v3469 = vrot.slane %v3467, 1
      %v3470 = vor.u32 %v3465, %v3469
      %v3472 = vshll.u32 %v3393, 16
      %v3474 = vrot.slane %v3472, 1
      %v3475 = vsel %vm1615, %v3470, %v3474
      %v3477 = vshrl.u32 %v3394, 16
      %v3479 = vshll.u32 %v3394, 16
      %v3481 = vrot.slane %v3479, 1
      %v3482 = vor.u32 %v3477, %v3481
      %v3484 = vshll.u32 %v3395, 16
      %v3486 = vrot.slane %v3484, 1
      %v3487 = vsel %vm1615, %v3482, %v3486
      %v3489 = vshrl.u32 %v3396, 16
      %v3491 = vshll.u32 %v3396, 16
      %v3493 = vrot.slane %v3491, 1
      %v3494 = vor.u32 %v3489, %v3493
      %v3496 = vshll.u32 %v3397, 16
      %v3498 = vrot.slane %v3496, 1
      %v3499 = vsel %vm1615, %v3494, %v3498
      %v3501 = vshrl.u32 %v3398, 16
      %v3503 = vshll.u32 %v3398, 16
      %v3505 = vrot.slane %v3503, 1
      %v3506 = vor.u32 %v3501, %v3505
      %v3508 = vshll.u32 %v3399, 16
      %v3510 = vrot.slane %v3508, 1
      %v3511 = vsel %vm1615, %v3506, %v3510
      %v3513 = vshrl.u32 %v3400, 16
      %v3515 = vshll.u32 %v3400, 16
      %v3517 = vrot.slane %v3515, 1
      %v3518 = vor.u32 %v3513, %v3517
      %v3520 = vshll.u32 %v3401, 16
      %v3522 = vrot.slane %v3520, 1
      %v3523 = vsel %vm1615, %v3518, %v3522
      %v3525 = vshrl.u32 %v3402, 16
      %v3527 = vshll.u32 %v3402, 16
      %v3529 = vrot.slane %v3527, 1
      %v3530 = vor.u32 %v3525, %v3529
      %v3532 = vshll.u32 %v3403, 16
      %v3534 = vrot.slane %v3532, 1
      %v3535 = vsel %vm1615, %v3530, %v3534
      %v3537 = vshrl.u32 %v3404, 16
      %v3539 = vshll.u32 %v3404, 16
      %v3541 = vrot.slane %v3539, 1
      %v3542 = vor.u32 %v3537, %v3541
      %v3544 = vshll.u32 %v3405, 16
      %v3546 = vrot.slane %v3544, 1
      %v3547 = vsel %vm1615, %v3542, %v3546
      %v3549 = vshrl.u32 %v3406, 16
      %v3551 = vshll.u32 %v3406, 16
      %v3553 = vrot.slane %v3551, 1
      %v3554 = vor.u32 %v3549, %v3553
      %v3556 = vshll.u32 %v3407, 16
      %v3558 = vrot.slane %v3556, 1
      %v3559 = vsel %vm1615, %v3554, %v3558
      %v3561 = vshrl.u32 %v3408, 16
      %v3563 = vshll.u32 %v3408, 16
      %v3565 = vrot.slane %v3563, 1
      %v3566 = vor.u32 %v3561, %v3565
      %v3568 = vshll.u32 %v3409, 16
      %v3570 = vrot.slane %v3568, 1
      %v3571 = vsel %vm1615, %v3566, %v3570
      %v3573 = vshrl.u32 %v3410, 16
      %v3575 = vshll.u32 %v3410, 16
      %v3577 = vrot.slane %v3575, 1
      %v3578 = vor.u32 %v3573, %v3577
      %v3580 = vshll.u32 %v3411, 16
      %v3582 = vrot.slane %v3580, 1
      %v3583 = vsel %vm1615, %v3578, %v3582
      %v3585 = vshrl.u32 %v3412, 16
      %v3587 = vshll.u32 %v3412, 16
      %v3589 = vrot.slane %v3587, 1
      %v3590 = vor.u32 %v3585, %v3589
      %v3592 = vshll.u32 %v3413, 16
      %v3594 = vrot.slane %v3592, 1
      %v3595 = vsel %vm1615, %v3590, %v3594
      %v3597 = vshrl.u32 %v3414, 16
      %v3599 = vshll.u32 %v3414, 16
      %v3601 = vrot.slane %v3599, 1
      %v3602 = vor.u32 %v3597, %v3601
      %v3604 = vshll.u32 %v3415, 16
      %v3606 = vrot.slane %v3604, 1
      %v3607 = vsel %vm1615, %v3602, %v3606
      %3608 = vrot.lane.b32.xlu0 %v3427, 56
      %v3609 = vpop.permute.xlu0 %3608
      %3610 = vrot.lane.b32.xlu0 %v3439, 56
      %v3611 = vpop.permute.xlu0 %3610
      %3612 = vrot.lane.b32.xlu0 %v3451, 56
      %v3613 = vpop.permute.xlu0 %3612
      %3614 = vrot.lane.b32.xlu0 %v3463, 56
      %v3615 = vpop.permute.xlu0 %3614
      %3616 = vrot.lane.b32.xlu0 %v3475, 56
      %v3617 = vpop.permute.xlu0 %3616
      %3618 = vrot.lane.b32.xlu0 %v3487, 56
      %v3619 = vpop.permute.xlu0 %3618
      %3620 = vrot.lane.b32.xlu0 %v3499, 56
      %v3621 = vpop.permute.xlu0 %3620
      %3622 = vrot.lane.b32.xlu0 %v3511, 56
      %v3623 = vpop.permute.xlu0 %3622
      %3624 = vrot.lane.b32.xlu0 %v3523, 56
      %v3625 = vpop.permute.xlu0 %3624
      %3626 = vrot.lane.b32.xlu0 %v3535, 56
      %v3627 = vpop.permute.xlu0 %3626
      %3628 = vrot.lane.b32.xlu0 %v3547, 56
      %v3629 = vpop.permute.xlu0 %3628
      %3630 = vrot.lane.b32.xlu0 %v3559, 56
      %v3631 = vpop.permute.xlu0 %3630
      %3632 = vrot.lane.b32.xlu0 %v3571, 56
      %v3633 = vpop.permute.xlu0 %3632
      %3634 = vrot.lane.b32.xlu0 %v3583, 56
      %v3635 = vpop.permute.xlu0 %3634
      %3636 = vrot.lane.b32.xlu0 %v3595, 56
      %v3637 = vpop.permute.xlu0 %3636
      %3638 = vrot.lane.b32.xlu0 %v3607, 56
      %v3639 = vpop.permute.xlu0 %3638
      %vm3656 = vcmask 523712
      %3657 = vst.msk [vmem:[#allocation4] sm:$0xff] %vm3656, %v3609
      %3658 = vst.msk [vmem:[#allocation4 + $0x10] sm:$0xff] %vm3656, %v3611
      %3659 = vst.msk [vmem:[#allocation4 + $0x20] sm:$0xff] %vm3656, %v3613
      %3660 = vst.msk [vmem:[#allocation4 + $0x30] sm:$0xff] %vm3656, %v3615
      %3661 = vst.msk [vmem:[#allocation4 + $0x40] sm:$0xff] %vm3656, %v3617
      %3662 = vst.msk [vmem:[#allocation4 + $0x50] sm:$0xff] %vm3656, %v3619
      %3663 = vst.msk [vmem:[#allocation4 + $0x60] sm:$0xff] %vm3656, %v3621
      %3664 = vst.msk [vmem:[#allocation4 + $0x70] sm:$0xff] %vm3656, %v3623
      %3665 = vst.msk [vmem:[#allocation4 + $0x80] sm:$0xff] %vm3656, %v3625
      %3666 = vst.msk [vmem:[#allocation4 + $0x90] sm:$0xff] %vm3656, %v3627
      %3667 = vst.msk [vmem:[#allocation4 + $0xa0] sm:$0xff] %vm3656, %v3629
      %3668 = vst.msk [vmem:[#allocation4 + $0xb0] sm:$0xff] %vm3656, %v3631
      %3669 = vst.msk [vmem:[#allocation4 + $0xc0] sm:$0xff] %vm3656, %v3633
      %3670 = vst.msk [vmem:[#allocation4 + $0xd0] sm:$0xff] %vm3656, %v3635
      %3671 = vst.msk [vmem:[#allocation4 + $0xe0] sm:$0xff] %vm3656, %v3637
      %3672 = vst.msk [vmem:[#allocation4 + $0xf0] sm:$0xff] %vm3656, %v3639
      %v3673 = vld [vmem:[%s3062] sm:$0xe]
      %v3674 = vld [vmem:[%s3062 + $0x4] sm:$0xf]
      %v3675 = vld [vmem:[%s3062 + $0x8] sm:$0x1]
      %v3676 = vld [vmem:[%s3062 + $0xc] sm:$0xe]
      %v3677 = vld [vmem:[%s3062 + $0x10] sm:$0xf]
      %v3678 = vld [vmem:[%s3062 + $0x14] sm:$0x1]
      %v3679 = vld [vmem:[%s3062 + $0x18] sm:$0xe]
      %v3680 = vld [vmem:[%s3062 + $0x1c] sm:$0xf]
      %v3681 = vld [vmem:[%s3062 + $0x20] sm:$0x1]
      %v3682 = vld [vmem:[%s3062 + $0x24] sm:$0xe]
      %v3683 = vld [vmem:[%s3062 + $0x28] sm:$0xf]
      %v3684 = vld [vmem:[%s3062 + $0x2c] sm:$0x1]
      %v3685 = vld [vmem:[%s3062 + $0x30] sm:$0xe]
      %v3686 = vld [vmem:[%s3062 + $0x34] sm:$0xf]
      %v3687 = vld [vmem:[%s3062 + $0x38] sm:$0x1]
      %v3688 = vld [vmem:[%s3062 + $0x3c] sm:$0xe]
      %v3689 = vld [vmem:[%s3062 + $0x40] sm:$0xf]
      %v3690 = vld [vmem:[%s3062 + $0x44] sm:$0x1]
      %v3691 = vld [vmem:[%s3062 + $0x48] sm:$0xe]
      %v3692 = vld [vmem:[%s3062 + $0x4c] sm:$0xf]
      %v3693 = vld [vmem:[%s3062 + $0x50] sm:$0x1]
      %v3694 = vld [vmem:[%s3062 + $0x54] sm:$0xe]
      %v3695 = vld [vmem:[%s3062 + $0x58] sm:$0xf]
      %v3696 = vld [vmem:[%s3062 + $0x5c] sm:$0x1]
      %v3697 = vld [vmem:[%s3062 + $0x60] sm:$0xe]
      %v3698 = vld [vmem:[%s3062 + $0x64] sm:$0xf]
      %v3699 = vld [vmem:[%s3062 + $0x68] sm:$0x1]
      %v3700 = vld [vmem:[%s3062 + $0x6c] sm:$0xe]
      %v3701 = vld [vmem:[%s3062 + $0x70] sm:$0xf]
      %v3702 = vld [vmem:[%s3062 + $0x74] sm:$0x1]
      %v3703 = vld [vmem:[%s3062 + $0x78] sm:$0xe]
      %v3704 = vld [vmem:[%s3062 + $0x7c] sm:$0xf]
      %v3705 = vld [vmem:[%s3062 + $0x80] sm:$0x1]
      %v3706 = vld [vmem:[%s3062 + $0x84] sm:$0xe]
      %v3707 = vld [vmem:[%s3062 + $0x88] sm:$0xf]
      %v3708 = vld [vmem:[%s3062 + $0x8c] sm:$0x1]
      %v3709 = vld [vmem:[%s3062 + $0x90] sm:$0xe]
      %v3710 = vld [vmem:[%s3062 + $0x94] sm:$0xf]
      %v3711 = vld [vmem:[%s3062 + $0x98] sm:$0x1]
      %v3712 = vld [vmem:[%s3062 + $0x9c] sm:$0xe]
      %v3713 = vld [vmem:[%s3062 + $0xa0] sm:$0xf]
      %v3714 = vld [vmem:[%s3062 + $0xa4] sm:$0x1]
      %v3715 = vld [vmem:[%s3062 + $0xa8] sm:$0xe]
      %v3716 = vld [vmem:[%s3062 + $0xac] sm:$0xf]
      %v3717 = vld [vmem:[%s3062 + $0xb0] sm:$0x1]
      %v3718 = vld [vmem:[%s3062 + $0xb4] sm:$0xe]
      %v3719 = vld [vmem:[%s3062 + $0xb8] sm:$0xf]
      %v3720 = vld [vmem:[%s3062 + $0xbc] sm:$0x1]
      %v3769 = vunpack.c.l.b16 %v3673
      %v3770 = vunpack.c.l.b16 %v3674
      %v3771 = vunpack.c.l.b16 %v3675
      %v3772 = vunpack.c.l.b16 %v3676
      %v3773 = vunpack.c.l.b16 %v3677
      %v3774 = vunpack.c.l.b16 %v3678
      %v3775 = vunpack.c.l.b16 %v3679
      %v3776 = vunpack.c.l.b16 %v3680
      %v3777 = vunpack.c.l.b16 %v3681
      %v3778 = vunpack.c.l.b16 %v3682
      %v3779 = vunpack.c.l.b16 %v3683
      %v3780 = vunpack.c.l.b16 %v3684
      %v3781 = vunpack.c.l.b16 %v3685
      %v3782 = vunpack.c.l.b16 %v3686
      %v3783 = vunpack.c.l.b16 %v3687
      %v3784 = vunpack.c.l.b16 %v3688
      %v3785 = vunpack.c.l.b16 %v3689
      %v3786 = vunpack.c.l.b16 %v3690
      %v3787 = vunpack.c.l.b16 %v3691
      %v3788 = vunpack.c.l.b16 %v3692
      %v3789 = vunpack.c.l.b16 %v3693
      %v3790 = vunpack.c.l.b16 %v3694
      %v3791 = vunpack.c.l.b16 %v3695
      %v3792 = vunpack.c.l.b16 %v3696
      %v3793 = vunpack.c.l.b16 %v3697
      %v3794 = vunpack.c.l.b16 %v3698
      %v3795 = vunpack.c.l.b16 %v3699
      %v3796 = vunpack.c.l.b16 %v3700
      %v3797 = vunpack.c.l.b16 %v3701
      %v3798 = vunpack.c.l.b16 %v3702
      %v3799 = vunpack.c.l.b16 %v3703
      %v3800 = vunpack.c.l.b16 %v3704
      %v3801 = vunpack.c.l.b16 %v3705
      %v3802 = vunpack.c.l.b16 %v3706
      %v3803 = vunpack.c.l.b16 %v3707
      %v3804 = vunpack.c.l.b16 %v3708
      %v3805 = vunpack.c.l.b16 %v3709
      %v3806 = vunpack.c.l.b16 %v3710
      %v3807 = vunpack.c.l.b16 %v3711
      %v3808 = vunpack.c.l.b16 %v3712
      %v3809 = vunpack.c.l.b16 %v3713
      %v3810 = vunpack.c.l.b16 %v3714
      %v3811 = vunpack.c.l.b16 %v3715
      %v3812 = vunpack.c.l.b16 %v3716
      %v3813 = vunpack.c.l.b16 %v3717
      %v3814 = vunpack.c.l.b16 %v3718
      %v3815 = vunpack.c.l.b16 %v3719
      %v3816 = vunpack.c.l.b16 %v3720
      %v3817 = vpack.c.b16 %v3770, %v3769
      %v3818 = vpack.c.b16 %v3771, %v3771
      %v3819 = vpack.c.b16 %v3773, %v3772
      %v3820 = vpack.c.b16 %v3774, %v3774
      %v3821 = vpack.c.b16 %v3776, %v3775
      %v3822 = vpack.c.b16 %v3777, %v3777
      %v3823 = vpack.c.b16 %v3779, %v3778
      %v3824 = vpack.c.b16 %v3780, %v3780
      %v3825 = vpack.c.b16 %v3782, %v3781
      %v3826 = vpack.c.b16 %v3783, %v3783
      %v3827 = vpack.c.b16 %v3785, %v3784
      %v3828 = vpack.c.b16 %v3786, %v3786
      %v3829 = vpack.c.b16 %v3788, %v3787
      %v3830 = vpack.c.b16 %v3789, %v3789
      %v3831 = vpack.c.b16 %v3791, %v3790
      %v3832 = vpack.c.b16 %v3792, %v3792
      %v3833 = vpack.c.b16 %v3794, %v3793
      %v3834 = vpack.c.b16 %v3795, %v3795
      %v3835 = vpack.c.b16 %v3797, %v3796
      %v3836 = vpack.c.b16 %v3798, %v3798
      %v3837 = vpack.c.b16 %v3800, %v3799
      %v3838 = vpack.c.b16 %v3801, %v3801
      %v3839 = vpack.c.b16 %v3803, %v3802
      %v3840 = vpack.c.b16 %v3804, %v3804
      %v3841 = vpack.c.b16 %v3806, %v3805
      %v3842 = vpack.c.b16 %v3807, %v3807
      %v3843 = vpack.c.b16 %v3809, %v3808
      %v3844 = vpack.c.b16 %v3810, %v3810
      %v3845 = vpack.c.b16 %v3812, %v3811
      %v3846 = vpack.c.b16 %v3813, %v3813
      %v3847 = vpack.c.b16 %v3815, %v3814
      %v3848 = vpack.c.b16 %v3816, %v3816
      %v3849 = vrot.slane %v3817, 1
      %v3850 = vrot.slane %v3818, 1
      %v3851 = vsel %vm2049, %v3849, %v3850
      %v3852 = vrot.slane %v3819, 1
      %v3853 = vrot.slane %v3820, 1
      %v3854 = vsel %vm2049, %v3852, %v3853
      %v3855 = vrot.slane %v3821, 1
      %v3856 = vrot.slane %v3822, 1
      %v3857 = vsel %vm2049, %v3855, %v3856
      %v3858 = vrot.slane %v3823, 1
      %v3859 = vrot.slane %v3824, 1
      %v3860 = vsel %vm2049, %v3858, %v3859
      %v3861 = vrot.slane %v3825, 1
      %v3862 = vrot.slane %v3826, 1
      %v3863 = vsel %vm2049, %v3861, %v3862
      %v3864 = vrot.slane %v3827, 1
      %v3865 = vrot.slane %v3828, 1
      %v3866 = vsel %vm2049, %v3864, %v3865
      %v3867 = vrot.slane %v3829, 1
      %v3868 = vrot.slane %v3830, 1
      %v3869 = vsel %vm2049, %v3867, %v3868
      %v3870 = vrot.slane %v3831, 1
      %v3871 = vrot.slane %v3832, 1
      %v3872 = vsel %vm2049, %v3870, %v3871
      %v3873 = vrot.slane %v3833, 1
      %v3874 = vrot.slane %v3834, 1
      %v3875 = vsel %vm2049, %v3873, %v3874
      %v3876 = vrot.slane %v3835, 1
      %v3877 = vrot.slane %v3836, 1
      %v3878 = vsel %vm2049, %v3876, %v3877
      %v3879 = vrot.slane %v3837, 1
      %v3880 = vrot.slane %v3838, 1
      %v3881 = vsel %vm2049, %v3879, %v3880
      %v3882 = vrot.slane %v3839, 1
      %v3883 = vrot.slane %v3840, 1
      %v3884 = vsel %vm2049, %v3882, %v3883
      %v3885 = vrot.slane %v3841, 1
      %v3886 = vrot.slane %v3842, 1
      %v3887 = vsel %vm2049, %v3885, %v3886
      %v3888 = vrot.slane %v3843, 1
      %v3889 = vrot.slane %v3844, 1
      %v3890 = vsel %vm2049, %v3888, %v3889
      %v3891 = vrot.slane %v3845, 1
      %v3892 = vrot.slane %v3846, 1
      %v3893 = vsel %vm2049, %v3891, %v3892
      %v3894 = vrot.slane %v3847, 1
      %v3895 = vrot.slane %v3848, 1
      %v3896 = vsel %vm2049, %v3894, %v3895
      %3897 = vrot.lane.b32.xlu0 %v3851, 64
      %v3898 = vpop.permute.xlu0 %3897
      %3899 = vrot.lane.b32.xlu0 %v3854, 64
      %v3900 = vpop.permute.xlu0 %3899
      %3901 = vrot.lane.b32.xlu0 %v3857, 64
      %v3902 = vpop.permute.xlu0 %3901
      %3903 = vrot.lane.b32.xlu0 %v3860, 64
      %v3904 = vpop.permute.xlu0 %3903
      %3905 = vrot.lane.b32.xlu0 %v3863, 64
      %v3906 = vpop.permute.xlu0 %3905
      %3907 = vrot.lane.b32.xlu0 %v3866, 64
      %v3908 = vpop.permute.xlu0 %3907
      %3909 = vrot.lane.b32.xlu0 %v3869, 64
      %v3910 = vpop.permute.xlu0 %3909
      %3911 = vrot.lane.b32.xlu0 %v3872, 64
      %v3912 = vpop.permute.xlu0 %3911
      %3913 = vrot.lane.b32.xlu0 %v3875, 64
      %v3914 = vpop.permute.xlu0 %3913
      %3915 = vrot.lane.b32.xlu0 %v3878, 64
      %v3916 = vpop.permute.xlu0 %3915
      %3917 = vrot.lane.b32.xlu0 %v3881, 64
      %v3918 = vpop.permute.xlu0 %3917
      %3919 = vrot.lane.b32.xlu0 %v3884, 64
      %v3920 = vpop.permute.xlu0 %3919
      %3921 = vrot.lane.b32.xlu0 %v3887, 64
      %v3922 = vpop.permute.xlu0 %3921
      %3923 = vrot.lane.b32.xlu0 %v3890, 64
      %v3924 = vpop.permute.xlu0 %3923
      %3925 = vrot.lane.b32.xlu0 %v3893, 64
      %v3926 = vpop.permute.xlu0 %3925
      %3927 = vrot.lane.b32.xlu0 %v3896, 64
      %v3928 = vpop.permute.xlu0 %3927
      %vm3945 = vcmask 589312
      %3946 = vst.msk [vmem:[#allocation4] sm:$0xff] %vm3945, %v3898
      %3947 = vst.msk [vmem:[#allocation4 + $0x10] sm:$0xff] %vm3945, %v3900
      %3948 = vst.msk [vmem:[#allocation4 + $0x20] sm:$0xff] %vm3945, %v3902
      %3949 = vst.msk [vmem:[#allocation4 + $0x30] sm:$0xff] %vm3945, %v3904
      %3950 = vst.msk [vmem:[#allocation4 + $0x40] sm:$0xff] %vm3945, %v3906
      %3951 = vst.msk [vmem:[#allocation4 + $0x50] sm:$0xff] %vm3945, %v3908
      %3952 = vst.msk [vmem:[#allocation4 + $0x60] sm:$0xff] %vm3945, %v3910
      %3953 = vst.msk [vmem:[#allocation4 + $0x70] sm:$0xff] %vm3945, %v3912
      %3954 = vst.msk [vmem:[#allocation4 + $0x80] sm:$0xff] %vm3945, %v3914
      %3955 = vst.msk [vmem:[#allocation4 + $0x90] sm:$0xff] %vm3945, %v3916
      %3956 = vst.msk [vmem:[#allocation4 + $0xa0] sm:$0xff] %vm3945, %v3918
      %3957 = vst.msk [vmem:[#allocation4 + $0xb0] sm:$0xff] %vm3945, %v3920
      %3958 = vst.msk [vmem:[#allocation4 + $0xc0] sm:$0xff] %vm3945, %v3922
      %3959 = vst.msk [vmem:[#allocation4 + $0xd0] sm:$0xff] %vm3945, %v3924
      %3960 = vst.msk [vmem:[#allocation4 + $0xe0] sm:$0xff] %vm3945, %v3926
      %3961 = vst.msk [vmem:[#allocation4 + $0xf0] sm:$0xff] %vm3945, %v3928
      %v3962 = vld [vmem:[#allocation3] sm:$0xf]
      %v3963 = vld [vmem:[#allocation3 + $0x4] sm:$0xf]
      %v3964 = vld [vmem:[#allocation3 + $0xc] sm:$0xf]
      %v3965 = vld [vmem:[#allocation3 + $0x10] sm:$0xf]
      %v3966 = vld [vmem:[#allocation3 + $0x18] sm:$0xf]
      %v3967 = vld [vmem:[#allocation3 + $0x1c] sm:$0xf]
      %v3968 = vld [vmem:[#allocation3 + $0x24] sm:$0xf]
      %v3969 = vld [vmem:[#allocation3 + $0x28] sm:$0xf]
      %v3970 = vld [vmem:[#allocation3 + $0x30] sm:$0xf]
      %v3971 = vld [vmem:[#allocation3 + $0x34] sm:$0xf]
      %v3972 = vld [vmem:[#allocation3 + $0x3c] sm:$0xf]
      %v3973 = vld [vmem:[#allocation3 + $0x40] sm:$0xf]
      %v3974 = vld [vmem:[#allocation3 + $0x48] sm:$0xf]
      %v3975 = vld [vmem:[#allocation3 + $0x4c] sm:$0xf]
      %v3976 = vld [vmem:[#allocation3 + $0x54] sm:$0xf]
      %v3977 = vld [vmem:[#allocation3 + $0x58] sm:$0xf]
      %v3978 = vld [vmem:[#allocation3 + $0x60] sm:$0xf]
      %v3979 = vld [vmem:[#allocation3 + $0x64] sm:$0xf]
      %v3980 = vld [vmem:[#allocation3 + $0x6c] sm:$0xf]
      %v3981 = vld [vmem:[#allocation3 + $0x70] sm:$0xf]
      %v3982 = vld [vmem:[#allocation3 + $0x78] sm:$0xf]
      %v3983 = vld [vmem:[#allocation3 + $0x7c] sm:$0xf]
      %v3984 = vld [vmem:[#allocation3 + $0x84] sm:$0xf]
      %v3985 = vld [vmem:[#allocation3 + $0x88] sm:$0xf]
      %v3986 = vld [vmem:[#allocation3 + $0x90] sm:$0xf]
      %v3987 = vld [vmem:[#allocation3 + $0x94] sm:$0xf]
      %v3988 = vld [vmem:[#allocation3 + $0x9c] sm:$0xf]
      %v3989 = vld [vmem:[#allocation3 + $0xa0] sm:$0xf]
      %v3990 = vld [vmem:[#allocation3 + $0xa8] sm:$0xf]
      %v3991 = vld [vmem:[#allocation3 + $0xac] sm:$0xf]
      %v3992 = vld [vmem:[#allocation3 + $0xb4] sm:$0xf]
      %v3993 = vld [vmem:[#allocation3 + $0xb8] sm:$0xf]
      %v4026 = vunpack.c.l.b16 %v3962
      %v4027 = vunpack.c.l.b16 %v3963
      %v4028 = vunpack.c.l.b16 %v3964
      %v4029 = vunpack.c.l.b16 %v3965
      %v4030 = vunpack.c.l.b16 %v3966
      %v4031 = vunpack.c.l.b16 %v3967
      %v4032 = vunpack.c.l.b16 %v3968
      %v4033 = vunpack.c.l.b16 %v3969
      %v4034 = vunpack.c.l.b16 %v3970
      %v4035 = vunpack.c.l.b16 %v3971
      %v4036 = vunpack.c.l.b16 %v3972
      %v4037 = vunpack.c.l.b16 %v3973
      %v4038 = vunpack.c.l.b16 %v3974
      %v4039 = vunpack.c.l.b16 %v3975
      %v4040 = vunpack.c.l.b16 %v3976
      %v4041 = vunpack.c.l.b16 %v3977
      %v4042 = vunpack.c.l.b16 %v3978
      %v4043 = vunpack.c.l.b16 %v3979
      %v4044 = vunpack.c.l.b16 %v3980
      %v4045 = vunpack.c.l.b16 %v3981
      %v4046 = vunpack.c.l.b16 %v3982
      %v4047 = vunpack.c.l.b16 %v3983
      %v4048 = vunpack.c.l.b16 %v3984
      %v4049 = vunpack.c.l.b16 %v3985
      %v4050 = vunpack.c.l.b16 %v3986
      %v4051 = vunpack.c.l.b16 %v3987
      %v4052 = vunpack.c.l.b16 %v3988
      %v4053 = vunpack.c.l.b16 %v3989
      %v4054 = vunpack.c.l.b16 %v3990
      %v4055 = vunpack.c.l.b16 %v3991
      %v4056 = vunpack.c.l.b16 %v3992
      %v4057 = vunpack.c.l.b16 %v3993
      %v4058 = vpack.c.b16 %v4027, %v4026
      %v4059 = vpack.c.b16 %v4029, %v4028
      %v4060 = vpack.c.b16 %v4031, %v4030
      %v4061 = vpack.c.b16 %v4033, %v4032
      %v4062 = vpack.c.b16 %v4035, %v4034
      %v4063 = vpack.c.b16 %v4037, %v4036
      %v4064 = vpack.c.b16 %v4039, %v4038
      %v4065 = vpack.c.b16 %v4041, %v4040
      %v4066 = vpack.c.b16 %v4043, %v4042
      %v4067 = vpack.c.b16 %v4045, %v4044
      %v4068 = vpack.c.b16 %v4047, %v4046
      %v4069 = vpack.c.b16 %v4049, %v4048
      %v4070 = vpack.c.b16 %v4051, %v4050
      %v4071 = vpack.c.b16 %v4053, %v4052
      %v4072 = vpack.c.b16 %v4055, %v4054
      %v4073 = vpack.c.b16 %v4057, %v4056
      %4074 = vrot.lane.b32.xlu0 %v4058, 72
      %v4075 = vpop.permute.xlu0 %4074
      %4076 = vrot.lane.b32.xlu0 %v4059, 72
      %v4077 = vpop.permute.xlu0 %4076
      %4078 = vrot.lane.b32.xlu0 %v4060, 72
      %v4079 = vpop.permute.xlu0 %4078
      %4080 = vrot.lane.b32.xlu0 %v4061, 72
      %v4081 = vpop.permute.xlu0 %4080
      %4082 = vrot.lane.b32.xlu0 %v4062, 72
      %v4083 = vpop.permute.xlu0 %4082
      %4084 = vrot.lane.b32.xlu0 %v4063, 72
      %v4085 = vpop.permute.xlu0 %4084
      %4086 = vrot.lane.b32.xlu0 %v4064, 72
      %v4087 = vpop.permute.xlu0 %4086
      %4088 = vrot.lane.b32.xlu0 %v4065, 72
      %v4089 = vpop.permute.xlu0 %4088
      %4090 = vrot.lane.b32.xlu0 %v4066, 72
      %v4091 = vpop.permute.xlu0 %4090
      %4092 = vrot.lane.b32.xlu0 %v4067, 72
      %v4093 = vpop.permute.xlu0 %4092
      %4094 = vrot.lane.b32.xlu0 %v4068, 72
      %v4095 = vpop.permute.xlu0 %4094
      %4096 = vrot.lane.b32.xlu0 %v4069, 72
      %v4097 = vpop.permute.xlu0 %4096
      %4098 = vrot.lane.b32.xlu0 %v4070, 72
      %v4099 = vpop.permute.xlu0 %4098
      %4100 = vrot.lane.b32.xlu0 %v4071, 72
      %v4101 = vpop.permute.xlu0 %4100
      %4102 = vrot.lane.b32.xlu0 %v4072, 72
      %v4103 = vpop.permute.xlu0 %4102
      %4104 = vrot.lane.b32.xlu0 %v4073, 72
      %v4105 = vpop.permute.xlu0 %4104
      %vm4122 = vcmask 654912
      %4123 = vst.msk [vmem:[#allocation4] sm:$0xff] %vm4122, %v4075
      %4124 = vst.msk [vmem:[#allocation4 + $0x10] sm:$0xff] %vm4122, %v4077
      %4125 = vst.msk [vmem:[#allocation4 + $0x20] sm:$0xff] %vm4122, %v4079
      %4126 = vst.msk [vmem:[#allocation4 + $0x30] sm:$0xff] %vm4122, %v4081
      %4127 = vst.msk [vmem:[#allocation4 + $0x40] sm:$0xff] %vm4122, %v4083
      %4128 = vst.msk [vmem:[#allocation4 + $0x50] sm:$0xff] %vm4122, %v4085
      %4129 = vst.msk [vmem:[#allocation4 + $0x60] sm:$0xff] %vm4122, %v4087
      %4130 = vst.msk [vmem:[#allocation4 + $0x70] sm:$0xff] %vm4122, %v4089
      %4131 = vst.msk [vmem:[#allocation4 + $0x80] sm:$0xff] %vm4122, %v4091
      %4132 = vst.msk [vmem:[#allocation4 + $0x90] sm:$0xff] %vm4122, %v4093
      %4133 = vst.msk [vmem:[#allocation4 + $0xa0] sm:$0xff] %vm4122, %v4095
      %4134 = vst.msk [vmem:[#allocation4 + $0xb0] sm:$0xff] %vm4122, %v4097
      %4135 = vst.msk [vmem:[#allocation4 + $0xc0] sm:$0xff] %vm4122, %v4099
      %4136 = vst.msk [vmem:[#allocation4 + $0xd0] sm:$0xff] %vm4122, %v4101
      %4137 = vst.msk [vmem:[#allocation4 + $0xe0] sm:$0xff] %vm4122, %v4103
      %4138 = vst.msk [vmem:[#allocation4 + $0xf0] sm:$0xff] %vm4122, %v4105
      %v4139 = vld [vmem:[#allocation3] sm:$0xf]
      %v4140 = vld [vmem:[#allocation3 + $0x4] sm:$0xf]
      %v4141 = vld [vmem:[#allocation3 + $0x8] sm:$0x1]
      %v4142 = vld [vmem:[#allocation3 + $0xc] sm:$0xf]
      %v4143 = vld [vmem:[#allocation3 + $0x10] sm:$0xf]
      %v4144 = vld [vmem:[#allocation3 + $0x14] sm:$0x1]
      %v4145 = vld [vmem:[#allocation3 + $0x18] sm:$0xf]
      %v4146 = vld [vmem:[#allocation3 + $0x1c] sm:$0xf]
      %v4147 = vld [vmem:[#allocation3 + $0x20] sm:$0x1]
      %v4148 = vld [vmem:[#allocation3 + $0x24] sm:$0xf]
      %v4149 = vld [vmem:[#allocation3 + $0x28] sm:$0xf]
      %v4150 = vld [vmem:[#allocation3 + $0x2c] sm:$0x1]
      %v4151 = vld [vmem:[#allocation3 + $0x30] sm:$0xf]
      %v4152 = vld [vmem:[#allocation3 + $0x34] sm:$0xf]
      %v4153 = vld [vmem:[#allocation3 + $0x38] sm:$0x1]
      %v4154 = vld [vmem:[#allocation3 + $0x3c] sm:$0xf]
      %v4155 = vld [vmem:[#allocation3 + $0x40] sm:$0xf]
      %v4156 = vld [vmem:[#allocation3 + $0x44] sm:$0x1]
      %v4157 = vld [vmem:[#allocation3 + $0x48] sm:$0xf]
      %v4158 = vld [vmem:[#allocation3 + $0x4c] sm:$0xf]
      %v4159 = vld [vmem:[#allocation3 + $0x50] sm:$0x1]
      %v4160 = vld [vmem:[#allocation3 + $0x54] sm:$0xf]
      %v4161 = vld [vmem:[#allocation3 + $0x58] sm:$0xf]
      %v4162 = vld [vmem:[#allocation3 + $0x5c] sm:$0x1]
      %v4163 = vld [vmem:[#allocation3 + $0x60] sm:$0xf]
      %v4164 = vld [vmem:[#allocation3 + $0x64] sm:$0xf]
      %v4165 = vld [vmem:[#allocation3 + $0x68] sm:$0x1]
      %v4166 = vld [vmem:[#allocation3 + $0x6c] sm:$0xf]
      %v4167 = vld [vmem:[#allocation3 + $0x70] sm:$0xf]
      %v4168 = vld [vmem:[#allocation3 + $0x74] sm:$0x1]
      %v4169 = vld [vmem:[#allocation3 + $0x78] sm:$0xf]
      %v4170 = vld [vmem:[#allocation3 + $0x7c] sm:$0xf]
      %v4171 = vld [vmem:[#allocation3 + $0x80] sm:$0x1]
      %v4172 = vld [vmem:[#allocation3 + $0x84] sm:$0xf]
      %v4173 = vld [vmem:[#allocation3 + $0x88] sm:$0xf]
      %v4174 = vld [vmem:[#allocation3 + $0x8c] sm:$0x1]
      %v4175 = vld [vmem:[#allocation3 + $0x90] sm:$0xf]
      %v4176 = vld [vmem:[#allocation3 + $0x94] sm:$0xf]
      %v4177 = vld [vmem:[#allocation3 + $0x98] sm:$0x1]
      %v4178 = vld [vmem:[#allocation3 + $0x9c] sm:$0xf]
      %v4179 = vld [vmem:[#allocation3 + $0xa0] sm:$0xf]
      %v4180 = vld [vmem:[#allocation3 + $0xa4] sm:$0x1]
      %v4181 = vld [vmem:[#allocation3 + $0xa8] sm:$0xf]
      %v4182 = vld [vmem:[#allocation3 + $0xac] sm:$0xf]
      %v4183 = vld [vmem:[#allocation3 + $0xb0] sm:$0x1]
      %v4184 = vld [vmem:[#allocation3 + $0xb4] sm:$0xf]
      %v4185 = vld [vmem:[#allocation3 + $0xb8] sm:$0xf]
      %v4186 = vld [vmem:[#allocation3 + $0xbc] sm:$0x1]
      %v4235 = vunpack.c.l.b16 %v4139
      %v4236 = vunpack.c.l.b16 %v4140
      %v4237 = vunpack.c.l.b16 %v4141
      %v4238 = vunpack.c.l.b16 %v4142
      %v4239 = vunpack.c.l.b16 %v4143
      %v4240 = vunpack.c.l.b16 %v4144
      %v4241 = vunpack.c.l.b16 %v4145
      %v4242 = vunpack.c.l.b16 %v4146
      %v4243 = vunpack.c.l.b16 %v4147
      %v4244 = vunpack.c.l.b16 %v4148
      %v4245 = vunpack.c.l.b16 %v4149
      %v4246 = vunpack.c.l.b16 %v4150
      %v4247 = vunpack.c.l.b16 %v4151
      %v4248 = vunpack.c.l.b16 %v4152
      %v4249 = vunpack.c.l.b16 %v4153
      %v4250 = vunpack.c.l.b16 %v4154
      %v4251 = vunpack.c.l.b16 %v4155
      %v4252 = vunpack.c.l.b16 %v4156
      %v4253 = vunpack.c.l.b16 %v4157
      %v4254 = vunpack.c.l.b16 %v4158
      %v4255 = vunpack.c.l.b16 %v4159
      %v4256 = vunpack.c.l.b16 %v4160
      %v4257 = vunpack.c.l.b16 %v4161
      %v4258 = vunpack.c.l.b16 %v4162
      %v4259 = vunpack.c.l.b16 %v4163
      %v4260 = vunpack.c.l.b16 %v4164
      %v4261 = vunpack.c.l.b16 %v4165
      %v4262 = vunpack.c.l.b16 %v4166
      %v4263 = vunpack.c.l.b16 %v4167
      %v4264 = vunpack.c.l.b16 %v4168
      %v4265 = vunpack.c.l.b16 %v4169
      %v4266 = vunpack.c.l.b16 %v4170
      %v4267 = vunpack.c.l.b16 %v4171
      %v4268 = vunpack.c.l.b16 %v4172
      %v4269 = vunpack.c.l.b16 %v4173
      %v4270 = vunpack.c.l.b16 %v4174
      %v4271 = vunpack.c.l.b16 %v4175
      %v4272 = vunpack.c.l.b16 %v4176
      %v4273 = vunpack.c.l.b16 %v4177
      %v4274 = vunpack.c.l.b16 %v4178
      %v4275 = vunpack.c.l.b16 %v4179
      %v4276 = vunpack.c.l.b16 %v4180
      %v4277 = vunpack.c.l.b16 %v4181
      %v4278 = vunpack.c.l.b16 %v4182
      %v4279 = vunpack.c.l.b16 %v4183
      %v4280 = vunpack.c.l.b16 %v4184
      %v4281 = vunpack.c.l.b16 %v4185
      %v4282 = vunpack.c.l.b16 %v4186
      %v4283 = vpack.c.b16 %v4236, %v4235
      %v4284 = vpack.c.b16 %v4237, %v4237
      %v4285 = vpack.c.b16 %v4239, %v4238
      %v4286 = vpack.c.b16 %v4240, %v4240
      %v4287 = vpack.c.b16 %v4242, %v4241
      %v4288 = vpack.c.b16 %v4243, %v4243
      %v4289 = vpack.c.b16 %v4245, %v4244
      %v4290 = vpack.c.b16 %v4246, %v4246
      %v4291 = vpack.c.b16 %v4248, %v4247
      %v4292 = vpack.c.b16 %v4249, %v4249
      %v4293 = vpack.c.b16 %v4251, %v4250
      %v4294 = vpack.c.b16 %v4252, %v4252
      %v4295 = vpack.c.b16 %v4254, %v4253
      %v4296 = vpack.c.b16 %v4255, %v4255
      %v4297 = vpack.c.b16 %v4257, %v4256
      %v4298 = vpack.c.b16 %v4258, %v4258
      %v4299 = vpack.c.b16 %v4260, %v4259
      %v4300 = vpack.c.b16 %v4261, %v4261
      %v4301 = vpack.c.b16 %v4263, %v4262
      %v4302 = vpack.c.b16 %v4264, %v4264
      %v4303 = vpack.c.b16 %v4266, %v4265
      %v4304 = vpack.c.b16 %v4267, %v4267
      %v4305 = vpack.c.b16 %v4269, %v4268
      %v4306 = vpack.c.b16 %v4270, %v4270
      %v4307 = vpack.c.b16 %v4272, %v4271
      %v4308 = vpack.c.b16 %v4273, %v4273
      %v4309 = vpack.c.b16 %v4275, %v4274
      %v4310 = vpack.c.b16 %v4276, %v4276
      %v4311 = vpack.c.b16 %v4278, %v4277
      %v4312 = vpack.c.b16 %v4279, %v4279
      %v4313 = vpack.c.b16 %v4281, %v4280
      %v4314 = vpack.c.b16 %v4282, %v4282
      %v4316 = vshrl.u32 %v4283, 16
      %v4318 = vshll.u32 %v4283, 16
      %v4320 = vrot.slane %v4318, 1
      %v4321 = vor.u32 %v4316, %v4320
      %v4323 = vshll.u32 %v4284, 16
      %v4325 = vrot.slane %v4323, 1
      %v4326 = vsel %vm1615, %v4321, %v4325
      %v4328 = vshrl.u32 %v4285, 16
      %v4330 = vshll.u32 %v4285, 16
      %v4332 = vrot.slane %v4330, 1
      %v4333 = vor.u32 %v4328, %v4332
      %v4335 = vshll.u32 %v4286, 16
      %v4337 = vrot.slane %v4335, 1
      %v4338 = vsel %vm1615, %v4333, %v4337
      %v4340 = vshrl.u32 %v4287, 16
      %v4342 = vshll.u32 %v4287, 16
      %v4344 = vrot.slane %v4342, 1
      %v4345 = vor.u32 %v4340, %v4344
      %v4347 = vshll.u32 %v4288, 16
      %v4349 = vrot.slane %v4347, 1
      %v4350 = vsel %vm1615, %v4345, %v4349
      %v4352 = vshrl.u32 %v4289, 16
      %v4354 = vshll.u32 %v4289, 16
      %v4356 = vrot.slane %v4354, 1
      %v4357 = vor.u32 %v4352, %v4356
      %v4359 = vshll.u32 %v4290, 16
      %v4361 = vrot.slane %v4359, 1
      %v4362 = vsel %vm1615, %v4357, %v4361
      %v4364 = vshrl.u32 %v4291, 16
      %v4366 = vshll.u32 %v4291, 16
      %v4368 = vrot.slane %v4366, 1
      %v4369 = vor.u32 %v4364, %v4368
      %v4371 = vshll.u32 %v4292, 16
      %v4373 = vrot.slane %v4371, 1
      %v4374 = vsel %vm1615, %v4369, %v4373
      %v4376 = vshrl.u32 %v4293, 16
      %v4378 = vshll.u32 %v4293, 16
      %v4380 = vrot.slane %v4378, 1
      %v4381 = vor.u32 %v4376, %v4380
      %v4383 = vshll.u32 %v4294, 16
      %v4385 = vrot.slane %v4383, 1
      %v4386 = vsel %vm1615, %v4381, %v4385
      %v4388 = vshrl.u32 %v4295, 16
      %v4390 = vshll.u32 %v4295, 16
      %v4392 = vrot.slane %v4390, 1
      %v4393 = vor.u32 %v4388, %v4392
      %v4395 = vshll.u32 %v4296, 16
      %v4397 = vrot.slane %v4395, 1
      %v4398 = vsel %vm1615, %v4393, %v4397
      %v4400 = vshrl.u32 %v4297, 16
      %v4402 = vshll.u32 %v4297, 16
      %v4404 = vrot.slane %v4402, 1
      %v4405 = vor.u32 %v4400, %v4404
      %v4407 = vshll.u32 %v4298, 16
      %v4409 = vrot.slane %v4407, 1
      %v4410 = vsel %vm1615, %v4405, %v4409
      %v4412 = vshrl.u32 %v4299, 16
      %v4414 = vshll.u32 %v4299, 16
      %v4416 = vrot.slane %v4414, 1
      %v4417 = vor.u32 %v4412, %v4416
      %v4419 = vshll.u32 %v4300, 16
      %v4421 = vrot.slane %v4419, 1
      %v4422 = vsel %vm1615, %v4417, %v4421
      %v4424 = vshrl.u32 %v4301, 16
      %v4426 = vshll.u32 %v4301, 16
      %v4428 = vrot.slane %v4426, 1
      %v4429 = vor.u32 %v4424, %v4428
      %v4431 = vshll.u32 %v4302, 16
      %v4433 = vrot.slane %v4431, 1
      %v4434 = vsel %vm1615, %v4429, %v4433
      %v4436 = vshrl.u32 %v4303, 16
      %v4438 = vshll.u32 %v4303, 16
      %v4440 = vrot.slane %v4438, 1
      %v4441 = vor.u32 %v4436, %v4440
      %v4443 = vshll.u32 %v4304, 16
      %v4445 = vrot.slane %v4443, 1
      %v4446 = vsel %vm1615, %v4441, %v4445
      %v4448 = vshrl.u32 %v4305, 16
      %v4450 = vshll.u32 %v4305, 16
      %v4452 = vrot.slane %v4450, 1
      %v4453 = vor.u32 %v4448, %v4452
      %v4455 = vshll.u32 %v4306, 16
      %v4457 = vrot.slane %v4455, 1
      %v4458 = vsel %vm1615, %v4453, %v4457
      %v4460 = vshrl.u32 %v4307, 16
      %v4462 = vshll.u32 %v4307, 16
      %v4464 = vrot.slane %v4462, 1
      %v4465 = vor.u32 %v4460, %v4464
      %v4467 = vshll.u32 %v4308, 16
      %v4469 = vrot.slane %v4467, 1
      %v4470 = vsel %vm1615, %v4465, %v4469
      %v4472 = vshrl.u32 %v4309, 16
      %v4474 = vshll.u32 %v4309, 16
      %v4476 = vrot.slane %v4474, 1
      %v4477 = vor.u32 %v4472, %v4476
      %v4479 = vshll.u32 %v4310, 16
      %v4481 = vrot.slane %v4479, 1
      %v4482 = vsel %vm1615, %v4477, %v4481
      %v4484 = vshrl.u32 %v4311, 16
      %v4486 = vshll.u32 %v4311, 16
      %v4488 = vrot.slane %v4486, 1
      %v4489 = vor.u32 %v4484, %v4488
      %v4491 = vshll.u32 %v4312, 16
      %v4493 = vrot.slane %v4491, 1
      %v4494 = vsel %vm1615, %v4489, %v4493
      %v4496 = vshrl.u32 %v4313, 16
      %v4498 = vshll.u32 %v4313, 16
      %v4500 = vrot.slane %v4498, 1
      %v4501 = vor.u32 %v4496, %v4500
      %v4503 = vshll.u32 %v4314, 16
      %v4505 = vrot.slane %v4503, 1
      %v4506 = vsel %vm1615, %v4501, %v4505
      %4507 = vrot.lane.b32.xlu0 %v4326, 80
      %v4508 = vpop.permute.xlu0 %4507
      %4509 = vrot.lane.b32.xlu0 %v4338, 80
      %v4510 = vpop.permute.xlu0 %4509
      %4511 = vrot.lane.b32.xlu0 %v4350, 80
      %v4512 = vpop.permute.xlu0 %4511
      %4513 = vrot.lane.b32.xlu0 %v4362, 80
      %v4514 = vpop.permute.xlu0 %4513
      %4515 = vrot.lane.b32.xlu0 %v4374, 80
      %v4516 = vpop.permute.xlu0 %4515
      %4517 = vrot.lane.b32.xlu0 %v4386, 80
      %v4518 = vpop.permute.xlu0 %4517
      %4519 = vrot.lane.b32.xlu0 %v4398, 80
      %v4520 = vpop.permute.xlu0 %4519
      %4521 = vrot.lane.b32.xlu0 %v4410, 80
      %v4522 = vpop.permute.xlu0 %4521
      %4523 = vrot.lane.b32.xlu0 %v4422, 80
      %v4524 = vpop.permute.xlu0 %4523
      %4525 = vrot.lane.b32.xlu0 %v4434, 80
      %v4526 = vpop.permute.xlu0 %4525
      %4527 = vrot.lane.b32.xlu0 %v4446, 80
      %v4528 = vpop.permute.xlu0 %4527
      %4529 = vrot.lane.b32.xlu0 %v4458, 80
      %v4530 = vpop.permute.xlu0 %4529
      %4531 = vrot.lane.b32.xlu0 %v4470, 80
      %v4532 = vpop.permute.xlu0 %4531
      %4533 = vrot.lane.b32.xlu0 %v4482, 80
      %v4534 = vpop.permute.xlu0 %4533
      %4535 = vrot.lane.b32.xlu0 %v4494, 80
      %v4536 = vpop.permute.xlu0 %4535
      %4537 = vrot.lane.b32.xlu0 %v4506, 80
      %v4538 = vpop.permute.xlu0 %4537
      %vm4555 = vcmask 720512
      %4556 = vst.msk [vmem:[#allocation4] sm:$0xff] %vm4555, %v4508
      %4557 = vst.msk [vmem:[#allocation4 + $0x10] sm:$0xff] %vm4555, %v4510
      %4558 = vst.msk [vmem:[#allocation4 + $0x20] sm:$0xff] %vm4555, %v4512
      %4559 = vst.msk [vmem:[#allocation4 + $0x30] sm:$0xff] %vm4555, %v4514
      %4560 = vst.msk [vmem:[#allocation4 + $0x40] sm:$0xff] %vm4555, %v4516
      %4561 = vst.msk [vmem:[#allocation4 + $0x50] sm:$0xff] %vm4555, %v4518
      %4562 = vst.msk [vmem:[#allocation4 + $0x60] sm:$0xff] %vm4555, %v4520
      %4563 = vst.msk [vmem:[#allocation4 + $0x70] sm:$0xff] %vm4555, %v4522
      %4564 = vst.msk [vmem:[#allocation4 + $0x80] sm:$0xff] %vm4555, %v4524
      %4565 = vst.msk [vmem:[#allocation4 + $0x90] sm:$0xff] %vm4555, %v4526
      %4566 = vst.msk [vmem:[#allocation4 + $0xa0] sm:$0xff] %vm4555, %v4528
      %4567 = vst.msk [vmem:[#allocation4 + $0xb0] sm:$0xff] %vm4555, %v4530
      %4568 = vst.msk [vmem:[#allocation4 + $0xc0] sm:$0xff] %vm4555, %v4532
      %4569 = vst.msk [vmem:[#allocation4 + $0xd0] sm:$0xff] %vm4555, %v4534
      %4570 = vst.msk [vmem:[#allocation4 + $0xe0] sm:$0xff] %vm4555, %v4536
      %4571 = vst.msk [vmem:[#allocation4 + $0xf0] sm:$0xff] %vm4555, %v4538
      %v4572 = vld [vmem:[#allocation3] sm:$0xe]
      %v4573 = vld [vmem:[#allocation3 + $0x4] sm:$0xf]
      %v4574 = vld [vmem:[#allocation3 + $0x8] sm:$0x1]
      %v4575 = vld [vmem:[#allocation3 + $0xc] sm:$0xe]
      %v4576 = vld [vmem:[#allocation3 + $0x10] sm:$0xf]
      %v4577 = vld [vmem:[#allocation3 + $0x14] sm:$0x1]
      %v4578 = vld [vmem:[#allocation3 + $0x18] sm:$0xe]
      %v4579 = vld [vmem:[#allocation3 + $0x1c] sm:$0xf]
      %v4580 = vld [vmem:[#allocation3 + $0x20] sm:$0x1]
      %v4581 = vld [vmem:[#allocation3 + $0x24] sm:$0xe]
      %v4582 = vld [vmem:[#allocation3 + $0x28] sm:$0xf]
      %v4583 = vld [vmem:[#allocation3 + $0x2c] sm:$0x1]
      %v4584 = vld [vmem:[#allocation3 + $0x30] sm:$0xe]
      %v4585 = vld [vmem:[#allocation3 + $0x34] sm:$0xf]
      %v4586 = vld [vmem:[#allocation3 + $0x38] sm:$0x1]
      %v4587 = vld [vmem:[#allocation3 + $0x3c] sm:$0xe]
      %v4588 = vld [vmem:[#allocation3 + $0x40] sm:$0xf]
      %v4589 = vld [vmem:[#allocation3 + $0x44] sm:$0x1]
      %v4590 = vld [vmem:[#allocation3 + $0x48] sm:$0xe]
      %v4591 = vld [vmem:[#allocation3 + $0x4c] sm:$0xf]
      %v4592 = vld [vmem:[#allocation3 + $0x50] sm:$0x1]
      %v4593 = vld [vmem:[#allocation3 + $0x54] sm:$0xe]
      %v4594 = vld [vmem:[#allocation3 + $0x58] sm:$0xf]
      %v4595 = vld [vmem:[#allocation3 + $0x5c] sm:$0x1]
      %v4596 = vld [vmem:[#allocation3 + $0x60] sm:$0xe]
      %v4597 = vld [vmem:[#allocation3 + $0x64] sm:$0xf]
      %v4598 = vld [vmem:[#allocation3 + $0x68] sm:$0x1]
      %v4599 = vld [vmem:[#allocation3 + $0x6c] sm:$0xe]
      %v4600 = vld [vmem:[#allocation3 + $0x70] sm:$0xf]
      %v4601 = vld [vmem:[#allocation3 + $0x74] sm:$0x1]
      %v4602 = vld [vmem:[#allocation3 + $0x78] sm:$0xe]
      %v4603 = vld [vmem:[#allocation3 + $0x7c] sm:$0xf]
      %v4604 = vld [vmem:[#allocation3 + $0x80] sm:$0x1]
      %v4605 = vld [vmem:[#allocation3 + $0x84] sm:$0xe]
      %v4606 = vld [vmem:[#allocation3 + $0x88] sm:$0xf]
      %v4607 = vld [vmem:[#allocation3 + $0x8c] sm:$0x1]
      %v4608 = vld [vmem:[#allocation3 + $0x90] sm:$0xe]
      %v4609 = vld [vmem:[#allocation3 + $0x94] sm:$0xf]
      %v4610 = vld [vmem:[#allocation3 + $0x98] sm:$0x1]
      %v4611 = vld [vmem:[#allocation3 + $0x9c] sm:$0xe]
      %v4612 = vld [vmem:[#allocation3 + $0xa0] sm:$0xf]
      %v4613 = vld [vmem:[#allocation3 + $0xa4] sm:$0x1]
      %v4614 = vld [vmem:[#allocation3 + $0xa8] sm:$0xe]
      %v4615 = vld [vmem:[#allocation3 + $0xac] sm:$0xf]
      %v4616 = vld [vmem:[#allocation3 + $0xb0] sm:$0x1]
      %v4617 = vld [vmem:[#allocation3 + $0xb4] sm:$0xe]
      %v4618 = vld [vmem:[#allocation3 + $0xb8] sm:$0xf]
      %v4619 = vld [vmem:[#allocation3 + $0xbc] sm:$0x1]
      %v4668 = vunpack.c.l.b16 %v4572
      %v4669 = vunpack.c.l.b16 %v4573
      %v4670 = vunpack.c.l.b16 %v4574
      %v4671 = vunpack.c.l.b16 %v4575
      %v4672 = vunpack.c.l.b16 %v4576
      %v4673 = vunpack.c.l.b16 %v4577
      %v4674 = vunpack.c.l.b16 %v4578
      %v4675 = vunpack.c.l.b16 %v4579
      %v4676 = vunpack.c.l.b16 %v4580
      %v4677 = vunpack.c.l.b16 %v4581
      %v4678 = vunpack.c.l.b16 %v4582
      %v4679 = vunpack.c.l.b16 %v4583
      %v4680 = vunpack.c.l.b16 %v4584
      %v4681 = vunpack.c.l.b16 %v4585
      %v4682 = vunpack.c.l.b16 %v4586
      %v4683 = vunpack.c.l.b16 %v4587
      %v4684 = vunpack.c.l.b16 %v4588
      %v4685 = vunpack.c.l.b16 %v4589
      %v4686 = vunpack.c.l.b16 %v4590
      %v4687 = vunpack.c.l.b16 %v4591
      %v4688 = vunpack.c.l.b16 %v4592
      %v4689 = vunpack.c.l.b16 %v4593
      %v4690 = vunpack.c.l.b16 %v4594
      %v4691 = vunpack.c.l.b16 %v4595
      %v4692 = vunpack.c.l.b16 %v4596
      %v4693 = vunpack.c.l.b16 %v4597
      %v4694 = vunpack.c.l.b16 %v4598
      %v4695 = vunpack.c.l.b16 %v4599
      %v4696 = vunpack.c.l.b16 %v4600
      %v4697 = vunpack.c.l.b16 %v4601
      %v4698 = vunpack.c.l.b16 %v4602
      %v4699 = vunpack.c.l.b16 %v4603
      %v4700 = vunpack.c.l.b16 %v4604
      %v4701 = vunpack.c.l.b16 %v4605
      %v4702 = vunpack.c.l.b16 %v4606
      %v4703 = vunpack.c.l.b16 %v4607
      %v4704 = vunpack.c.l.b16 %v4608
      %v4705 = vunpack.c.l.b16 %v4609
      %v4706 = vunpack.c.l.b16 %v4610
      %v4707 = vunpack.c.l.b16 %v4611
      %v4708 = vunpack.c.l.b16 %v4612
      %v4709 = vunpack.c.l.b16 %v4613
      %v4710 = vunpack.c.l.b16 %v4614
      %v4711 = vunpack.c.l.b16 %v4615
      %v4712 = vunpack.c.l.b16 %v4616
      %v4713 = vunpack.c.l.b16 %v4617
      %v4714 = vunpack.c.l.b16 %v4618
      %v4715 = vunpack.c.l.b16 %v4619
      %v4716 = vpack.c.b16 %v4669, %v4668
      %v4717 = vpack.c.b16 %v4670, %v4670
      %v4718 = vpack.c.b16 %v4672, %v4671
      %v4719 = vpack.c.b16 %v4673, %v4673
      %v4720 = vpack.c.b16 %v4675, %v4674
      %v4721 = vpack.c.b16 %v4676, %v4676
      %v4722 = vpack.c.b16 %v4678, %v4677
      %v4723 = vpack.c.b16 %v4679, %v4679
      %v4724 = vpack.c.b16 %v4681, %v4680
      %v4725 = vpack.c.b16 %v4682, %v4682
      %v4726 = vpack.c.b16 %v4684, %v4683
      %v4727 = vpack.c.b16 %v4685, %v4685
      %v4728 = vpack.c.b16 %v4687, %v4686
      %v4729 = vpack.c.b16 %v4688, %v4688
      %v4730 = vpack.c.b16 %v4690, %v4689
      %v4731 = vpack.c.b16 %v4691, %v4691
      %v4732 = vpack.c.b16 %v4693, %v4692
      %v4733 = vpack.c.b16 %v4694, %v4694
      %v4734 = vpack.c.b16 %v4696, %v4695
      %v4735 = vpack.c.b16 %v4697, %v4697
      %v4736 = vpack.c.b16 %v4699, %v4698
      %v4737 = vpack.c.b16 %v4700, %v4700
      %v4738 = vpack.c.b16 %v4702, %v4701
      %v4739 = vpack.c.b16 %v4703, %v4703
      %v4740 = vpack.c.b16 %v4705, %v4704
      %v4741 = vpack.c.b16 %v4706, %v4706
      %v4742 = vpack.c.b16 %v4708, %v4707
      %v4743 = vpack.c.b16 %v4709, %v4709
      %v4744 = vpack.c.b16 %v4711, %v4710
      %v4745 = vpack.c.b16 %v4712, %v4712
      %v4746 = vpack.c.b16 %v4714, %v4713
      %v4747 = vpack.c.b16 %v4715, %v4715
      %v4748 = vrot.slane %v4716, 1
      %v4749 = vrot.slane %v4717, 1
      %v4750 = vsel %vm2049, %v4748, %v4749
      %v4751 = vrot.slane %v4718, 1
      %v4752 = vrot.slane %v4719, 1
      %v4753 = vsel %vm2049, %v4751, %v4752
      %v4754 = vrot.slane %v4720, 1
      %v4755 = vrot.slane %v4721, 1
      %v4756 = vsel %vm2049, %v4754, %v4755
      %v4757 = vrot.slane %v4722, 1
      %v4758 = vrot.slane %v4723, 1
      %v4759 = vsel %vm2049, %v4757, %v4758
      %v4760 = vrot.slane %v4724, 1
      %v4761 = vrot.slane %v4725, 1
      %v4762 = vsel %vm2049, %v4760, %v4761
      %v4763 = vrot.slane %v4726, 1
      %v4764 = vrot.slane %v4727, 1
      %v4765 = vsel %vm2049, %v4763, %v4764
      %v4766 = vrot.slane %v4728, 1
      %v4767 = vrot.slane %v4729, 1
      %v4768 = vsel %vm2049, %v4766, %v4767
      %v4769 = vrot.slane %v4730, 1
      %v4770 = vrot.slane %v4731, 1
      %v4771 = vsel %vm2049, %v4769, %v4770
      %v4772 = vrot.slane %v4732, 1
      %v4773 = vrot.slane %v4733, 1
      %v4774 = vsel %vm2049, %v4772, %v4773
      %v4775 = vrot.slane %v4734, 1
      %v4776 = vrot.slane %v4735, 1
      %v4777 = vsel %vm2049, %v4775, %v4776
      %v4778 = vrot.slane %v4736, 1
      %v4779 = vrot.slane %v4737, 1
      %v4780 = vsel %vm2049, %v4778, %v4779
      %v4781 = vrot.slane %v4738, 1
      %v4782 = vrot.slane %v4739, 1
      %v4783 = vsel %vm2049, %v4781, %v4782
      %v4784 = vrot.slane %v4740, 1
      %v4785 = vrot.slane %v4741, 1
      %v4786 = vsel %vm2049, %v4784, %v4785
      %v4787 = vrot.slane %v4742, 1
      %v4788 = vrot.slane %v4743, 1
      %v4789 = vsel %vm2049, %v4787, %v4788
      %v4790 = vrot.slane %v4744, 1
      %v4791 = vrot.slane %v4745, 1
      %v4792 = vsel %vm2049, %v4790, %v4791
      %v4793 = vrot.slane %v4746, 1
      %v4794 = vrot.slane %v4747, 1
      %v4795 = vsel %vm2049, %v4793, %v4794
      %4796 = vrot.lane.b32.xlu0 %v4750, 88
      %v4797 = vpop.permute.xlu0 %4796
      %4798 = vrot.lane.b32.xlu0 %v4753, 88
      %v4799 = vpop.permute.xlu0 %4798
      %4800 = vrot.lane.b32.xlu0 %v4756, 88
      %v4801 = vpop.permute.xlu0 %4800
      %4802 = vrot.lane.b32.xlu0 %v4759, 88
      %v4803 = vpop.permute.xlu0 %4802
      %4804 = vrot.lane.b32.xlu0 %v4762, 88
      %v4805 = vpop.permute.xlu0 %4804
      %4806 = vrot.lane.b32.xlu0 %v4765, 88
      %v4807 = vpop.permute.xlu0 %4806
      %4808 = vrot.lane.b32.xlu0 %v4768, 88
      %v4809 = vpop.permute.xlu0 %4808
      %4810 = vrot.lane.b32.xlu0 %v4771, 88
      %v4811 = vpop.permute.xlu0 %4810
      %4812 = vrot.lane.b32.xlu0 %v4774, 88
      %v4813 = vpop.permute.xlu0 %4812
      %4814 = vrot.lane.b32.xlu0 %v4777, 88
      %v4815 = vpop.permute.xlu0 %4814
      %4816 = vrot.lane.b32.xlu0 %v4780, 88
      %v4817 = vpop.permute.xlu0 %4816
      %4818 = vrot.lane.b32.xlu0 %v4783, 88
      %v4819 = vpop.permute.xlu0 %4818
      %4820 = vrot.lane.b32.xlu0 %v4786, 88
      %v4821 = vpop.permute.xlu0 %4820
      %4822 = vrot.lane.b32.xlu0 %v4789, 88
      %v4823 = vpop.permute.xlu0 %4822
      %4824 = vrot.lane.b32.xlu0 %v4792, 88
      %v4825 = vpop.permute.xlu0 %4824
      %4826 = vrot.lane.b32.xlu0 %v4795, 88
      %v4827 = vpop.permute.xlu0 %4826
      %vm4844 = vcmask 786112
      %4845 = vst.msk [vmem:[#allocation4] sm:$0xff] %vm4844, %v4797
      %4846 = vst.msk [vmem:[#allocation4 + $0x10] sm:$0xff] %vm4844, %v4799
      %4847 = vst.msk [vmem:[#allocation4 + $0x20] sm:$0xff] %vm4844, %v4801
      %4848 = vst.msk [vmem:[#allocation4 + $0x30] sm:$0xff] %vm4844, %v4803
      %4849 = vst.msk [vmem:[#allocation4 + $0x40] sm:$0xff] %vm4844, %v4805
      %4850 = vst.msk [vmem:[#allocation4 + $0x50] sm:$0xff] %vm4844, %v4807
      %4851 = vst.msk [vmem:[#allocation4 + $0x60] sm:$0xff] %vm4844, %v4809
      %4852 = vst.msk [vmem:[#allocation4 + $0x70] sm:$0xff] %vm4844, %v4811
      %4853 = vst.msk [vmem:[#allocation4 + $0x80] sm:$0xff] %vm4844, %v4813
      %4854 = vst.msk [vmem:[#allocation4 + $0x90] sm:$0xff] %vm4844, %v4815
      %4855 = vst.msk [vmem:[#allocation4 + $0xa0] sm:$0xff] %vm4844, %v4817
      %4856 = vst.msk [vmem:[#allocation4 + $0xb0] sm:$0xff] %vm4844, %v4819
      %4857 = vst.msk [vmem:[#allocation4 + $0xc0] sm:$0xff] %vm4844, %v4821
      %4858 = vst.msk [vmem:[#allocation4 + $0xd0] sm:$0xff] %vm4844, %v4823
      %4859 = vst.msk [vmem:[#allocation4 + $0xe0] sm:$0xff] %vm4844, %v4825
      %4860 = vst.msk [vmem:[#allocation4 + $0xf0] sm:$0xff] %vm4844, %v4827
      %v4861 = vld [vmem:[%s1181] sm:$0xf]
      %v4862 = vld [vmem:[%s1181 + $0x4] sm:$0xf]
      %v4863 = vld [vmem:[%s1181 + $0xc] sm:$0xf]
      %v4864 = vld [vmem:[%s1181 + $0x10] sm:$0xf]
      %v4865 = vld [vmem:[%s1181 + $0x18] sm:$0xf]
      %v4866 = vld [vmem:[%s1181 + $0x1c] sm:$0xf]
      %v4867 = vld [vmem:[%s1181 + $0x24] sm:$0xf]
      %v4868 = vld [vmem:[%s1181 + $0x28] sm:$0xf]
      %v4869 = vld [vmem:[%s1181 + $0x30] sm:$0xf]
      %v4870 = vld [vmem:[%s1181 + $0x34] sm:$0xf]
      %v4871 = vld [vmem:[%s1181 + $0x3c] sm:$0xf]
      %v4872 = vld [vmem:[%s1181 + $0x40] sm:$0xf]
      %v4873 = vld [vmem:[%s1181 + $0x48] sm:$0xf]
      %v4874 = vld [vmem:[%s1181 + $0x4c] sm:$0xf]
      %v4875 = vld [vmem:[%s1181 + $0x54] sm:$0xf]
      %v4876 = vld [vmem:[%s1181 + $0x58] sm:$0xf]
      %v4877 = vld [vmem:[%s1181 + $0x60] sm:$0xf]
      %v4878 = vld [vmem:[%s1181 + $0x64] sm:$0xf]
      %v4879 = vld [vmem:[%s1181 + $0x6c] sm:$0xf]
      %v4880 = vld [vmem:[%s1181 + $0x70] sm:$0xf]
      %v4881 = vld [vmem:[%s1181 + $0x78] sm:$0xf]
      %v4882 = vld [vmem:[%s1181 + $0x7c] sm:$0xf]
      %v4883 = vld [vmem:[%s1181 + $0x84] sm:$0xf]
      %v4884 = vld [vmem:[%s1181 + $0x88] sm:$0xf]
      %v4885 = vld [vmem:[%s1181 + $0x90] sm:$0xf]
      %v4886 = vld [vmem:[%s1181 + $0x94] sm:$0xf]
      %v4887 = vld [vmem:[%s1181 + $0x9c] sm:$0xf]
      %v4888 = vld [vmem:[%s1181 + $0xa0] sm:$0xf]
      %v4889 = vld [vmem:[%s1181 + $0xa8] sm:$0xf]
      %v4890 = vld [vmem:[%s1181 + $0xac] sm:$0xf]
      %v4891 = vld [vmem:[%s1181 + $0xb4] sm:$0xf]
      %v4892 = vld [vmem:[%s1181 + $0xb8] sm:$0xf]
      %v4925 = vunpack.c.l.b16 %v4861
      %v4926 = vunpack.c.l.b16 %v4862
      %v4927 = vunpack.c.l.b16 %v4863
      %v4928 = vunpack.c.l.b16 %v4864
      %v4929 = vunpack.c.l.b16 %v4865
      %v4930 = vunpack.c.l.b16 %v4866
      %v4931 = vunpack.c.l.b16 %v4867
      %v4932 = vunpack.c.l.b16 %v4868
      %v4933 = vunpack.c.l.b16 %v4869
      %v4934 = vunpack.c.l.b16 %v4870
      %v4935 = vunpack.c.l.b16 %v4871
      %v4936 = vunpack.c.l.b16 %v4872
      %v4937 = vunpack.c.l.b16 %v4873
      %v4938 = vunpack.c.l.b16 %v4874
      %v4939 = vunpack.c.l.b16 %v4875
      %v4940 = vunpack.c.l.b16 %v4876
      %v4941 = vunpack.c.l.b16 %v4877
      %v4942 = vunpack.c.l.b16 %v4878
      %v4943 = vunpack.c.l.b16 %v4879
      %v4944 = vunpack.c.l.b16 %v4880
      %v4945 = vunpack.c.l.b16 %v4881
      %v4946 = vunpack.c.l.b16 %v4882
      %v4947 = vunpack.c.l.b16 %v4883
      %v4948 = vunpack.c.l.b16 %v4884
      %v4949 = vunpack.c.l.b16 %v4885
      %v4950 = vunpack.c.l.b16 %v4886
      %v4951 = vunpack.c.l.b16 %v4887
      %v4952 = vunpack.c.l.b16 %v4888
      %v4953 = vunpack.c.l.b16 %v4889
      %v4954 = vunpack.c.l.b16 %v4890
      %v4955 = vunpack.c.l.b16 %v4891
      %v4956 = vunpack.c.l.b16 %v4892
      %v4957 = vpack.c.b16 %v4926, %v4925
      %v4958 = vpack.c.b16 %v4928, %v4927
      %v4959 = vpack.c.b16 %v4930, %v4929
      %v4960 = vpack.c.b16 %v4932, %v4931
      %v4961 = vpack.c.b16 %v4934, %v4933
      %v4962 = vpack.c.b16 %v4936, %v4935
      %v4963 = vpack.c.b16 %v4938, %v4937
      %v4964 = vpack.c.b16 %v4940, %v4939
      %v4965 = vpack.c.b16 %v4942, %v4941
      %v4966 = vpack.c.b16 %v4944, %v4943
      %v4967 = vpack.c.b16 %v4946, %v4945
      %v4968 = vpack.c.b16 %v4948, %v4947
      %v4969 = vpack.c.b16 %v4950, %v4949
      %v4970 = vpack.c.b16 %v4952, %v4951
      %v4971 = vpack.c.b16 %v4954, %v4953
      %v4972 = vpack.c.b16 %v4956, %v4955
      %4973 = vrot.lane.b32.xlu0 %v4957, 96
      %v4974 = vpop.permute.xlu0 %4973
      %4975 = vrot.lane.b32.xlu0 %v4958, 96
      %v4976 = vpop.permute.xlu0 %4975
      %4977 = vrot.lane.b32.xlu0 %v4959, 96
      %v4978 = vpop.permute.xlu0 %4977
      %4979 = vrot.lane.b32.xlu0 %v4960, 96
      %v4980 = vpop.permute.xlu0 %4979
      %4981 = vrot.lane.b32.xlu0 %v4961, 96
      %v4982 = vpop.permute.xlu0 %4981
      %4983 = vrot.lane.b32.xlu0 %v4962, 96
      %v4984 = vpop.permute.xlu0 %4983
      %4985 = vrot.lane.b32.xlu0 %v4963, 96
      %v4986 = vpop.permute.xlu0 %4985
      %4987 = vrot.lane.b32.xlu0 %v4964, 96
      %v4988 = vpop.permute.xlu0 %4987
      %4989 = vrot.lane.b32.xlu0 %v4965, 96
      %v4990 = vpop.permute.xlu0 %4989
      %4991 = vrot.lane.b32.xlu0 %v4966, 96
      %v4992 = vpop.permute.xlu0 %4991
      %4993 = vrot.lane.b32.xlu0 %v4967, 96
      %v4994 = vpop.permute.xlu0 %4993
      %4995 = vrot.lane.b32.xlu0 %v4968, 96
      %v4996 = vpop.permute.xlu0 %4995
      %4997 = vrot.lane.b32.xlu0 %v4969, 96
      %v4998 = vpop.permute.xlu0 %4997
      %4999 = vrot.lane.b32.xlu0 %v4970, 96
      %v5000 = vpop.permute.xlu0 %4999
      %5001 = vrot.lane.b32.xlu0 %v4971, 96
      %v5002 = vpop.permute.xlu0 %5001
      %5003 = vrot.lane.b32.xlu0 %v4972, 96
      %v5004 = vpop.permute.xlu0 %5003
      %vm5021 = vcmask 851712
      %5022 = vst.msk [vmem:[#allocation4] sm:$0xff] %vm5021, %v4974
      %5023 = vst.msk [vmem:[#allocation4 + $0x10] sm:$0xff] %vm5021, %v4976
      %5024 = vst.msk [vmem:[#allocation4 + $0x20] sm:$0xff] %vm5021, %v4978
      %5025 = vst.msk [vmem:[#allocation4 + $0x30] sm:$0xff] %vm5021, %v4980
      %5026 = vst.msk [vmem:[#allocation4 + $0x40] sm:$0xff] %vm5021, %v4982
      %5027 = vst.msk [vmem:[#allocation4 + $0x50] sm:$0xff] %vm5021, %v4984
      %5028 = vst.msk [vmem:[#allocation4 + $0x60] sm:$0xff] %vm5021, %v4986
      %5029 = vst.msk [vmem:[#allocation4 + $0x70] sm:$0xff] %vm5021, %v4988
      %5030 = vst.msk [vmem:[#allocation4 + $0x80] sm:$0xff] %vm5021, %v4990
      %5031 = vst.msk [vmem:[#allocation4 + $0x90] sm:$0xff] %vm5021, %v4992
      %5032 = vst.msk [vmem:[#allocation4 + $0xa0] sm:$0xff] %vm5021, %v4994
      %5033 = vst.msk [vmem:[#allocation4 + $0xb0] sm:$0xff] %vm5021, %v4996
      %5034 = vst.msk [vmem:[#allocation4 + $0xc0] sm:$0xff] %vm5021, %v4998
      %5035 = vst.msk [vmem:[#allocation4 + $0xd0] sm:$0xff] %vm5021, %v5000
      %5036 = vst.msk [vmem:[#allocation4 + $0xe0] sm:$0xff] %vm5021, %v5002
      %5037 = vst.msk [vmem:[#allocation4 + $0xf0] sm:$0xff] %vm5021, %v5004
      %v5038 = vld [vmem:[%s1181] sm:$0xf]
      %v5039 = vld [vmem:[%s1181 + $0x4] sm:$0xf]
      %v5040 = vld [vmem:[%s1181 + $0x8] sm:$0x1]
      %v5041 = vld [vmem:[%s1181 + $0xc] sm:$0xf]
      %v5042 = vld [vmem:[%s1181 + $0x10] sm:$0xf]
      %v5043 = vld [vmem:[%s1181 + $0x14] sm:$0x1]
      %v5044 = vld [vmem:[%s1181 + $0x18] sm:$0xf]
      %v5045 = vld [vmem:[%s1181 + $0x1c] sm:$0xf]
      %v5046 = vld [vmem:[%s1181 + $0x20] sm:$0x1]
      %v5047 = vld [vmem:[%s1181 + $0x24] sm:$0xf]
      %v5048 = vld [vmem:[%s1181 + $0x28] sm:$0xf]
      %v5049 = vld [vmem:[%s1181 + $0x2c] sm:$0x1]
      %v5050 = vld [vmem:[%s1181 + $0x30] sm:$0xf]
      %v5051 = vld [vmem:[%s1181 + $0x34] sm:$0xf]
      %v5052 = vld [vmem:[%s1181 + $0x38] sm:$0x1]
      %v5053 = vld [vmem:[%s1181 + $0x3c] sm:$0xf]
      %v5054 = vld [vmem:[%s1181 + $0x40] sm:$0xf]
      %v5055 = vld [vmem:[%s1181 + $0x44] sm:$0x1]
      %v5056 = vld [vmem:[%s1181 + $0x48] sm:$0xf]
      %v5057 = vld [vmem:[%s1181 + $0x4c] sm:$0xf]
      %v5058 = vld [vmem:[%s1181 + $0x50] sm:$0x1]
      %v5059 = vld [vmem:[%s1181 + $0x54] sm:$0xf]
      %v5060 = vld [vmem:[%s1181 + $0x58] sm:$0xf]
      %v5061 = vld [vmem:[%s1181 + $0x5c] sm:$0x1]
      %v5062 = vld [vmem:[%s1181 + $0x60] sm:$0xf]
      %v5063 = vld [vmem:[%s1181 + $0x64] sm:$0xf]
      %v5064 = vld [vmem:[%s1181 + $0x68] sm:$0x1]
      %v5065 = vld [vmem:[%s1181 + $0x6c] sm:$0xf]
      %v5066 = vld [vmem:[%s1181 + $0x70] sm:$0xf]
      %v5067 = vld [vmem:[%s1181 + $0x74] sm:$0x1]
      %v5068 = vld [vmem:[%s1181 + $0x78] sm:$0xf]
      %v5069 = vld [vmem:[%s1181 + $0x7c] sm:$0xf]
      %v5070 = vld [vmem:[%s1181 + $0x80] sm:$0x1]
      %v5071 = vld [vmem:[%s1181 + $0x84] sm:$0xf]
      %v5072 = vld [vmem:[%s1181 + $0x88] sm:$0xf]
      %v5073 = vld [vmem:[%s1181 + $0x8c] sm:$0x1]
      %v5074 = vld [vmem:[%s1181 + $0x90] sm:$0xf]
      %v5075 = vld [vmem:[%s1181 + $0x94] sm:$0xf]
      %v5076 = vld [vmem:[%s1181 + $0x98] sm:$0x1]
      %v5077 = vld [vmem:[%s1181 + $0x9c] sm:$0xf]
      %v5078 = vld [vmem:[%s1181 + $0xa0] sm:$0xf]
      %v5079 = vld [vmem:[%s1181 + $0xa4] sm:$0x1]
      %v5080 = vld [vmem:[%s1181 + $0xa8] sm:$0xf]
      %v5081 = vld [vmem:[%s1181 + $0xac] sm:$0xf]
      %v5082 = vld [vmem:[%s1181 + $0xb0] sm:$0x1]
      %v5083 = vld [vmem:[%s1181 + $0xb4] sm:$0xf]
      %v5084 = vld [vmem:[%s1181 + $0xb8] sm:$0xf]
      %v5085 = vld [vmem:[%s1181 + $0xbc] sm:$0x1]
      %v5134 = vunpack.c.l.b16 %v5038
      %v5135 = vunpack.c.l.b16 %v5039
      %v5136 = vunpack.c.l.b16 %v5040
      %v5137 = vunpack.c.l.b16 %v5041
      %v5138 = vunpack.c.l.b16 %v5042
      %v5139 = vunpack.c.l.b16 %v5043
      %v5140 = vunpack.c.l.b16 %v5044
      %v5141 = vunpack.c.l.b16 %v5045
      %v5142 = vunpack.c.l.b16 %v5046
      %v5143 = vunpack.c.l.b16 %v5047
      %v5144 = vunpack.c.l.b16 %v5048
      %v5145 = vunpack.c.l.b16 %v5049
      %v5146 = vunpack.c.l.b16 %v5050
      %v5147 = vunpack.c.l.b16 %v5051
      %v5148 = vunpack.c.l.b16 %v5052
      %v5149 = vunpack.c.l.b16 %v5053
      %v5150 = vunpack.c.l.b16 %v5054
      %v5151 = vunpack.c.l.b16 %v5055
      %v5152 = vunpack.c.l.b16 %v5056
      %v5153 = vunpack.c.l.b16 %v5057
      %v5154 = vunpack.c.l.b16 %v5058
      %v5155 = vunpack.c.l.b16 %v5059
      %v5156 = vunpack.c.l.b16 %v5060
      %v5157 = vunpack.c.l.b16 %v5061
      %v5158 = vunpack.c.l.b16 %v5062
      %v5159 = vunpack.c.l.b16 %v5063
      %v5160 = vunpack.c.l.b16 %v5064
      %v5161 = vunpack.c.l.b16 %v5065
      %v5162 = vunpack.c.l.b16 %v5066
      %v5163 = vunpack.c.l.b16 %v5067
      %v5164 = vunpack.c.l.b16 %v5068
      %v5165 = vunpack.c.l.b16 %v5069
      %v5166 = vunpack.c.l.b16 %v5070
      %v5167 = vunpack.c.l.b16 %v5071
      %v5168 = vunpack.c.l.b16 %v5072
      %v5169 = vunpack.c.l.b16 %v5073
      %v5170 = vunpack.c.l.b16 %v5074
      %v5171 = vunpack.c.l.b16 %v5075
      %v5172 = vunpack.c.l.b16 %v5076
      %v5173 = vunpack.c.l.b16 %v5077
      %v5174 = vunpack.c.l.b16 %v5078
      %v5175 = vunpack.c.l.b16 %v5079
      %v5176 = vunpack.c.l.b16 %v5080
      %v5177 = vunpack.c.l.b16 %v5081
      %v5178 = vunpack.c.l.b16 %v5082
      %v5179 = vunpack.c.l.b16 %v5083
      %v5180 = vunpack.c.l.b16 %v5084
      %v5181 = vunpack.c.l.b16 %v5085
      %v5182 = vpack.c.b16 %v5135, %v5134
      %v5183 = vpack.c.b16 %v5136, %v5136
      %v5184 = vpack.c.b16 %v5138, %v5137
      %v5185 = vpack.c.b16 %v5139, %v5139
      %v5186 = vpack.c.b16 %v5141, %v5140
      %v5187 = vpack.c.b16 %v5142, %v5142
      %v5188 = vpack.c.b16 %v5144, %v5143
      %v5189 = vpack.c.b16 %v5145, %v5145
      %v5190 = vpack.c.b16 %v5147, %v5146
      %v5191 = vpack.c.b16 %v5148, %v5148
      %v5192 = vpack.c.b16 %v5150, %v5149
      %v5193 = vpack.c.b16 %v5151, %v5151
      %v5194 = vpack.c.b16 %v5153, %v5152
      %v5195 = vpack.c.b16 %v5154, %v5154
      %v5196 = vpack.c.b16 %v5156, %v5155
      %v5197 = vpack.c.b16 %v5157, %v5157
      %v5198 = vpack.c.b16 %v5159, %v5158
      %v5199 = vpack.c.b16 %v5160, %v5160
      %v5200 = vpack.c.b16 %v5162, %v5161
      %v5201 = vpack.c.b16 %v5163, %v5163
      %v5202 = vpack.c.b16 %v5165, %v5164
      %v5203 = vpack.c.b16 %v5166, %v5166
      %v5204 = vpack.c.b16 %v5168, %v5167
      %v5205 = vpack.c.b16 %v5169, %v5169
      %v5206 = vpack.c.b16 %v5171, %v5170
      %v5207 = vpack.c.b16 %v5172, %v5172
      %v5208 = vpack.c.b16 %v5174, %v5173
      %v5209 = vpack.c.b16 %v5175, %v5175
      %v5210 = vpack.c.b16 %v5177, %v5176
      %v5211 = vpack.c.b16 %v5178, %v5178
      %v5212 = vpack.c.b16 %v5180, %v5179
      %v5213 = vpack.c.b16 %v5181, %v5181
      %v5215 = vshrl.u32 %v5182, 16
      %v5217 = vshll.u32 %v5182, 16
      %v5219 = vrot.slane %v5217, 1
      %v5220 = vor.u32 %v5215, %v5219
      %v5222 = vshll.u32 %v5183, 16
      %v5224 = vrot.slane %v5222, 1
      %v5225 = vsel %vm1615, %v5220, %v5224
      %v5227 = vshrl.u32 %v5184, 16
      %v5229 = vshll.u32 %v5184, 16
      %v5231 = vrot.slane %v5229, 1
      %v5232 = vor.u32 %v5227, %v5231
      %v5234 = vshll.u32 %v5185, 16
      %v5236 = vrot.slane %v5234, 1
      %v5237 = vsel %vm1615, %v5232, %v5236
      %v5239 = vshrl.u32 %v5186, 16
      %v5241 = vshll.u32 %v5186, 16
      %v5243 = vrot.slane %v5241, 1
      %v5244 = vor.u32 %v5239, %v5243
      %v5246 = vshll.u32 %v5187, 16
      %v5248 = vrot.slane %v5246, 1
      %v5249 = vsel %vm1615, %v5244, %v5248
      %v5251 = vshrl.u32 %v5188, 16
      %v5253 = vshll.u32 %v5188, 16
      %v5255 = vrot.slane %v5253, 1
      %v5256 = vor.u32 %v5251, %v5255
      %v5258 = vshll.u32 %v5189, 16
      %v5260 = vrot.slane %v5258, 1
      %v5261 = vsel %vm1615, %v5256, %v5260
      %v5263 = vshrl.u32 %v5190, 16
      %v5265 = vshll.u32 %v5190, 16
      %v5267 = vrot.slane %v5265, 1
      %v5268 = vor.u32 %v5263, %v5267
      %v5270 = vshll.u32 %v5191, 16
      %v5272 = vrot.slane %v5270, 1
      %v5273 = vsel %vm1615, %v5268, %v5272
      %v5275 = vshrl.u32 %v5192, 16
      %v5277 = vshll.u32 %v5192, 16
      %v5279 = vrot.slane %v5277, 1
      %v5280 = vor.u32 %v5275, %v5279
      %v5282 = vshll.u32 %v5193, 16
      %v5284 = vrot.slane %v5282, 1
      %v5285 = vsel %vm1615, %v5280, %v5284
      %v5287 = vshrl.u32 %v5194, 16
      %v5289 = vshll.u32 %v5194, 16
      %v5291 = vrot.slane %v5289, 1
      %v5292 = vor.u32 %v5287, %v5291
      %v5294 = vshll.u32 %v5195, 16
      %v5296 = vrot.slane %v5294, 1
      %v5297 = vsel %vm1615, %v5292, %v5296
      %v5299 = vshrl.u32 %v5196, 16
      %v5301 = vshll.u32 %v5196, 16
      %v5303 = vrot.slane %v5301, 1
      %v5304 = vor.u32 %v5299, %v5303
      %v5306 = vshll.u32 %v5197, 16
      %v5308 = vrot.slane %v5306, 1
      %v5309 = vsel %vm1615, %v5304, %v5308
      %v5311 = vshrl.u32 %v5198, 16
      %v5313 = vshll.u32 %v5198, 16
      %v5315 = vrot.slane %v5313, 1
      %v5316 = vor.u32 %v5311, %v5315
      %v5318 = vshll.u32 %v5199, 16
      %v5320 = vrot.slane %v5318, 1
      %v5321 = vsel %vm1615, %v5316, %v5320
      %v5323 = vshrl.u32 %v5200, 16
      %v5325 = vshll.u32 %v5200, 16
      %v5327 = vrot.slane %v5325, 1
      %v5328 = vor.u32 %v5323, %v5327
      %v5330 = vshll.u32 %v5201, 16
      %v5332 = vrot.slane %v5330, 1
      %v5333 = vsel %vm1615, %v5328, %v5332
      %v5335 = vshrl.u32 %v5202, 16
      %v5337 = vshll.u32 %v5202, 16
      %v5339 = vrot.slane %v5337, 1
      %v5340 = vor.u32 %v5335, %v5339
      %v5342 = vshll.u32 %v5203, 16
      %v5344 = vrot.slane %v5342, 1
      %v5345 = vsel %vm1615, %v5340, %v5344
      %v5347 = vshrl.u32 %v5204, 16
      %v5349 = vshll.u32 %v5204, 16
      %v5351 = vrot.slane %v5349, 1
      %v5352 = vor.u32 %v5347, %v5351
      %v5354 = vshll.u32 %v5205, 16
      %v5356 = vrot.slane %v5354, 1
      %v5357 = vsel %vm1615, %v5352, %v5356
      %v5359 = vshrl.u32 %v5206, 16
      %v5361 = vshll.u32 %v5206, 16
      %v5363 = vrot.slane %v5361, 1
      %v5364 = vor.u32 %v5359, %v5363
      %v5366 = vshll.u32 %v5207, 16
      %v5368 = vrot.slane %v5366, 1
      %v5369 = vsel %vm1615, %v5364, %v5368
      %v5371 = vshrl.u32 %v5208, 16
      %v5373 = vshll.u32 %v5208, 16
      %v5375 = vrot.slane %v5373, 1
      %v5376 = vor.u32 %v5371, %v5375
      %v5378 = vshll.u32 %v5209, 16
      %v5380 = vrot.slane %v5378, 1
      %v5381 = vsel %vm1615, %v5376, %v5380
      %v5383 = vshrl.u32 %v5210, 16
      %v5385 = vshll.u32 %v5210, 16
      %v5387 = vrot.slane %v5385, 1
      %v5388 = vor.u32 %v5383, %v5387
      %v5390 = vshll.u32 %v5211, 16
      %v5392 = vrot.slane %v5390, 1
      %v5393 = vsel %vm1615, %v5388, %v5392
      %v5395 = vshrl.u32 %v5212, 16
      %v5397 = vshll.u32 %v5212, 16
      %v5399 = vrot.slane %v5397, 1
      %v5400 = vor.u32 %v5395, %v5399
      %v5402 = vshll.u32 %v5213, 16
      %v5404 = vrot.slane %v5402, 1
      %v5405 = vsel %vm1615, %v5400, %v5404
      %5406 = vrot.lane.b32.xlu0 %v5225, 104
      %v5407 = vpop.permute.xlu0 %5406
      %5408 = vrot.lane.b32.xlu0 %v5237, 104
      %v5409 = vpop.permute.xlu0 %5408
      %5410 = vrot.lane.b32.xlu0 %v5249, 104
      %v5411 = vpop.permute.xlu0 %5410
      %5412 = vrot.lane.b32.xlu0 %v5261, 104
      %v5413 = vpop.permute.xlu0 %5412
      %5414 = vrot.lane.b32.xlu0 %v5273, 104
      %v5415 = vpop.permute.xlu0 %5414
      %5416 = vrot.lane.b32.xlu0 %v5285, 104
      %v5417 = vpop.permute.xlu0 %5416
      %5418 = vrot.lane.b32.xlu0 %v5297, 104
      %v5419 = vpop.permute.xlu0 %5418
      %5420 = vrot.lane.b32.xlu0 %v5309, 104
      %v5421 = vpop.permute.xlu0 %5420
      %5422 = vrot.lane.b32.xlu0 %v5321, 104
      %v5423 = vpop.permute.xlu0 %5422
      %5424 = vrot.lane.b32.xlu0 %v5333, 104
      %v5425 = vpop.permute.xlu0 %5424
      %5426 = vrot.lane.b32.xlu0 %v5345, 104
      %v5427 = vpop.permute.xlu0 %5426
      %5428 = vrot.lane.b32.xlu0 %v5357, 104
      %v5429 = vpop.permute.xlu0 %5428
      %5430 = vrot.lane.b32.xlu0 %v5369, 104
      %v5431 = vpop.permute.xlu0 %5430
      %5432 = vrot.lane.b32.xlu0 %v5381, 104
      %v5433 = vpop.permute.xlu0 %5432
      %5434 = vrot.lane.b32.xlu0 %v5393, 104
      %v5435 = vpop.permute.xlu0 %5434
      %5436 = vrot.lane.b32.xlu0 %v5405, 104
      %v5437 = vpop.permute.xlu0 %5436
      %vm5454 = vcmask 917312
      %5455 = vst.msk [vmem:[#allocation4] sm:$0xff] %vm5454, %v5407
      %5456 = vst.msk [vmem:[#allocation4 + $0x10] sm:$0xff] %vm5454, %v5409
      %5457 = vst.msk [vmem:[#allocation4 + $0x20] sm:$0xff] %vm5454, %v5411
      %5458 = vst.msk [vmem:[#allocation4 + $0x30] sm:$0xff] %vm5454, %v5413
      %5459 = vst.msk [vmem:[#allocation4 + $0x40] sm:$0xff] %vm5454, %v5415
      %5460 = vst.msk [vmem:[#allocation4 + $0x50] sm:$0xff] %vm5454, %v5417
      %5461 = vst.msk [vmem:[#allocation4 + $0x60] sm:$0xff] %vm5454, %v5419
      %5462 = vst.msk [vmem:[#allocation4 + $0x70] sm:$0xff] %vm5454, %v5421
      %5463 = vst.msk [vmem:[#allocation4 + $0x80] sm:$0xff] %vm5454, %v5423
      %5464 = vst.msk [vmem:[#allocation4 + $0x90] sm:$0xff] %vm5454, %v5425
      %5465 = vst.msk [vmem:[#allocation4 + $0xa0] sm:$0xff] %vm5454, %v5427
      %5466 = vst.msk [vmem:[#allocation4 + $0xb0] sm:$0xff] %vm5454, %v5429
      %5467 = vst.msk [vmem:[#allocation4 + $0xc0] sm:$0xff] %vm5454, %v5431
      %5468 = vst.msk [vmem:[#allocation4 + $0xd0] sm:$0xff] %vm5454, %v5433
      %5469 = vst.msk [vmem:[#allocation4 + $0xe0] sm:$0xff] %vm5454, %v5435
      %5470 = vst.msk [vmem:[#allocation4 + $0xf0] sm:$0xff] %vm5454, %v5437
      %v5471 = vld [vmem:[%s1181] sm:$0xe]
      %v5472 = vld [vmem:[%s1181 + $0x4] sm:$0xf]
      %v5473 = vld [vmem:[%s1181 + $0x8] sm:$0x1]
      %v5474 = vld [vmem:[%s1181 + $0xc] sm:$0xe]
      %v5475 = vld [vmem:[%s1181 + $0x10] sm:$0xf]
      %v5476 = vld [vmem:[%s1181 + $0x14] sm:$0x1]
      %v5477 = vld [vmem:[%s1181 + $0x18] sm:$0xe]
      %v5478 = vld [vmem:[%s1181 + $0x1c] sm:$0xf]
      %v5479 = vld [vmem:[%s1181 + $0x20] sm:$0x1]
      %v5480 = vld [vmem:[%s1181 + $0x24] sm:$0xe]
      %v5481 = vld [vmem:[%s1181 + $0x28] sm:$0xf]
      %v5482 = vld [vmem:[%s1181 + $0x2c] sm:$0x1]
      %v5483 = vld [vmem:[%s1181 + $0x30] sm:$0xe]
      %v5484 = vld [vmem:[%s1181 + $0x34] sm:$0xf]
      %v5485 = vld [vmem:[%s1181 + $0x38] sm:$0x1]
      %v5486 = vld [vmem:[%s1181 + $0x3c] sm:$0xe]
      %v5487 = vld [vmem:[%s1181 + $0x40] sm:$0xf]
      %v5488 = vld [vmem:[%s1181 + $0x44] sm:$0x1]
      %v5489 = vld [vmem:[%s1181 + $0x48] sm:$0xe]
      %v5490 = vld [vmem:[%s1181 + $0x4c] sm:$0xf]
      %v5491 = vld [vmem:[%s1181 + $0x50] sm:$0x1]
      %v5492 = vld [vmem:[%s1181 + $0x54] sm:$0xe]
      %v5493 = vld [vmem:[%s1181 + $0x58] sm:$0xf]
      %v5494 = vld [vmem:[%s1181 + $0x5c] sm:$0x1]
      %v5495 = vld [vmem:[%s1181 + $0x60] sm:$0xe]
      %v5496 = vld [vmem:[%s1181 + $0x64] sm:$0xf]
      %v5497 = vld [vmem:[%s1181 + $0x68] sm:$0x1]
      %v5498 = vld [vmem:[%s1181 + $0x6c] sm:$0xe]
      %v5499 = vld [vmem:[%s1181 + $0x70] sm:$0xf]
      %v5500 = vld [vmem:[%s1181 + $0x74] sm:$0x1]
      %v5501 = vld [vmem:[%s1181 + $0x78] sm:$0xe]
      %v5502 = vld [vmem:[%s1181 + $0x7c] sm:$0xf]
      %v5503 = vld [vmem:[%s1181 + $0x80] sm:$0x1]
      %v5504 = vld [vmem:[%s1181 + $0x84] sm:$0xe]
      %v5505 = vld [vmem:[%s1181 + $0x88] sm:$0xf]
      %v5506 = vld [vmem:[%s1181 + $0x8c] sm:$0x1]
      %v5507 = vld [vmem:[%s1181 + $0x90] sm:$0xe]
      %v5508 = vld [vmem:[%s1181 + $0x94] sm:$0xf]
      %v5509 = vld [vmem:[%s1181 + $0x98] sm:$0x1]
      %v5510 = vld [vmem:[%s1181 + $0x9c] sm:$0xe]
      %v5511 = vld [vmem:[%s1181 + $0xa0] sm:$0xf]
      %v5512 = vld [vmem:[%s1181 + $0xa4] sm:$0x1]
      %v5513 = vld [vmem:[%s1181 + $0xa8] sm:$0xe]
      %v5514 = vld [vmem:[%s1181 + $0xac] sm:$0xf]
      %v5515 = vld [vmem:[%s1181 + $0xb0] sm:$0x1]
      %v5516 = vld [vmem:[%s1181 + $0xb4] sm:$0xe]
      %v5517 = vld [vmem:[%s1181 + $0xb8] sm:$0xf]
      %v5518 = vld [vmem:[%s1181 + $0xbc] sm:$0x1]
      %v5567 = vunpack.c.l.b16 %v5471
      %v5568 = vunpack.c.l.b16 %v5472
      %v5569 = vunpack.c.l.b16 %v5473
      %v5570 = vunpack.c.l.b16 %v5474
      %v5571 = vunpack.c.l.b16 %v5475
      %v5572 = vunpack.c.l.b16 %v5476
      %v5573 = vunpack.c.l.b16 %v5477
      %v5574 = vunpack.c.l.b16 %v5478
      %v5575 = vunpack.c.l.b16 %v5479
      %v5576 = vunpack.c.l.b16 %v5480
      %v5577 = vunpack.c.l.b16 %v5481
      %v5578 = vunpack.c.l.b16 %v5482
      %v5579 = vunpack.c.l.b16 %v5483
      %v5580 = vunpack.c.l.b16 %v5484
      %v5581 = vunpack.c.l.b16 %v5485
      %v5582 = vunpack.c.l.b16 %v5486
      %v5583 = vunpack.c.l.b16 %v5487
      %v5584 = vunpack.c.l.b16 %v5488
      %v5585 = vunpack.c.l.b16 %v5489
      %v5586 = vunpack.c.l.b16 %v5490
      %v5587 = vunpack.c.l.b16 %v5491
      %v5588 = vunpack.c.l.b16 %v5492
      %v5589 = vunpack.c.l.b16 %v5493
      %v5590 = vunpack.c.l.b16 %v5494
      %v5591 = vunpack.c.l.b16 %v5495
      %v5592 = vunpack.c.l.b16 %v5496
      %v5593 = vunpack.c.l.b16 %v5497
      %v5594 = vunpack.c.l.b16 %v5498
      %v5595 = vunpack.c.l.b16 %v5499
      %v5596 = vunpack.c.l.b16 %v5500
      %v5597 = vunpack.c.l.b16 %v5501
      %v5598 = vunpack.c.l.b16 %v5502
      %v5599 = vunpack.c.l.b16 %v5503
      %v5600 = vunpack.c.l.b16 %v5504
      %v5601 = vunpack.c.l.b16 %v5505
      %v5602 = vunpack.c.l.b16 %v5506
      %v5603 = vunpack.c.l.b16 %v5507
      %v5604 = vunpack.c.l.b16 %v5508
      %v5605 = vunpack.c.l.b16 %v5509
      %v5606 = vunpack.c.l.b16 %v5510
      %v5607 = vunpack.c.l.b16 %v5511
      %v5608 = vunpack.c.l.b16 %v5512
      %v5609 = vunpack.c.l.b16 %v5513
      %v5610 = vunpack.c.l.b16 %v5514
      %v5611 = vunpack.c.l.b16 %v5515
      %v5612 = vunpack.c.l.b16 %v5516
      %v5613 = vunpack.c.l.b16 %v5517
      %v5614 = vunpack.c.l.b16 %v5518
      %v5615 = vpack.c.b16 %v5568, %v5567
      %v5616 = vpack.c.b16 %v5569, %v5569
      %v5617 = vpack.c.b16 %v5571, %v5570
      %v5618 = vpack.c.b16 %v5572, %v5572
      %v5619 = vpack.c.b16 %v5574, %v5573
      %v5620 = vpack.c.b16 %v5575, %v5575
      %v5621 = vpack.c.b16 %v5577, %v5576
      %v5622 = vpack.c.b16 %v5578, %v5578
      %v5623 = vpack.c.b16 %v5580, %v5579
      %v5624 = vpack.c.b16 %v5581, %v5581
      %v5625 = vpack.c.b16 %v5583, %v5582
      %v5626 = vpack.c.b16 %v5584, %v5584
      %v5627 = vpack.c.b16 %v5586, %v5585
      %v5628 = vpack.c.b16 %v5587, %v5587
      %v5629 = vpack.c.b16 %v5589, %v5588
      %v5630 = vpack.c.b16 %v5590, %v5590
      %v5631 = vpack.c.b16 %v5592, %v5591
      %v5632 = vpack.c.b16 %v5593, %v5593
      %v5633 = vpack.c.b16 %v5595, %v5594
      %v5634 = vpack.c.b16 %v5596, %v5596
      %v5635 = vpack.c.b16 %v5598, %v5597
      %v5636 = vpack.c.b16 %v5599, %v5599
      %v5637 = vpack.c.b16 %v5601, %v5600
      %v5638 = vpack.c.b16 %v5602, %v5602
      %v5639 = vpack.c.b16 %v5604, %v5603
      %v5640 = vpack.c.b16 %v5605, %v5605
      %v5641 = vpack.c.b16 %v5607, %v5606
      %v5642 = vpack.c.b16 %v5608, %v5608
      %v5643 = vpack.c.b16 %v5610, %v5609
      %v5644 = vpack.c.b16 %v5611, %v5611
      %v5645 = vpack.c.b16 %v5613, %v5612
      %v5646 = vpack.c.b16 %v5614, %v5614
      %v5647 = vrot.slane %v5615, 1
      %v5648 = vrot.slane %v5616, 1
      %v5649 = vsel %vm2049, %v5647, %v5648
      %v5650 = vrot.slane %v5617, 1
      %v5651 = vrot.slane %v5618, 1
      %v5652 = vsel %vm2049, %v5650, %v5651
      %v5653 = vrot.slane %v5619, 1
      %v5654 = vrot.slane %v5620, 1
      %v5655 = vsel %vm2049, %v5653, %v5654
      %v5656 = vrot.slane %v5621, 1
      %v5657 = vrot.slane %v5622, 1
      %v5658 = vsel %vm2049, %v5656, %v5657
      %v5659 = vrot.slane %v5623, 1
      %v5660 = vrot.slane %v5624, 1
      %v5661 = vsel %vm2049, %v5659, %v5660
      %v5662 = vrot.slane %v5625, 1
      %v5663 = vrot.slane %v5626, 1
      %v5664 = vsel %vm2049, %v5662, %v5663
      %v5665 = vrot.slane %v5627, 1
      %v5666 = vrot.slane %v5628, 1
      %v5667 = vsel %vm2049, %v5665, %v5666
      %v5668 = vrot.slane %v5629, 1
      %v5669 = vrot.slane %v5630, 1
      %v5670 = vsel %vm2049, %v5668, %v5669
      %v5671 = vrot.slane %v5631, 1
      %v5672 = vrot.slane %v5632, 1
      %v5673 = vsel %vm2049, %v5671, %v5672
      %v5674 = vrot.slane %v5633, 1
      %v5675 = vrot.slane %v5634, 1
      %v5676 = vsel %vm2049, %v5674, %v5675
      %v5677 = vrot.slane %v5635, 1
      %v5678 = vrot.slane %v5636, 1
      %v5679 = vsel %vm2049, %v5677, %v5678
      %v5680 = vrot.slane %v5637, 1
      %v5681 = vrot.slane %v5638, 1
      %v5682 = vsel %vm2049, %v5680, %v5681
      %v5683 = vrot.slane %v5639, 1
      %v5684 = vrot.slane %v5640, 1
      %v5685 = vsel %vm2049, %v5683, %v5684
      %v5686 = vrot.slane %v5641, 1
      %v5687 = vrot.slane %v5642, 1
      %v5688 = vsel %vm2049, %v5686, %v5687
      %v5689 = vrot.slane %v5643, 1
      %v5690 = vrot.slane %v5644, 1
      %v5691 = vsel %vm2049, %v5689, %v5690
      %v5692 = vrot.slane %v5645, 1
      %v5693 = vrot.slane %v5646, 1
      %v5694 = vsel %vm2049, %v5692, %v5693
      %5695 = vrot.lane.b32.xlu0 %v5649, 112
      %v5696 = vpop.permute.xlu0 %5695
      %5697 = vrot.lane.b32.xlu0 %v5652, 112
      %v5698 = vpop.permute.xlu0 %5697
      %5699 = vrot.lane.b32.xlu0 %v5655, 112
      %v5700 = vpop.permute.xlu0 %5699
      %5701 = vrot.lane.b32.xlu0 %v5658, 112
      %v5702 = vpop.permute.xlu0 %5701
      %5703 = vrot.lane.b32.xlu0 %v5661, 112
      %v5704 = vpop.permute.xlu0 %5703
      %5705 = vrot.lane.b32.xlu0 %v5664, 112
      %v5706 = vpop.permute.xlu0 %5705
      %5707 = vrot.lane.b32.xlu0 %v5667, 112
      %v5708 = vpop.permute.xlu0 %5707
      %5709 = vrot.lane.b32.xlu0 %v5670, 112
      %v5710 = vpop.permute.xlu0 %5709
      %5711 = vrot.lane.b32.xlu0 %v5673, 112
      %v5712 = vpop.permute.xlu0 %5711
      %5713 = vrot.lane.b32.xlu0 %v5676, 112
      %v5714 = vpop.permute.xlu0 %5713
      %5715 = vrot.lane.b32.xlu0 %v5679, 112
      %v5716 = vpop.permute.xlu0 %5715
      %5717 = vrot.lane.b32.xlu0 %v5682, 112
      %v5718 = vpop.permute.xlu0 %5717
      %5719 = vrot.lane.b32.xlu0 %v5685, 112
      %v5720 = vpop.permute.xlu0 %5719
      %5721 = vrot.lane.b32.xlu0 %v5688, 112
      %v5722 = vpop.permute.xlu0 %5721
      %5723 = vrot.lane.b32.xlu0 %v5691, 112
      %v5724 = vpop.permute.xlu0 %5723
      %5725 = vrot.lane.b32.xlu0 %v5694, 112
      %v5726 = vpop.permute.xlu0 %5725
      %vm5743 = vcmask 982912
      %5744 = vst.msk [vmem:[#allocation4] sm:$0xff] %vm5743, %v5696
      %5745 = vst.msk [vmem:[#allocation4 + $0x10] sm:$0xff] %vm5743, %v5698
      %5746 = vst.msk [vmem:[#allocation4 + $0x20] sm:$0xff] %vm5743, %v5700
      %5747 = vst.msk [vmem:[#allocation4 + $0x30] sm:$0xff] %vm5743, %v5702
      %5748 = vst.msk [vmem:[#allocation4 + $0x40] sm:$0xff] %vm5743, %v5704
      %5749 = vst.msk [vmem:[#allocation4 + $0x50] sm:$0xff] %vm5743, %v5706
      %5750 = vst.msk [vmem:[#allocation4 + $0x60] sm:$0xff] %vm5743, %v5708
      %5751 = vst.msk [vmem:[#allocation4 + $0x70] sm:$0xff] %vm5743, %v5710
      %5752 = vst.msk [vmem:[#allocation4 + $0x80] sm:$0xff] %vm5743, %v5712
      %5753 = vst.msk [vmem:[#allocation4 + $0x90] sm:$0xff] %vm5743, %v5714
      %5754 = vst.msk [vmem:[#allocation4 + $0xa0] sm:$0xff] %vm5743, %v5716
      %5755 = vst.msk [vmem:[#allocation4 + $0xb0] sm:$0xff] %vm5743, %v5718
      %5756 = vst.msk [vmem:[#allocation4 + $0xc0] sm:$0xff] %vm5743, %v5720
      %5757 = vst.msk [vmem:[#allocation4 + $0xd0] sm:$0xff] %vm5743, %v5722
      %5758 = vst.msk [vmem:[#allocation4 + $0xe0] sm:$0xff] %vm5743, %v5724
      %5759 = vst.msk [vmem:[#allocation4 + $0xf0] sm:$0xff] %vm5743, %v5726
      %s5760 = scalar_lea.vmem [#allocation3], 24
      %v5761 = vld [vmem:[%s5760] sm:$0xf]
      %v5762 = vld [vmem:[%s5760 + $0x4] sm:$0xf]
      %v5763 = vld [vmem:[%s5760 + $0xc] sm:$0xf]
      %v5764 = vld [vmem:[%s5760 + $0x10] sm:$0xf]
      %v5765 = vld [vmem:[%s5760 + $0x18] sm:$0xf]
      %v5766 = vld [vmem:[%s5760 + $0x1c] sm:$0xf]
      %v5767 = vld [vmem:[%s5760 + $0x24] sm:$0xf]
      %v5768 = vld [vmem:[%s5760 + $0x28] sm:$0xf]
      %v5769 = vld [vmem:[%s5760 + $0x30] sm:$0xf]
      %v5770 = vld [vmem:[%s5760 + $0x34] sm:$0xf]
      %v5771 = vld [vmem:[%s5760 + $0x3c] sm:$0xf]
      %v5772 = vld [vmem:[%s5760 + $0x40] sm:$0xf]
      %v5773 = vld [vmem:[%s5760 + $0x48] sm:$0xf]
      %v5774 = vld [vmem:[%s5760 + $0x4c] sm:$0xf]
      %v5775 = vld [vmem:[%s5760 + $0x54] sm:$0xf]
      %v5776 = vld [vmem:[%s5760 + $0x58] sm:$0xf]
      %v5777 = vld [vmem:[%s5760 + $0x60] sm:$0xf]
      %v5778 = vld [vmem:[%s5760 + $0x64] sm:$0xf]
      %v5779 = vld [vmem:[%s5760 + $0x6c] sm:$0xf]
      %v5780 = vld [vmem:[%s5760 + $0x70] sm:$0xf]
      %v5781 = vld [vmem:[%s5760 + $0x78] sm:$0xf]
      %v5782 = vld [vmem:[%s5760 + $0x7c] sm:$0xf]
      %v5783 = vld [vmem:[%s5760 + $0x84] sm:$0xf]
      %v5784 = vld [vmem:[%s5760 + $0x88] sm:$0xf]
      %v5785 = vld [vmem:[%s5760 + $0x90] sm:$0xf]
      %v5786 = vld [vmem:[%s5760 + $0x94] sm:$0xf]
      %v5787 = vld [vmem:[%s5760 + $0x9c] sm:$0xf]
      %v5788 = vld [vmem:[%s5760 + $0xa0] sm:$0xf]
      %v5789 = vld [vmem:[%s5760 + $0xa8] sm:$0xf]
      %v5790 = vld [vmem:[%s5760 + $0xac] sm:$0xf]
      %v5791 = vld [vmem:[%s5760 + $0xb4] sm:$0xf]
      %v5792 = vld [vmem:[%s5760 + $0xb8] sm:$0xf]
      %v5825 = vunpack.c.l.b16 %v5761
      %v5826 = vunpack.c.l.b16 %v5762
      %v5827 = vunpack.c.l.b16 %v5763
      %v5828 = vunpack.c.l.b16 %v5764
      %v5829 = vunpack.c.l.b16 %v5765
      %v5830 = vunpack.c.l.b16 %v5766
      %v5831 = vunpack.c.l.b16 %v5767
      %v5832 = vunpack.c.l.b16 %v5768
      %v5833 = vunpack.c.l.b16 %v5769
      %v5834 = vunpack.c.l.b16 %v5770
      %v5835 = vunpack.c.l.b16 %v5771
      %v5836 = vunpack.c.l.b16 %v5772
      %v5837 = vunpack.c.l.b16 %v5773
      %v5838 = vunpack.c.l.b16 %v5774
      %v5839 = vunpack.c.l.b16 %v5775
      %v5840 = vunpack.c.l.b16 %v5776
      %v5841 = vunpack.c.l.b16 %v5777
      %v5842 = vunpack.c.l.b16 %v5778
      %v5843 = vunpack.c.l.b16 %v5779
      %v5844 = vunpack.c.l.b16 %v5780
      %v5845 = vunpack.c.l.b16 %v5781
      %v5846 = vunpack.c.l.b16 %v5782
      %v5847 = vunpack.c.l.b16 %v5783
      %v5848 = vunpack.c.l.b16 %v5784
      %v5849 = vunpack.c.l.b16 %v5785
      %v5850 = vunpack.c.l.b16 %v5786
      %v5851 = vunpack.c.l.b16 %v5787
      %v5852 = vunpack.c.l.b16 %v5788
      %v5853 = vunpack.c.l.b16 %v5789
      %v5854 = vunpack.c.l.b16 %v5790
      %v5855 = vunpack.c.l.b16 %v5791
      %v5856 = vunpack.c.l.b16 %v5792
      %v5857 = vpack.c.b16 %v5826, %v5825
      %v5858 = vpack.c.b16 %v5828, %v5827
      %v5859 = vpack.c.b16 %v5830, %v5829
      %v5860 = vpack.c.b16 %v5832, %v5831
      %v5861 = vpack.c.b16 %v5834, %v5833
      %v5862 = vpack.c.b16 %v5836, %v5835
      %v5863 = vpack.c.b16 %v5838, %v5837
      %v5864 = vpack.c.b16 %v5840, %v5839
      %v5865 = vpack.c.b16 %v5842, %v5841
      %v5866 = vpack.c.b16 %v5844, %v5843
      %v5867 = vpack.c.b16 %v5846, %v5845
      %v5868 = vpack.c.b16 %v5848, %v5847
      %v5869 = vpack.c.b16 %v5850, %v5849
      %v5870 = vpack.c.b16 %v5852, %v5851
      %v5871 = vpack.c.b16 %v5854, %v5853
      %v5872 = vpack.c.b16 %v5856, %v5855
      %5873 = vrot.lane.b32.xlu0 %v5857, 120
      %v5874 = vpop.permute.xlu0 %5873
      %5875 = vrot.lane.b32.xlu0 %v5858, 120
      %v5876 = vpop.permute.xlu0 %5875
      %5877 = vrot.lane.b32.xlu0 %v5859, 120
      %v5878 = vpop.permute.xlu0 %5877
      %5879 = vrot.lane.b32.xlu0 %v5860, 120
      %v5880 = vpop.permute.xlu0 %5879
      %5881 = vrot.lane.b32.xlu0 %v5861, 120
      %v5882 = vpop.permute.xlu0 %5881
      %5883 = vrot.lane.b32.xlu0 %v5862, 120
      %v5884 = vpop.permute.xlu0 %5883
      %5885 = vrot.lane.b32.xlu0 %v5863, 120
      %v5886 = vpop.permute.xlu0 %5885
      %5887 = vrot.lane.b32.xlu0 %v5864, 120
      %v5888 = vpop.permute.xlu0 %5887
      %5889 = vrot.lane.b32.xlu0 %v5865, 120
      %v5890 = vpop.permute.xlu0 %5889
      %5891 = vrot.lane.b32.xlu0 %v5866, 120
      %v5892 = vpop.permute.xlu0 %5891
      %5893 = vrot.lane.b32.xlu0 %v5867, 120
      %v5894 = vpop.permute.xlu0 %5893
      %5895 = vrot.lane.b32.xlu0 %v5868, 120
      %v5896 = vpop.permute.xlu0 %5895
      %5897 = vrot.lane.b32.xlu0 %v5869, 120
      %v5898 = vpop.permute.xlu0 %5897
      %5899 = vrot.lane.b32.xlu0 %v5870, 120
      %v5900 = vpop.permute.xlu0 %5899
      %5901 = vrot.lane.b32.xlu0 %v5871, 120
      %v5902 = vpop.permute.xlu0 %5901
      %5903 = vrot.lane.b32.xlu0 %v5872, 120
      %v5904 = vpop.permute.xlu0 %5903
      %vm5921 = vcmask 1048512
      %5922 = vst.msk [vmem:[#allocation4] sm:$0xff] %vm5921, %v5874
      %5923 = vst.msk [vmem:[#allocation4 + $0x10] sm:$0xff] %vm5921, %v5876
      %5924 = vst.msk [vmem:[#allocation4 + $0x20] sm:$0xff] %vm5921, %v5878
      %5925 = vst.msk [vmem:[#allocation4 + $0x30] sm:$0xff] %vm5921, %v5880
      %5926 = vst.msk [vmem:[#allocation4 + $0x40] sm:$0xff] %vm5921, %v5882
      %5927 = vst.msk [vmem:[#allocation4 + $0x50] sm:$0xff] %vm5921, %v5884
      %5928 = vst.msk [vmem:[#allocation4 + $0x60] sm:$0xff] %vm5921, %v5886
      %5929 = vst.msk [vmem:[#allocation4 + $0x70] sm:$0xff] %vm5921, %v5888
      %5930 = vst.msk [vmem:[#allocation4 + $0x80] sm:$0xff] %vm5921, %v5890
      %5931 = vst.msk [vmem:[#allocation4 + $0x90] sm:$0xff] %vm5921, %v5892
      %5932 = vst.msk [vmem:[#allocation4 + $0xa0] sm:$0xff] %vm5921, %v5894
      %5933 = vst.msk [vmem:[#allocation4 + $0xb0] sm:$0xff] %vm5921, %v5896
      %5934 = vst.msk [vmem:[#allocation4 + $0xc0] sm:$0xff] %vm5921, %v5898
      %5935 = vst.msk [vmem:[#allocation4 + $0xd0] sm:$0xff] %vm5921, %v5900
      %5936 = vst.msk [vmem:[#allocation4 + $0xe0] sm:$0xff] %vm5921, %v5902
      %5937 = vst.msk [vmem:[#allocation4 + $0xf0] sm:$0xff] %vm5921, %v5904
      %v5938 = vld [vmem:[%s5760] sm:$0xf]
      %v5939 = vld [vmem:[%s5760 + $0x4] sm:$0xf]
      %v5940 = vld [vmem:[%s5760 + $0x8] sm:$0x1]
      %v5941 = vld [vmem:[%s5760 + $0xc] sm:$0xf]
      %v5942 = vld [vmem:[%s5760 + $0x10] sm:$0xf]
      %v5943 = vld [vmem:[%s5760 + $0x14] sm:$0x1]
      %v5944 = vld [vmem:[%s5760 + $0x18] sm:$0xf]
      %v5945 = vld [vmem:[%s5760 + $0x1c] sm:$0xf]
      %v5946 = vld [vmem:[%s5760 + $0x20] sm:$0x1]
      %v5947 = vld [vmem:[%s5760 + $0x24] sm:$0xf]
      %v5948 = vld [vmem:[%s5760 + $0x28] sm:$0xf]
      %v5949 = vld [vmem:[%s5760 + $0x2c] sm:$0x1]
      %v5950 = vld [vmem:[%s5760 + $0x30] sm:$0xf]
      %v5951 = vld [vmem:[%s5760 + $0x34] sm:$0xf]
      %v5952 = vld [vmem:[%s5760 + $0x38] sm:$0x1]
      %v5953 = vld [vmem:[%s5760 + $0x3c] sm:$0xf]
      %v5954 = vld [vmem:[%s5760 + $0x40] sm:$0xf]
      %v5955 = vld [vmem:[%s5760 + $0x44] sm:$0x1]
      %v5956 = vld [vmem:[%s5760 + $0x48] sm:$0xf]
      %v5957 = vld [vmem:[%s5760 + $0x4c] sm:$0xf]
      %v5958 = vld [vmem:[%s5760 + $0x50] sm:$0x1]
      %v5959 = vld [vmem:[%s5760 + $0x54] sm:$0xf]
      %v5960 = vld [vmem:[%s5760 + $0x58] sm:$0xf]
      %v5961 = vld [vmem:[%s5760 + $0x5c] sm:$0x1]
      %v5962 = vld [vmem:[%s5760 + $0x60] sm:$0xf]
      %v5963 = vld [vmem:[%s5760 + $0x64] sm:$0xf]
      %v5964 = vld [vmem:[%s5760 + $0x68] sm:$0x1]
      %v5965 = vld [vmem:[%s5760 + $0x6c] sm:$0xf]
      %v5966 = vld [vmem:[%s5760 + $0x70] sm:$0xf]
      %v5967 = vld [vmem:[%s5760 + $0x74] sm:$0x1]
      %v5968 = vld [vmem:[%s5760 + $0x78] sm:$0xf]
      %v5969 = vld [vmem:[%s5760 + $0x7c] sm:$0xf]
      %v5970 = vld [vmem:[%s5760 + $0x80] sm:$0x1]
      %v5971 = vld [vmem:[%s5760 + $0x84] sm:$0xf]
      %v5972 = vld [vmem:[%s5760 + $0x88] sm:$0xf]
      %v5973 = vld [vmem:[%s5760 + $0x8c] sm:$0x1]
      %v5974 = vld [vmem:[%s5760 + $0x90] sm:$0xf]
      %v5975 = vld [vmem:[%s5760 + $0x94] sm:$0xf]
      %v5976 = vld [vmem:[%s5760 + $0x98] sm:$0x1]
      %v5977 = vld [vmem:[%s5760 + $0x9c] sm:$0xf]
      %v5978 = vld [vmem:[%s5760 + $0xa0] sm:$0xf]
      %v5979 = vld [vmem:[%s5760 + $0xa4] sm:$0x1]
      %v5980 = vld [vmem:[%s5760 + $0xa8] sm:$0xf]
      %v5981 = vld [vmem:[%s5760 + $0xac] sm:$0xf]
      %v5982 = vld [vmem:[%s5760 + $0xb0] sm:$0x1]
      %v5983 = vld [vmem:[%s5760 + $0xb4] sm:$0xf]
      %v5984 = vld [vmem:[%s5760 + $0xb8] sm:$0xf]
      %v5985 = vld [vmem:[%s5760 + $0xbc] sm:$0x1]
      %v6034 = vunpack.c.l.b16 %v5938
      %v6035 = vunpack.c.l.b16 %v5939
      %v6036 = vunpack.c.l.b16 %v5940
      %v6037 = vunpack.c.l.b16 %v5941
      %v6038 = vunpack.c.l.b16 %v5942
      %v6039 = vunpack.c.l.b16 %v5943
      %v6040 = vunpack.c.l.b16 %v5944
      %v6041 = vunpack.c.l.b16 %v5945
      %v6042 = vunpack.c.l.b16 %v5946
      %v6043 = vunpack.c.l.b16 %v5947
      %v6044 = vunpack.c.l.b16 %v5948
      %v6045 = vunpack.c.l.b16 %v5949
      %v6046 = vunpack.c.l.b16 %v5950
      %v6047 = vunpack.c.l.b16 %v5951
      %v6048 = vunpack.c.l.b16 %v5952
      %v6049 = vunpack.c.l.b16 %v5953
      %v6050 = vunpack.c.l.b16 %v5954
      %v6051 = vunpack.c.l.b16 %v5955
      %v6052 = vunpack.c.l.b16 %v5956
      %v6053 = vunpack.c.l.b16 %v5957
      %v6054 = vunpack.c.l.b16 %v5958
      %v6055 = vunpack.c.l.b16 %v5959
      %v6056 = vunpack.c.l.b16 %v5960
      %v6057 = vunpack.c.l.b16 %v5961
      %v6058 = vunpack.c.l.b16 %v5962
      %v6059 = vunpack.c.l.b16 %v5963
      %v6060 = vunpack.c.l.b16 %v5964
      %v6061 = vunpack.c.l.b16 %v5965
      %v6062 = vunpack.c.l.b16 %v5966
      %v6063 = vunpack.c.l.b16 %v5967
      %v6064 = vunpack.c.l.b16 %v5968
      %v6065 = vunpack.c.l.b16 %v5969
      %v6066 = vunpack.c.l.b16 %v5970
      %v6067 = vunpack.c.l.b16 %v5971
      %v6068 = vunpack.c.l.b16 %v5972
      %v6069 = vunpack.c.l.b16 %v5973
      %v6070 = vunpack.c.l.b16 %v5974
      %v6071 = vunpack.c.l.b16 %v5975
      %v6072 = vunpack.c.l.b16 %v5976
      %v6073 = vunpack.c.l.b16 %v5977
      %v6074 = vunpack.c.l.b16 %v5978
      %v6075 = vunpack.c.l.b16 %v5979
      %v6076 = vunpack.c.l.b16 %v5980
      %v6077 = vunpack.c.l.b16 %v5981
      %v6078 = vunpack.c.l.b16 %v5982
      %v6079 = vunpack.c.l.b16 %v5983
      %v6080 = vunpack.c.l.b16 %v5984
      %v6081 = vunpack.c.l.b16 %v5985
      %v6082 = vpack.c.b16 %v6035, %v6034
      %v6083 = vpack.c.b16 %v6036, %v6036
      %v6084 = vpack.c.b16 %v6038, %v6037
      %v6085 = vpack.c.b16 %v6039, %v6039
      %v6086 = vpack.c.b16 %v6041, %v6040
      %v6087 = vpack.c.b16 %v6042, %v6042
      %v6088 = vpack.c.b16 %v6044, %v6043
      %v6089 = vpack.c.b16 %v6045, %v6045
      %v6090 = vpack.c.b16 %v6047, %v6046
      %v6091 = vpack.c.b16 %v6048, %v6048
      %v6092 = vpack.c.b16 %v6050, %v6049
      %v6093 = vpack.c.b16 %v6051, %v6051
      %v6094 = vpack.c.b16 %v6053, %v6052
      %v6095 = vpack.c.b16 %v6054, %v6054
      %v6096 = vpack.c.b16 %v6056, %v6055
      %v6097 = vpack.c.b16 %v6057, %v6057
      %v6098 = vpack.c.b16 %v6059, %v6058
      %v6099 = vpack.c.b16 %v6060, %v6060
      %v6100 = vpack.c.b16 %v6062, %v6061
      %v6101 = vpack.c.b16 %v6063, %v6063
      %v6102 = vpack.c.b16 %v6065, %v6064
      %v6103 = vpack.c.b16 %v6066, %v6066
      %v6104 = vpack.c.b16 %v6068, %v6067
      %v6105 = vpack.c.b16 %v6069, %v6069
      %v6106 = vpack.c.b16 %v6071, %v6070
      %v6107 = vpack.c.b16 %v6072, %v6072
      %v6108 = vpack.c.b16 %v6074, %v6073
      %v6109 = vpack.c.b16 %v6075, %v6075
      %v6110 = vpack.c.b16 %v6077, %v6076
      %v6111 = vpack.c.b16 %v6078, %v6078
      %v6112 = vpack.c.b16 %v6080, %v6079
      %v6113 = vpack.c.b16 %v6081, %v6081
      %v6115 = vshrl.u32 %v6082, 16
      %v6117 = vshll.u32 %v6082, 16
      %v6119 = vrot.slane %v6117, 1
      %v6120 = vor.u32 %v6115, %v6119
      %v6122 = vshll.u32 %v6083, 16
      %v6124 = vrot.slane %v6122, 1
      %v6125 = vsel %vm1615, %v6120, %v6124
      %v6127 = vshrl.u32 %v6084, 16
      %v6129 = vshll.u32 %v6084, 16
      %v6131 = vrot.slane %v6129, 1
      %v6132 = vor.u32 %v6127, %v6131
      %v6134 = vshll.u32 %v6085, 16
      %v6136 = vrot.slane %v6134, 1
      %v6137 = vsel %vm1615, %v6132, %v6136
      %v6139 = vshrl.u32 %v6086, 16
      %v6141 = vshll.u32 %v6086, 16
      %v6143 = vrot.slane %v6141, 1
      %v6144 = vor.u32 %v6139, %v6143
      %v6146 = vshll.u32 %v6087, 16
      %v6148 = vrot.slane %v6146, 1
      %v6149 = vsel %vm1615, %v6144, %v6148
      %v6151 = vshrl.u32 %v6088, 16
      %v6153 = vshll.u32 %v6088, 16
      %v6155 = vrot.slane %v6153, 1
      %v6156 = vor.u32 %v6151, %v6155
      %v6158 = vshll.u32 %v6089, 16
      %v6160 = vrot.slane %v6158, 1
      %v6161 = vsel %vm1615, %v6156, %v6160
      %v6163 = vshrl.u32 %v6090, 16
      %v6165 = vshll.u32 %v6090, 16
      %v6167 = vrot.slane %v6165, 1
      %v6168 = vor.u32 %v6163, %v6167
      %v6170 = vshll.u32 %v6091, 16
      %v6172 = vrot.slane %v6170, 1
      %v6173 = vsel %vm1615, %v6168, %v6172
      %v6175 = vshrl.u32 %v6092, 16
      %v6177 = vshll.u32 %v6092, 16
      %v6179 = vrot.slane %v6177, 1
      %v6180 = vor.u32 %v6175, %v6179
      %v6182 = vshll.u32 %v6093, 16
      %v6184 = vrot.slane %v6182, 1
      %v6185 = vsel %vm1615, %v6180, %v6184
      %v6187 = vshrl.u32 %v6094, 16
      %v6189 = vshll.u32 %v6094, 16
      %v6191 = vrot.slane %v6189, 1
      %v6192 = vor.u32 %v6187, %v6191
      %v6194 = vshll.u32 %v6095, 16
      %v6196 = vrot.slane %v6194, 1
      %v6197 = vsel %vm1615, %v6192, %v6196
      %v6199 = vshrl.u32 %v6096, 16
      %v6201 = vshll.u32 %v6096, 16
      %v6203 = vrot.slane %v6201, 1
      %v6204 = vor.u32 %v6199, %v6203
      %v6206 = vshll.u32 %v6097, 16
      %v6208 = vrot.slane %v6206, 1
      %v6209 = vsel %vm1615, %v6204, %v6208
      %v6211 = vshrl.u32 %v6098, 16
      %v6213 = vshll.u32 %v6098, 16
      %v6215 = vrot.slane %v6213, 1
      %v6216 = vor.u32 %v6211, %v6215
      %v6218 = vshll.u32 %v6099, 16
      %v6220 = vrot.slane %v6218, 1
      %v6221 = vsel %vm1615, %v6216, %v6220
      %v6223 = vshrl.u32 %v6100, 16
      %v6225 = vshll.u32 %v6100, 16
      %v6227 = vrot.slane %v6225, 1
      %v6228 = vor.u32 %v6223, %v6227
      %v6230 = vshll.u32 %v6101, 16
      %v6232 = vrot.slane %v6230, 1
      %v6233 = vsel %vm1615, %v6228, %v6232
      %v6235 = vshrl.u32 %v6102, 16
      %v6237 = vshll.u32 %v6102, 16
      %v6239 = vrot.slane %v6237, 1
      %v6240 = vor.u32 %v6235, %v6239
      %v6242 = vshll.u32 %v6103, 16
      %v6244 = vrot.slane %v6242, 1
      %v6245 = vsel %vm1615, %v6240, %v6244
      %v6247 = vshrl.u32 %v6104, 16
      %v6249 = vshll.u32 %v6104, 16
      %v6251 = vrot.slane %v6249, 1
      %v6252 = vor.u32 %v6247, %v6251
      %v6254 = vshll.u32 %v6105, 16
      %v6256 = vrot.slane %v6254, 1
      %v6257 = vsel %vm1615, %v6252, %v6256
      %v6259 = vshrl.u32 %v6106, 16
      %v6261 = vshll.u32 %v6106, 16
      %v6263 = vrot.slane %v6261, 1
      %v6264 = vor.u32 %v6259, %v6263
      %v6266 = vshll.u32 %v6107, 16
      %v6268 = vrot.slane %v6266, 1
      %v6269 = vsel %vm1615, %v6264, %v6268
      %v6271 = vshrl.u32 %v6108, 16
      %v6273 = vshll.u32 %v6108, 16
      %v6275 = vrot.slane %v6273, 1
      %v6276 = vor.u32 %v6271, %v6275
      %v6278 = vshll.u32 %v6109, 16
      %v6280 = vrot.slane %v6278, 1
      %v6281 = vsel %vm1615, %v6276, %v6280
      %v6283 = vshrl.u32 %v6110, 16
      %v6285 = vshll.u32 %v6110, 16
      %v6287 = vrot.slane %v6285, 1
      %v6288 = vor.u32 %v6283, %v6287
      %v6290 = vshll.u32 %v6111, 16
      %v6292 = vrot.slane %v6290, 1
      %v6293 = vsel %vm1615, %v6288, %v6292
      %v6295 = vshrl.u32 %v6112, 16
      %v6297 = vshll.u32 %v6112, 16
      %v6299 = vrot.slane %v6297, 1
      %v6300 = vor.u32 %v6295, %v6299
      %v6302 = vshll.u32 %v6113, 16
      %v6304 = vrot.slane %v6302, 1
      %v6305 = vsel %vm1615, %v6300, %v6304
      %6322 = vst.msk [vmem:[#allocation4 + $0x8] sm:$0xff] %vm1422, %v6125
      %6323 = vst.msk [vmem:[#allocation4 + $0x18] sm:$0xff] %vm1422, %v6137
      %6324 = vst.msk [vmem:[#allocation4 + $0x28] sm:$0xff] %vm1422, %v6149
      %6325 = vst.msk [vmem:[#allocation4 + $0x38] sm:$0xff] %vm1422, %v6161
      %6326 = vst.msk [vmem:[#allocation4 + $0x48] sm:$0xff] %vm1422, %v6173
      %6327 = vst.msk [vmem:[#allocation4 + $0x58] sm:$0xff] %vm1422, %v6185
      %6328 = vst.msk [vmem:[#allocation4 + $0x68] sm:$0xff] %vm1422, %v6197
      %6329 = vst.msk [vmem:[#allocation4 + $0x78] sm:$0xff] %vm1422, %v6209
      %6330 = vst.msk [vmem:[#allocation4 + $0x88] sm:$0xff] %vm1422, %v6221
      %6331 = vst.msk [vmem:[#allocation4 + $0x98] sm:$0xff] %vm1422, %v6233
      %6332 = vst.msk [vmem:[#allocation4 + $0xa8] sm:$0xff] %vm1422, %v6245
      %6333 = vst.msk [vmem:[#allocation4 + $0xb8] sm:$0xff] %vm1422, %v6257
      %6334 = vst.msk [vmem:[#allocation4 + $0xc8] sm:$0xff] %vm1422, %v6269
      %6335 = vst.msk [vmem:[#allocation4 + $0xd8] sm:$0xff] %vm1422, %v6281
      %6336 = vst.msk [vmem:[#allocation4 + $0xe8] sm:$0xff] %vm1422, %v6293
      %6337 = vst.msk [vmem:[#allocation4 + $0xf8] sm:$0xff] %vm1422, %v6305
      %v6338 = vld [vmem:[%s5760] sm:$0xe]
      %v6339 = vld [vmem:[%s5760 + $0x4] sm:$0xf]
      %v6340 = vld [vmem:[%s5760 + $0x8] sm:$0x1]
      %v6341 = vld [vmem:[%s5760 + $0xc] sm:$0xe]
      %v6342 = vld [vmem:[%s5760 + $0x10] sm:$0xf]
      %v6343 = vld [vmem:[%s5760 + $0x14] sm:$0x1]
      %v6344 = vld [vmem:[%s5760 + $0x18] sm:$0xe]
      %v6345 = vld [vmem:[%s5760 + $0x1c] sm:$0xf]
      %v6346 = vld [vmem:[%s5760 + $0x20] sm:$0x1]
      %v6347 = vld [vmem:[%s5760 + $0x24] sm:$0xe]
      %v6348 = vld [vmem:[%s5760 + $0x28] sm:$0xf]
      %v6349 = vld [vmem:[%s5760 + $0x2c] sm:$0x1]
      %v6350 = vld [vmem:[%s5760 + $0x30] sm:$0xe]
      %v6351 = vld [vmem:[%s5760 + $0x34] sm:$0xf]
      %v6352 = vld [vmem:[%s5760 + $0x38] sm:$0x1]
      %v6353 = vld [vmem:[%s5760 + $0x3c] sm:$0xe]
      %v6354 = vld [vmem:[%s5760 + $0x40] sm:$0xf]
      %v6355 = vld [vmem:[%s5760 + $0x44] sm:$0x1]
      %v6356 = vld [vmem:[%s5760 + $0x48] sm:$0xe]
      %v6357 = vld [vmem:[%s5760 + $0x4c] sm:$0xf]
      %v6358 = vld [vmem:[%s5760 + $0x50] sm:$0x1]
      %v6359 = vld [vmem:[%s5760 + $0x54] sm:$0xe]
      %v6360 = vld [vmem:[%s5760 + $0x58] sm:$0xf]
      %v6361 = vld [vmem:[%s5760 + $0x5c] sm:$0x1]
      %v6362 = vld [vmem:[%s5760 + $0x60] sm:$0xe]
      %v6363 = vld [vmem:[%s5760 + $0x64] sm:$0xf]
      %v6364 = vld [vmem:[%s5760 + $0x68] sm:$0x1]
      %v6365 = vld [vmem:[%s5760 + $0x6c] sm:$0xe]
      %v6366 = vld [vmem:[%s5760 + $0x70] sm:$0xf]
      %v6367 = vld [vmem:[%s5760 + $0x74] sm:$0x1]
      %v6368 = vld [vmem:[%s5760 + $0x78] sm:$0xe]
      %v6369 = vld [vmem:[%s5760 + $0x7c] sm:$0xf]
      %v6370 = vld [vmem:[%s5760 + $0x80] sm:$0x1]
      %v6371 = vld [vmem:[%s5760 + $0x84] sm:$0xe]
      %v6372 = vld [vmem:[%s5760 + $0x88] sm:$0xf]
      %v6373 = vld [vmem:[%s5760 + $0x8c] sm:$0x1]
      %v6374 = vld [vmem:[%s5760 + $0x90] sm:$0xe]
      %v6375 = vld [vmem:[%s5760 + $0x94] sm:$0xf]
      %v6376 = vld [vmem:[%s5760 + $0x98] sm:$0x1]
      %v6377 = vld [vmem:[%s5760 + $0x9c] sm:$0xe]
      %v6378 = vld [vmem:[%s5760 + $0xa0] sm:$0xf]
      %v6379 = vld [vmem:[%s5760 + $0xa4] sm:$0x1]
      %v6380 = vld [vmem:[%s5760 + $0xa8] sm:$0xe]
      %v6381 = vld [vmem:[%s5760 + $0xac] sm:$0xf]
      %v6382 = vld [vmem:[%s5760 + $0xb0] sm:$0x1]
      %v6383 = vld [vmem:[%s5760 + $0xb4] sm:$0xe]
      %v6384 = vld [vmem:[%s5760 + $0xb8] sm:$0xf]
      %v6385 = vld [vmem:[%s5760 + $0xbc] sm:$0x1]
      %v6434 = vunpack.c.l.b16 %v6338
      %v6435 = vunpack.c.l.b16 %v6339
      %v6436 = vunpack.c.l.b16 %v6340
      %v6437 = vunpack.c.l.b16 %v6341
      %v6438 = vunpack.c.l.b16 %v6342
      %v6439 = vunpack.c.l.b16 %v6343
      %v6440 = vunpack.c.l.b16 %v6344
      %v6441 = vunpack.c.l.b16 %v6345
      %v6442 = vunpack.c.l.b16 %v6346
      %v6443 = vunpack.c.l.b16 %v6347
      %v6444 = vunpack.c.l.b16 %v6348
      %v6445 = vunpack.c.l.b16 %v6349
      %v6446 = vunpack.c.l.b16 %v6350
      %v6447 = vunpack.c.l.b16 %v6351
      %v6448 = vunpack.c.l.b16 %v6352
      %v6449 = vunpack.c.l.b16 %v6353
      %v6450 = vunpack.c.l.b16 %v6354
      %v6451 = vunpack.c.l.b16 %v6355
      %v6452 = vunpack.c.l.b16 %v6356
      %v6453 = vunpack.c.l.b16 %v6357
      %v6454 = vunpack.c.l.b16 %v6358
      %v6455 = vunpack.c.l.b16 %v6359
      %v6456 = vunpack.c.l.b16 %v6360
      %v6457 = vunpack.c.l.b16 %v6361
      %v6458 = vunpack.c.l.b16 %v6362
      %v6459 = vunpack.c.l.b16 %v6363
      %v6460 = vunpack.c.l.b16 %v6364
      %v6461 = vunpack.c.l.b16 %v6365
      %v6462 = vunpack.c.l.b16 %v6366
      %v6463 = vunpack.c.l.b16 %v6367
      %v6464 = vunpack.c.l.b16 %v6368
      %v6465 = vunpack.c.l.b16 %v6369
      %v6466 = vunpack.c.l.b16 %v6370
      %v6467 = vunpack.c.l.b16 %v6371
      %v6468 = vunpack.c.l.b16 %v6372
      %v6469 = vunpack.c.l.b16 %v6373
      %v6470 = vunpack.c.l.b16 %v6374
      %v6471 = vunpack.c.l.b16 %v6375
      %v6472 = vunpack.c.l.b16 %v6376
      %v6473 = vunpack.c.l.b16 %v6377
      %v6474 = vunpack.c.l.b16 %v6378
      %v6475 = vunpack.c.l.b16 %v6379
      %v6476 = vunpack.c.l.b16 %v6380
      %v6477 = vunpack.c.l.b16 %v6381
      %v6478 = vunpack.c.l.b16 %v6382
      %v6479 = vunpack.c.l.b16 %v6383
      %v6480 = vunpack.c.l.b16 %v6384
      %v6481 = vunpack.c.l.b16 %v6385
      %v6482 = vpack.c.b16 %v6435, %v6434
      %v6483 = vpack.c.b16 %v6436, %v6436
      %v6484 = vpack.c.b16 %v6438, %v6437
      %v6485 = vpack.c.b16 %v6439, %v6439
      %v6486 = vpack.c.b16 %v6441, %v6440
      %v6487 = vpack.c.b16 %v6442, %v6442
      %v6488 = vpack.c.b16 %v6444, %v6443
      %v6489 = vpack.c.b16 %v6445, %v6445
      %v6490 = vpack.c.b16 %v6447, %v6446
      %v6491 = vpack.c.b16 %v6448, %v6448
      %v6492 = vpack.c.b16 %v6450, %v6449
      %v6493 = vpack.c.b16 %v6451, %v6451
      %v6494 = vpack.c.b16 %v6453, %v6452
      %v6495 = vpack.c.b16 %v6454, %v6454
      %v6496 = vpack.c.b16 %v6456, %v6455
      %v6497 = vpack.c.b16 %v6457, %v6457
      %v6498 = vpack.c.b16 %v6459, %v6458
      %v6499 = vpack.c.b16 %v6460, %v6460
      %v6500 = vpack.c.b16 %v6462, %v6461
      %v6501 = vpack.c.b16 %v6463, %v6463
      %v6502 = vpack.c.b16 %v6465, %v6464
      %v6503 = vpack.c.b16 %v6466, %v6466
      %v6504 = vpack.c.b16 %v6468, %v6467
      %v6505 = vpack.c.b16 %v6469, %v6469
      %v6506 = vpack.c.b16 %v6471, %v6470
      %v6507 = vpack.c.b16 %v6472, %v6472
      %v6508 = vpack.c.b16 %v6474, %v6473
      %v6509 = vpack.c.b16 %v6475, %v6475
      %v6510 = vpack.c.b16 %v6477, %v6476
      %v6511 = vpack.c.b16 %v6478, %v6478
      %v6512 = vpack.c.b16 %v6480, %v6479
      %v6513 = vpack.c.b16 %v6481, %v6481
      %v6514 = vrot.slane %v6482, 1
      %v6515 = vrot.slane %v6483, 1
      %v6516 = vsel %vm2049, %v6514, %v6515
      %v6517 = vrot.slane %v6484, 1
      %v6518 = vrot.slane %v6485, 1
      %v6519 = vsel %vm2049, %v6517, %v6518
      %v6520 = vrot.slane %v6486, 1
      %v6521 = vrot.slane %v6487, 1
      %v6522 = vsel %vm2049, %v6520, %v6521
      %v6523 = vrot.slane %v6488, 1
      %v6524 = vrot.slane %v6489, 1
      %v6525 = vsel %vm2049, %v6523, %v6524
      %v6526 = vrot.slane %v6490, 1
      %v6527 = vrot.slane %v6491, 1
      %v6528 = vsel %vm2049, %v6526, %v6527
      %v6529 = vrot.slane %v6492, 1
      %v6530 = vrot.slane %v6493, 1
      %v6531 = vsel %vm2049, %v6529, %v6530
      %v6532 = vrot.slane %v6494, 1
      %v6533 = vrot.slane %v6495, 1
      %v6534 = vsel %vm2049, %v6532, %v6533
      %v6535 = vrot.slane %v6496, 1
      %v6536 = vrot.slane %v6497, 1
      %v6537 = vsel %vm2049, %v6535, %v6536
      %v6538 = vrot.slane %v6498, 1
      %v6539 = vrot.slane %v6499, 1
      %v6540 = vsel %vm2049, %v6538, %v6539
      %v6541 = vrot.slane %v6500, 1
      %v6542 = vrot.slane %v6501, 1
      %v6543 = vsel %vm2049, %v6541, %v6542
      %v6544 = vrot.slane %v6502, 1
      %v6545 = vrot.slane %v6503, 1
      %v6546 = vsel %vm2049, %v6544, %v6545
      %v6547 = vrot.slane %v6504, 1
      %v6548 = vrot.slane %v6505, 1
      %v6549 = vsel %vm2049, %v6547, %v6548
      %v6550 = vrot.slane %v6506, 1
      %v6551 = vrot.slane %v6507, 1
      %v6552 = vsel %vm2049, %v6550, %v6551
      %v6553 = vrot.slane %v6508, 1
      %v6554 = vrot.slane %v6509, 1
      %v6555 = vsel %vm2049, %v6553, %v6554
      %v6556 = vrot.slane %v6510, 1
      %v6557 = vrot.slane %v6511, 1
      %v6558 = vsel %vm2049, %v6556, %v6557
      %v6559 = vrot.slane %v6512, 1
      %v6560 = vrot.slane %v6513, 1
      %v6561 = vsel %vm2049, %v6559, %v6560
      %6562 = vrot.lane.b32.xlu0 %v6516, 8
      %v6563 = vpop.permute.xlu0 %6562
      %6564 = vrot.lane.b32.xlu0 %v6519, 8
      %v6565 = vpop.permute.xlu0 %6564
      %6566 = vrot.lane.b32.xlu0 %v6522, 8
      %v6567 = vpop.permute.xlu0 %6566
      %6568 = vrot.lane.b32.xlu0 %v6525, 8
      %v6569 = vpop.permute.xlu0 %6568
      %6570 = vrot.lane.b32.xlu0 %v6528, 8
      %v6571 = vpop.permute.xlu0 %6570
      %6572 = vrot.lane.b32.xlu0 %v6531, 8
      %v6573 = vpop.permute.xlu0 %6572
      %6574 = vrot.lane.b32.xlu0 %v6534, 8
      %v6575 = vpop.permute.xlu0 %6574
      %6576 = vrot.lane.b32.xlu0 %v6537, 8
      %v6577 = vpop.permute.xlu0 %6576
      %6578 = vrot.lane.b32.xlu0 %v6540, 8
      %v6579 = vpop.permute.xlu0 %6578
      %6580 = vrot.lane.b32.xlu0 %v6543, 8
      %v6581 = vpop.permute.xlu0 %6580
      %6582 = vrot.lane.b32.xlu0 %v6546, 8
      %v6583 = vpop.permute.xlu0 %6582
      %6584 = vrot.lane.b32.xlu0 %v6549, 8
      %v6585 = vpop.permute.xlu0 %6584
      %6586 = vrot.lane.b32.xlu0 %v6552, 8
      %v6587 = vpop.permute.xlu0 %6586
      %6588 = vrot.lane.b32.xlu0 %v6555, 8
      %v6589 = vpop.permute.xlu0 %6588
      %6590 = vrot.lane.b32.xlu0 %v6558, 8
      %v6591 = vpop.permute.xlu0 %6590
      %6592 = vrot.lane.b32.xlu0 %v6561, 8
      %v6593 = vpop.permute.xlu0 %6592
      %6610 = vst.msk [vmem:[#allocation4 + $0x8] sm:$0xff] %vm1856, %v6563
      %6611 = vst.msk [vmem:[#allocation4 + $0x18] sm:$0xff] %vm1856, %v6565
      %6612 = vst.msk [vmem:[#allocation4 + $0x28] sm:$0xff] %vm1856, %v6567
      %6613 = vst.msk [vmem:[#allocation4 + $0x38] sm:$0xff] %vm1856, %v6569
      %6614 = vst.msk [vmem:[#allocation4 + $0x48] sm:$0xff] %vm1856, %v6571
      %6615 = vst.msk [vmem:[#allocation4 + $0x58] sm:$0xff] %vm1856, %v6573
      %6616 = vst.msk [vmem:[#allocation4 + $0x68] sm:$0xff] %vm1856, %v6575
      %6617 = vst.msk [vmem:[#allocation4 + $0x78] sm:$0xff] %vm1856, %v6577
      %6618 = vst.msk [vmem:[#allocation4 + $0x88] sm:$0xff] %vm1856, %v6579
      %6619 = vst.msk [vmem:[#allocation4 + $0x98] sm:$0xff] %vm1856, %v6581
      %6620 = vst.msk [vmem:[#allocation4 + $0xa8] sm:$0xff] %vm1856, %v6583
      %6621 = vst.msk [vmem:[#allocation4 + $0xb8] sm:$0xff] %vm1856, %v6585
      %6622 = vst.msk [vmem:[#allocation4 + $0xc8] sm:$0xff] %vm1856, %v6587
      %6623 = vst.msk [vmem:[#allocation4 + $0xd8] sm:$0xff] %vm1856, %v6589
      %6624 = vst.msk [vmem:[#allocation4 + $0xe8] sm:$0xff] %vm1856, %v6591
      %6625 = vst.msk [vmem:[#allocation4 + $0xf8] sm:$0xff] %vm1856, %v6593
      %v6626 = vld [vmem:[#allocation4] sm:$0xff]
      %v6627 = vld [vmem:[#allocation4 + $0x8] sm:$0xff]
      %v6628 = vld [vmem:[#allocation4 + $0x10] sm:$0xff]
      %v6629 = vld [vmem:[#allocation4 + $0x18] sm:$0xff]
      %v6630 = vld [vmem:[#allocation4 + $0x20] sm:$0xff]
      %v6631 = vld [vmem:[#allocation4 + $0x28] sm:$0xff]
      %v6632 = vld [vmem:[#allocation4 + $0x30] sm:$0xff]
      %v6633 = vld [vmem:[#allocation4 + $0x38] sm:$0xff]
      %v6634 = vld [vmem:[#allocation4 + $0x40] sm:$0xff]
      %v6635 = vld [vmem:[#allocation4 + $0x48] sm:$0xff]
      %v6636 = vld [vmem:[#allocation4 + $0x50] sm:$0xff]
      %v6637 = vld [vmem:[#allocation4 + $0x58] sm:$0xff]
      %v6638 = vld [vmem:[#allocation4 + $0x60] sm:$0xff]
      %v6639 = vld [vmem:[#allocation4 + $0x68] sm:$0xff]
      %v6640 = vld [vmem:[#allocation4 + $0x70] sm:$0xff]
      %v6641 = vld [vmem:[#allocation4 + $0x78] sm:$0xff]
      %v6642 = vld [vmem:[#allocation4 + $0x80] sm:$0xff]
      %v6643 = vld [vmem:[#allocation4 + $0x88] sm:$0xff]
      %v6644 = vld [vmem:[#allocation4 + $0x90] sm:$0xff]
      %v6645 = vld [vmem:[#allocation4 + $0x98] sm:$0xff]
      %v6646 = vld [vmem:[#allocation4 + $0xa0] sm:$0xff]
      %v6647 = vld [vmem:[#allocation4 + $0xa8] sm:$0xff]
      %v6648 = vld [vmem:[#allocation4 + $0xb0] sm:$0xff]
      %v6649 = vld [vmem:[#allocation4 + $0xb8] sm:$0xff]
      %v6650 = vld [vmem:[#allocation4 + $0xc0] sm:$0xff]
      %v6651 = vld [vmem:[#allocation4 + $0xc8] sm:$0xff]
      %v6652 = vld [vmem:[#allocation4 + $0xd0] sm:$0xff]
      %v6653 = vld [vmem:[#allocation4 + $0xd8] sm:$0xff]
      %v6654 = vld [vmem:[#allocation4 + $0xe0] sm:$0xff]
      %v6655 = vld [vmem:[#allocation4 + $0xe8] sm:$0xff]
      %v6656 = vld [vmem:[#allocation4 + $0xf0] sm:$0xff]
      %v6657 = vld [vmem:[#allocation4 + $0xf8] sm:$0xff]
      %v6658 = vld [vmem:[%s2] sm:$0xf]
      %v6659 = vld [vmem:[%s2 + $0x4] sm:$0xf]
      %v6660 = vld [vmem:[%s2 + $0x8] sm:$0xf]
      %v6661 = vld [vmem:[%s2 + $0xc] sm:$0xf]
      %v6662 = vld [vmem:[%s2 + $0x10] sm:$0xf]
      %v6663 = vld [vmem:[%s2 + $0x14] sm:$0xf]
      %v6664 = vld [vmem:[%s2 + $0x18] sm:$0xf]
      %v6665 = vld [vmem:[%s2 + $0x1c] sm:$0xf]
      %v6666 = vld [vmem:[%s2 + $0x20] sm:$0xf]
      %v6667 = vld [vmem:[%s2 + $0x24] sm:$0xf]
      %v6668 = vld [vmem:[%s2 + $0x28] sm:$0xf]
      %v6669 = vld [vmem:[%s2 + $0x2c] sm:$0xf]
      %v6670 = vld [vmem:[%s2 + $0x30] sm:$0xf]
      %v6671 = vld [vmem:[%s2 + $0x34] sm:$0xf]
      %v6672 = vld [vmem:[%s2 + $0x38] sm:$0xf]
      %v6673 = vld [vmem:[%s2 + $0x3c] sm:$0xf]
      %v6674 = vld [vmem:[%s2 + $0x40] sm:$0xf]
      %v6675 = vld [vmem:[%s2 + $0x44] sm:$0xf]
      %v6694 = vunpack.c.l.b16 %v6658
      %v6695 = vunpack.c.l.b16 %v6659
      %v6696 = vunpack.c.l.b16 %v6660
      %v6697 = vunpack.c.l.b16 %v6661
      %v6698 = vunpack.c.l.b16 %v6662
      %v6699 = vunpack.c.l.b16 %v6663
      %v6700 = vunpack.c.l.b16 %v6664
      %v6701 = vunpack.c.l.b16 %v6665
      %v6702 = vunpack.c.l.b16 %v6666
      %v6703 = vunpack.c.l.b16 %v6667
      %v6704 = vunpack.c.l.b16 %v6668
      %v6705 = vunpack.c.l.b16 %v6669
      %v6706 = vunpack.c.l.b16 %v6670
      %v6707 = vunpack.c.l.b16 %v6671
      %v6708 = vunpack.c.l.b16 %v6672
      %v6709 = vunpack.c.l.b16 %v6673
      %v6710 = vunpack.c.l.b16 %v6674
      %v6711 = vunpack.c.l.b16 %v6675
      %v6712 = vpack.c.b16 %v6695, %v6694
      %v6713 = vpack.c.b16 %v6697, %v6696
      %v6714 = vpack.c.b16 %v6699, %v6698
      %v6715 = vpack.c.b16 %v6701, %v6700
      %v6716 = vpack.c.b16 %v6703, %v6702
      %v6717 = vpack.c.b16 %v6705, %v6704
      %v6718 = vpack.c.b16 %v6707, %v6706
      %v6719 = vpack.c.b16 %v6709, %v6708
      %v6720 = vpack.c.b16 %v6711, %v6710
      %vm6730 = vcmask 130048
      %v6732 = vsel %vm6730, %v6627, 0
      %v6735 = vsel %vm6730, %v6629, 0
      %v6738 = vsel %vm6730, %v6631, 0
      %v6741 = vsel %vm6730, %v6633, 0
      %v6744 = vsel %vm6730, %v6635, 0
      %v6747 = vsel %vm6730, %v6637, 0
      %v6750 = vsel %vm6730, %v6639, 0
      %v6753 = vsel %vm6730, %v6641, 0
      %v6756 = vsel %vm6730, %v6643, 0
      %v6759 = vsel %vm6730, %v6645, 0
      %v6762 = vsel %vm6730, %v6647, 0
      %v6765 = vsel %vm6730, %v6649, 0
      %v6768 = vsel %vm6730, %v6651, 0
      %v6771 = vsel %vm6730, %v6653, 0
      %v6774 = vsel %vm6730, %v6655, 0
      %v6777 = vsel %vm6730, %v6657, 0
      %6779 = vmatprep.subr.bf16.mxu0 0
      %6780 = vmatpush1.bf16.msra.mxu0 %v6712
      %6781 = vmatprep.subr.bf16.mxu0 0
      %6782 = vmatpush1.bf16.msra.mxu0 %v6713
      %6783 = vmatprep.subr.bf16.mxu0 0
      %6784 = vmatpush1.bf16.msra.mxu0 %v6714
      %6785 = vmatprep.subr.bf16.mxu0 0
      %6786 = vmatpush1.bf16.msra.mxu0 %v6715
      %6787 = vmatprep.subr.bf16.mxu0 0
      %6788 = vmatpush1.bf16.msra.mxu0 %v6716
      %6789 = vmatprep.subr.bf16.mxu0 0
      %6790 = vmatpush1.bf16.msra.mxu0 %v6717
      %6791 = vmatprep.subr.bf16.mxu0 0
      %6792 = vmatpush1.bf16.msra.mxu0 %v6718
      %6793 = vmatprep.subr.bf16.mxu0 0
      %6794 = vmatpush1.bf16.msra.mxu0 %v6719
      %6795 = vmatprep.subr.bf16.mxu0 0
      %6796 = vmatpush1.bf16.msra.mxu0 %v6720
      %6797 = vmatprep.subr.bf16.mxu0 0
      %6798 = vmatpush1.bf16.msra.mxu0 0
      %6799 = vmatprep.subr.bf16.mxu0 0
      %6800 = vmatpush1.bf16.msra.mxu0 0
      %6801 = vmatprep.subr.bf16.mxu0 0
      %6802 = vmatpush1.bf16.msra.mxu0 0
      %6803 = vmatprep.subr.bf16.mxu0 0
      %6804 = vmatpush1.bf16.msra.mxu0 0
      %6805 = vmatprep.subr.bf16.mxu0 0
      %6806 = vmatpush1.bf16.msra.mxu0 0
      %6807 = vmatprep.subr.bf16.mxu0 0
      %6808 = vmatpush1.bf16.msra.mxu0 0
      %6809 = vmatprep.subr.bf16.mxu0 0
      %6810 = vmatpush1.bf16.msra.mxu0 0
      %6811 = vmatprep.mubr.bf16.mxu0 %v6732
      %6812 = vmatmul.mubr.bf16.gmra.mrb[0].mxu0 %v6626
      %v6813 = vpop.f32.mrb[0].mxu0
      %v6814 = vadd.f32 0.0, %v6813
      %v6815 = vpop.f32.mrb[0].mxu0
      %v6816 = vpop.f32.mrb[0].mxu0
      %v6817 = vadd.f32 0.0, %v6816
      %v6818 = vpop.f32.mrb[0].mxu0
      %6819 = vmatprep.mubr.bf16.mxu0 %v6735
      %6820 = vmatmul.mubr.bf16.gmra.mrb[0].mxu0 %v6628
      %v6821 = vpop.f32.mrb[0].mxu0
      %v6822 = vadd.f32 0.0, %v6821
      %v6823 = vpop.f32.mrb[0].mxu0
      %v6824 = vpop.f32.mrb[0].mxu0
      %v6825 = vadd.f32 0.0, %v6824
      %v6826 = vpop.f32.mrb[0].mxu0
      %6827 = vmatprep.mubr.bf16.mxu0 %v6738
      %6828 = vmatmul.mubr.bf16.gmra.mrb[0].mxu0 %v6630
      %v6829 = vpop.f32.mrb[0].mxu0
      %v6830 = vadd.f32 0.0, %v6829
      %v6831 = vpop.f32.mrb[0].mxu0
      %v6832 = vpop.f32.mrb[0].mxu0
      %v6833 = vadd.f32 0.0, %v6832
      %v6834 = vpop.f32.mrb[0].mxu0
      %6835 = vmatprep.mubr.bf16.mxu0 %v6741
      %6836 = vmatmul.mubr.bf16.gmra.mrb[0].mxu0 %v6632
      %v6837 = vpop.f32.mrb[0].mxu0
      %v6838 = vadd.f32 0.0, %v6837
      %v6839 = vpop.f32.mrb[0].mxu0
      %v6840 = vpop.f32.mrb[0].mxu0
      %v6841 = vadd.f32 0.0, %v6840
      %v6842 = vpop.f32.mrb[0].mxu0
      %6843 = vmatprep.mubr.bf16.mxu0 %v6744
      %6844 = vmatmul.mubr.bf16.gmra.mrb[0].mxu0 %v6634
      %v6845 = vpop.f32.mrb[0].mxu0
      %v6846 = vadd.f32 0.0, %v6845
      %v6847 = vpop.f32.mrb[0].mxu0
      %v6848 = vpop.f32.mrb[0].mxu0
      %v6849 = vadd.f32 0.0, %v6848
      %v6850 = vpop.f32.mrb[0].mxu0
      %6851 = vmatprep.mubr.bf16.mxu0 %v6747
      %6852 = vmatmul.mubr.bf16.gmra.mrb[0].mxu0 %v6636
      %v6853 = vpop.f32.mrb[0].mxu0
      %v6854 = vadd.f32 0.0, %v6853
      %v6855 = vpop.f32.mrb[0].mxu0
      %v6856 = vpop.f32.mrb[0].mxu0
      %v6857 = vadd.f32 0.0, %v6856
      %v6858 = vpop.f32.mrb[0].mxu0
      %6859 = vmatprep.mubr.bf16.mxu0 %v6750
      %6860 = vmatmul.mubr.bf16.gmra.mrb[0].mxu0 %v6638
      %v6861 = vpop.f32.mrb[0].mxu0
      %v6862 = vadd.f32 0.0, %v6861
      %v6863 = vpop.f32.mrb[0].mxu0
      %v6864 = vpop.f32.mrb[0].mxu0
      %v6865 = vadd.f32 0.0, %v6864
      %v6866 = vpop.f32.mrb[0].mxu0
      %6867 = vmatprep.mubr.bf16.mxu0 %v6753
      %6868 = vmatmul.mubr.bf16.gmra.mrb[0].mxu0 %v6640
      %v6869 = vpop.f32.mrb[0].mxu0
      %v6870 = vadd.f32 0.0, %v6869
      %v6871 = vpop.f32.mrb[0].mxu0
      %v6872 = vpop.f32.mrb[0].mxu0
      %v6873 = vadd.f32 0.0, %v6872
      %v6874 = vpop.f32.mrb[0].mxu0
      %6875 = vmatprep.mubr.bf16.mxu0 %v6756
      %6876 = vmatmul.mubr.bf16.gmra.mrb[0].mxu0 %v6642
      %v6877 = vpop.f32.mrb[0].mxu0
      %v6878 = vadd.f32 0.0, %v6877
      %v6879 = vpop.f32.mrb[0].mxu0
      %v6880 = vpop.f32.mrb[0].mxu0
      %v6881 = vadd.f32 0.0, %v6880
      %v6882 = vpop.f32.mrb[0].mxu0
      %6883 = vmatprep.mubr.bf16.mxu0 %v6759
      %6884 = vmatmul.mubr.bf16.gmra.mrb[0].mxu0 %v6644
      %v6885 = vpop.f32.mrb[0].mxu0
      %v6886 = vadd.f32 0.0, %v6885
      %v6887 = vpop.f32.mrb[0].mxu0
      %v6888 = vpop.f32.mrb[0].mxu0
      %v6889 = vadd.f32 0.0, %v6888
      %v6890 = vpop.f32.mrb[0].mxu0
      %6891 = vmatprep.mubr.bf16.mxu0 %v6762
      %6892 = vmatmul.mubr.bf16.gmra.mrb[0].mxu0 %v6646
      %v6893 = vpop.f32.mrb[0].mxu0
      %v6894 = vadd.f32 0.0, %v6893
      %v6895 = vpop.f32.mrb[0].mxu0
      %v6896 = vpop.f32.mrb[0].mxu0
      %v6897 = vadd.f32 0.0, %v6896
      %v6898 = vpop.f32.mrb[0].mxu0
      %6899 = vmatprep.mubr.bf16.mxu0 %v6765
      %6900 = vmatmul.mubr.bf16.gmra.mrb[0].mxu0 %v6648
      %v6901 = vpop.f32.mrb[0].mxu0
      %v6902 = vadd.f32 0.0, %v6901
      %v6903 = vpop.f32.mrb[0].mxu0
      %v6904 = vpop.f32.mrb[0].mxu0
      %v6905 = vadd.f32 0.0, %v6904
      %v6906 = vpop.f32.mrb[0].mxu0
      %6907 = vmatprep.mubr.bf16.mxu0 %v6768
      %6908 = vmatmul.mubr.bf16.gmra.mrb[0].mxu0 %v6650
      %v6909 = vpop.f32.mrb[0].mxu0
      %v6910 = vadd.f32 0.0, %v6909
      %v6911 = vpop.f32.mrb[0].mxu0
      %v6912 = vpop.f32.mrb[0].mxu0
      %v6913 = vadd.f32 0.0, %v6912
      %v6914 = vpop.f32.mrb[0].mxu0
      %6915 = vmatprep.mubr.bf16.mxu0 %v6771
      %6916 = vmatmul.mubr.bf16.gmra.mrb[0].mxu0 %v6652
      %v6917 = vpop.f32.mrb[0].mxu0
      %v6918 = vadd.f32 0.0, %v6917
      %v6919 = vpop.f32.mrb[0].mxu0
      %v6920 = vpop.f32.mrb[0].mxu0
      %v6921 = vadd.f32 0.0, %v6920
      %v6922 = vpop.f32.mrb[0].mxu0
      %6923 = vmatprep.mubr.bf16.mxu0 %v6774
      %6924 = vmatmul.mubr.bf16.gmra.mrb[0].mxu0 %v6654
      %v6925 = vpop.f32.mrb[0].mxu0
      %v6926 = vadd.f32 0.0, %v6925
      %v6927 = vpop.f32.mrb[0].mxu0
      %v6928 = vpop.f32.mrb[0].mxu0
      %v6929 = vadd.f32 0.0, %v6928
      %v6930 = vpop.f32.mrb[0].mxu0
      %6931 = vmatprep.mubr.bf16.mxu0 %v6777
      %6932 = vmatmul.mubr.bf16.gmra.mrb[0].mxu0 %v6656
      %v6933 = vpop.f32.mrb[0].mxu0
      %v6934 = vadd.f32 0.0, %v6933
      %v6935 = vpop.f32.mrb[0].mxu0
      %v6936 = vpop.f32.mrb[0].mxu0
      %v6937 = vadd.f32 0.0, %v6936
      %v6938 = vpop.f32.mrb[0].mxu0
      %6939 = vdwg.mxu0
      %v6940 = vld [vmem:[%s3] sm:$0x1]
      %v6942 = vlaneseq
      %v6943 = vshrl.u32 %v6942, 7
      %v6944 = vsub.s32 0, %v6943
      %v6945 = vrot.slane %v6940, %v6944
      %v6947 = vmul.f32 %v6814, %v6945
      %v6948 = vmul.f32 %v6817, %v6945
      %v6949 = vmul.f32 %v6822, %v6945
      %v6950 = vmul.f32 %v6825, %v6945
      %v6951 = vmul.f32 %v6830, %v6945
      %v6952 = vmul.f32 %v6833, %v6945
      %v6953 = vmul.f32 %v6838, %v6945
      %v6954 = vmul.f32 %v6841, %v6945
      %v6955 = vmul.f32 %v6846, %v6945
      %v6956 = vmul.f32 %v6849, %v6945
      %v6957 = vmul.f32 %v6854, %v6945
      %v6958 = vmul.f32 %v6857, %v6945
      %v6959 = vmul.f32 %v6862, %v6945
      %v6960 = vmul.f32 %v6865, %v6945
      %v6961 = vmul.f32 %v6870, %v6945
      %v6962 = vmul.f32 %v6873, %v6945
      %v6963 = vmul.f32 %v6878, %v6945
      %v6964 = vmul.f32 %v6881, %v6945
      %v6965 = vmul.f32 %v6886, %v6945
      %v6966 = vmul.f32 %v6889, %v6945
      %v6967 = vmul.f32 %v6894, %v6945
      %v6968 = vmul.f32 %v6897, %v6945
      %v6969 = vmul.f32 %v6902, %v6945
      %v6970 = vmul.f32 %v6905, %v6945
      %v6971 = vmul.f32 %v6910, %v6945
      %v6972 = vmul.f32 %v6913, %v6945
      %v6973 = vmul.f32 %v6918, %v6945
      %v6974 = vmul.f32 %v6921, %v6945
      %v6975 = vmul.f32 %v6926, %v6945
      %v6976 = vmul.f32 %v6929, %v6945
      %v6977 = vmul.f32 %v6934, %v6945
      %v6978 = vmul.f32 %v6937, %v6945
      %v6979 = vld [vmem:[%s4] sm:$0x1]
      %v6981 = vlaneseq
      %v6982 = vshrl.u32 %v6981, 7
      %v6983 = vsub.s32 0, %v6982
      %v6984 = vrot.slane %v6979, %v6983
      %v6986 = vadd.f32 %v6947, %v6984
      %v6987 = vadd.f32 %v6948, %v6984
      %v6988 = vadd.f32 %v6949, %v6984
      %v6989 = vadd.f32 %v6950, %v6984
      %v6990 = vadd.f32 %v6951, %v6984
      %v6991 = vadd.f32 %v6952, %v6984
      %v6992 = vadd.f32 %v6953, %v6984
      %v6993 = vadd.f32 %v6954, %v6984
      %v6994 = vadd.f32 %v6955, %v6984
      %v6995 = vadd.f32 %v6956, %v6984
      %v6996 = vadd.f32 %v6957, %v6984
      %v6997 = vadd.f32 %v6958, %v6984
      %v6998 = vadd.f32 %v6959, %v6984
      %v6999 = vadd.f32 %v6960, %v6984
      %v7000 = vadd.f32 %v6961, %v6984
      %v7001 = vadd.f32 %v6962, %v6984
      %v7002 = vadd.f32 %v6963, %v6984
      %v7003 = vadd.f32 %v6964, %v6984
      %v7004 = vadd.f32 %v6965, %v6984
      %v7005 = vadd.f32 %v6966, %v6984
      %v7006 = vadd.f32 %v6967, %v6984
      %v7007 = vadd.f32 %v6968, %v6984
      %v7008 = vadd.f32 %v6969, %v6984
      %v7009 = vadd.f32 %v6970, %v6984
      %v7010 = vadd.f32 %v6971, %v6984
      %v7011 = vadd.f32 %v6972, %v6984
      %v7012 = vadd.f32 %v6973, %v6984
      %v7013 = vadd.f32 %v6974, %v6984
      %v7014 = vadd.f32 %v6975, %v6984
      %v7015 = vadd.f32 %v6976, %v6984
      %v7016 = vadd.f32 %v6977, %v6984
      %v7017 = vadd.f32 %v6978, %v6984
      %v7018 = vmax.f32 %v6986, 0.0
      %v7019 = vmax.f32 %v6987, 0.0
      %v7020 = vmax.f32 %v6988, 0.0
      %v7021 = vmax.f32 %v6989, 0.0
      %v7022 = vmax.f32 %v6990, 0.0
      %v7023 = vmax.f32 %v6991, 0.0
      %v7024 = vmax.f32 %v6992, 0.0
      %v7025 = vmax.f32 %v6993, 0.0
      %v7026 = vmax.f32 %v6994, 0.0
      %v7027 = vmax.f32 %v6995, 0.0
      %v7028 = vmax.f32 %v6996, 0.0
      %v7029 = vmax.f32 %v6997, 0.0
      %v7030 = vmax.f32 %v6998, 0.0
      %v7031 = vmax.f32 %v6999, 0.0
      %v7032 = vmax.f32 %v7000, 0.0
      %v7033 = vmax.f32 %v7001, 0.0
      %v7034 = vmax.f32 %v7002, 0.0
      %v7035 = vmax.f32 %v7003, 0.0
      %v7036 = vmax.f32 %v7004, 0.0
      %v7037 = vmax.f32 %v7005, 0.0
      %v7038 = vmax.f32 %v7006, 0.0
      %v7039 = vmax.f32 %v7007, 0.0
      %v7040 = vmax.f32 %v7008, 0.0
      %v7041 = vmax.f32 %v7009, 0.0
      %v7042 = vmax.f32 %v7010, 0.0
      %v7043 = vmax.f32 %v7011, 0.0
      %v7044 = vmax.f32 %v7012, 0.0
      %v7045 = vmax.f32 %v7013, 0.0
      %v7046 = vmax.f32 %v7014, 0.0
      %v7047 = vmax.f32 %v7015, 0.0
      %v7048 = vmax.f32 %v7016, 0.0
      %v7049 = vmax.f32 %v7017, 0.0
      %vm7050 = vcmask 261120
      %7051 = vst.msk [vmem:[%s244] sm:$0xff] %vm7050, %v7018
      %7052 = vst.msk [vmem:[%s244 + $0x8] sm:$0xff] %vm7050, %v7019
      %7053 = vst.msk [vmem:[%s244 + $0x10] sm:$0xff] %vm7050, %v7020
      %7054 = vst.msk [vmem:[%s244 + $0x18] sm:$0xff] %vm7050, %v7021
      %7055 = vst.msk [vmem:[%s244 + $0x20] sm:$0xff] %vm7050, %v7022
      %7056 = vst.msk [vmem:[%s244 + $0x28] sm:$0xff] %vm7050, %v7023
      %7057 = vst.msk [vmem:[%s244 + $0x30] sm:$0xff] %vm7050, %v7024
      %7058 = vst.msk [vmem:[%s244 + $0x38] sm:$0xff] %vm7050, %v7025
      %7059 = vst.msk [vmem:[%s244 + $0x40] sm:$0xff] %vm7050, %v7026
      %7060 = vst.msk [vmem:[%s244 + $0x48] sm:$0xff] %vm7050, %v7027
      %7061 = vst.msk [vmem:[%s244 + $0x50] sm:$0xff] %vm7050, %v7028
      %7062 = vst.msk [vmem:[%s244 + $0x58] sm:$0xff] %vm7050, %v7029
      %7063 = vst.msk [vmem:[%s244 + $0x60] sm:$0xff] %vm7050, %v7030
      %7064 = vst.msk [vmem:[%s244 + $0x68] sm:$0xff] %vm7050, %v7031
      %7065 = vst.msk [vmem:[%s244 + $0x70] sm:$0xff] %vm7050, %v7032
      %7066 = vst.msk [vmem:[%s244 + $0x78] sm:$0xff] %vm7050, %v7033
      %7067 = vst.msk [vmem:[%s244 + $0x80] sm:$0xff] %vm7050, %v7034
      %7068 = vst.msk [vmem:[%s244 + $0x88] sm:$0xff] %vm7050, %v7035
      %7069 = vst.msk [vmem:[%s244 + $0x90] sm:$0xff] %vm7050, %v7036
      %7070 = vst.msk [vmem:[%s244 + $0x98] sm:$0xff] %vm7050, %v7037
      %7071 = vst.msk [vmem:[%s244 + $0xa0] sm:$0xff] %vm7050, %v7038
      %7072 = vst.msk [vmem:[%s244 + $0xa8] sm:$0xff] %vm7050, %v7039
      %7073 = vst.msk [vmem:[%s244 + $0xb0] sm:$0xff] %vm7050, %v7040
      %7074 = vst.msk [vmem:[%s244 + $0xb8] sm:$0xff] %vm7050, %v7041
      %7075 = vst.msk [vmem:[%s244 + $0xc0] sm:$0xff] %vm7050, %v7042
      %7076 = vst.msk [vmem:[%s244 + $0xc8] sm:$0xff] %vm7050, %v7043
      %7077 = vst.msk [vmem:[%s244 + $0xd0] sm:$0xff] %vm7050, %v7044
      %7078 = vst.msk [vmem:[%s244 + $0xd8] sm:$0xff] %vm7050, %v7045
      %7079 = vst.msk [vmem:[%s244 + $0xe0] sm:$0xff] %vm7050, %v7046
      %7080 = vst.msk [vmem:[%s244 + $0xe8] sm:$0xff] %vm7050, %v7047
      %7081 = vst.msk [vmem:[%s244 + $0xf0] sm:$0xff] %vm7050, %v7048
      %7082 = vst.msk [vmem:[%s244 + $0xf8] sm:$0xff] %vm7050, %v7049
      %p7083 = scmp.lt.s32.totalorder %s16, 1
      %s7084 = scalar_select %p7083, %s16, 1
      %s7085 = smul.addr %s7084, 32
      %s7086 = smul.addr %s7085, 8
      %s7087 = scalar_lea.vmem %s5, %s7086
      // Predicated region
      $region41: #{rir_unit_pallas.1} parent=39 // pred_check
        %p7088 = pneg %p149
      $region42: #{rir_unit_pallas.1} parent=39 // pred_check_branch
        %7090 = sbr.rel (%p7088) target = $region44
      $region43: #{rir_unit_pallas.1} parent=39 // pred_region
        _
      $region44: #{rir_unit_pallas.1} parent=39 // pred_fallthru
        _
    $region40: #{rir_unit_pallas.1} parent=5 // pred_fallthru
      _
    %p7091 = scmp.le.s32.totalorder 2, %s11
    // Predicated region
    $region45: #{rir_unit_pallas.1} parent=5 // pred_check
      %p7092 = pneg %p7091
    $region46: #{rir_unit_pallas.1} parent=5 // pred_check_branch
      %7094 = sbr.rel (%p7092) target = $region48
    $region47: #{rir_unit_pallas.1} parent=5 // pred_region
      %s7095 = ssub.s32 %s11, 2
      // Predicated region
      $region49: #{rir_unit_pallas.1} parent=47 // pred_check
        %p7096 = pneg %p155
      $region50: #{rir_unit_pallas.1} parent=47 // pred_check_branch
        %7098 = sbr.rel (%p7096) target = $region52
      $region51: #{rir_unit_pallas.1} parent=47 // pred_region
        %p7099 = scmp.lt.s32.totalorder %s17, 1
        %s7100 = scalar_select %p7099, %s17, 1
        %s7101 = smul.addr %s7100, 32
        %s7102 = smul.addr %s7101, 8
        %s7103 = scalar_lea.vmem %s5, %s7102
      $region52: #{rir_unit_pallas.1} parent=47 // pred_fallthru
        _
    $region48: #{rir_unit_pallas.1} parent=5 // pred_fallthru
      _
  $region6: #{rir_unit_pallas.1} parent=0 // loop_footer
    %s15 = sadd.s32 1, %s11
  $region7: #{rir_unit_pallas.1} parent=0 // loop_footer_branch
    %10 = sbr.rel target = $region3
  $region8: #{rir_unit_pallas.1} parent=0 // loop_exit
    _

</llo_original>
